<compile_context>
chip_gen: v7x
topology: tpu7x:2x2x1
jax: 0.10.0
libtpu: 0.0.40
codegen_flags: <defaults>
</compile_context>

<pallas_src>
import jax
import jax.numpy as jnp
from jax.experimental import pallas as pl
from jax.experimental.pallas import tpu as pltpu

NUM_CLASSES = 2
ALPHA = 0.25
GAMMA = 2          # integer -> exact square, matches torch .pow(2)
SMOOTHING = 0.06


def focal_loss_with_label_smoothing(logits, target, *,
                                    block_rows=8, block_lanes=4096, n_split=2):
    """logits: [N, 2] float, target: [N] int class indices. Returns scalar f32."""
    n, c = logits.shape
    assert c == NUM_CLASSES

    block_elems = block_rows * block_lanes
    blocks_per_split = max(1, pl.cdiv(n, block_elems * n_split))
    total_elems = n_split * blocks_per_split * block_elems
    pad = total_elems - n
    total_rows = n_split * blocks_per_split * block_rows

    # Lane-dense layout: split class columns, pad the tail, reshape to 2-D
    # slabs whose last dim is a large multiple of 128 lanes.  (The column
    # split / small pad are the only wrapper passes; casts happen in-kernel.)
    # TODO(synk): for bf16 inputs the column split still costs one HBM pass.
    x0 = jnp.pad(logits[:, 0], ((0, pad),)).reshape(total_rows, block_lanes)
    x1 = jnp.pad(logits[:, 1], ((0, pad),)).reshape(total_rows, block_lanes)
    tg = jnp.pad(target.astype(jnp.int32), ((0, pad),)).reshape(total_rows,
                                                                block_lanes)

    def kernel(x0_ref, x1_ref, tgt_ref, out_ref, acc_ref):
        s = pl.program_id(0)       # parallel split (megacore) index
        g = pl.program_id(1)       # reduction-block index within the split

        @pl.when(g == 0)
        def _():
            acc_ref[...] = jnp.zeros_like(acc_ref)

        xc0 = x0_ref[...].astype(jnp.float32)
        xc1 = x1_ref[...].astype(jnp.float32)
        tgt = tgt_ref[...]

        # one-hot + label smoothing (C = 2): label_c = (1-s)*[tgt==c] + s/2
        t1 = (tgt == 1).astype(jnp.float32)
        lab1 = (1.0 - SMOOTHING) * t1 + 0.5 * SMOOTHING
        lab0 = (1.0 - SMOOTHING) * (1.0 - t1) + 0.5 * SMOOTHING

        # 2-class softmax == sigmoid of the logit difference (one exp + divide;
        # identical to the max-subtracted softmax, so no overflow possible).
        d = xc1 - xc0
        em = jnp.exp(-jnp.abs(d))                # in (0, 1]
        inv = 1.0 / (1.0 + em)
        p_hi = inv                               # prob of the larger-logit class
        p_lo = em * inv
        pos = d >= 0.0
        p1 = jnp.where(pos, p_hi, p_lo)
        p0 = jnp.where(pos, p_lo, p_hi)

        # focal modulation: -(label - prob)^2  (gamma=2 -> single VPU multiply)
        d0 = lab0 - p0
        d1 = lab1 - p1
        coeff0 = -(d0 * d0)
        coeff1 = -(d1 * d1)

        # stable log(sigmoid(x)) / log(1 - sigmoid(x)) with a shared softplus
        # term: log(sig(x)) = min(x,0) - log1p(exp(-|x|)),
        #       log(1-sig(x)) = min(-x,0) - log1p(exp(-|x|)).
        # Branch-equivalent to PyTorch's F.softplus(threshold=50) formulation.
        def log_sig_pair(x):
            sp = jnp.log1p(jnp.exp(-jnp.abs(x)))
            return jnp.minimum(x, 0.0) - sp, jnp.minimum(-x, 0.0) - sp

        logp0, log1mp0 = log_sig_pair(xc0)
        logp1, log1mp1 = log_sig_pair(xc1)

        loss0 = (lab0 * ALPHA * logp0
                 + (1.0 - lab0) * (1.0 - ALPHA) * log1mp0) * coeff0
        loss1 = (lab1 * ALPHA * logp1
                 + (1.0 - lab1) * (1.0 - ALPHA) * log1mp1) * coeff1
        loss = loss0 + loss1                     # (block_rows, block_lanes)

        # Ragged tail: only blocks overlapping the padded region pay for a mask.
        blk_start = (s * blocks_per_split + g) * block_elems
        full_block = blk_start + block_elems <= n

        @pl.when(full_block)
        def _():
            acc_ref[...] += loss

        @pl.when(jnp.logical_not(full_block))
        def _():
            row = jax.lax.broadcasted_iota(jnp.int32,
                                           (block_rows, block_lanes), 0)
            col = jax.lax.broadcasted_iota(jnp.int32,
                                           (block_rows, block_lanes), 1)
            idx = blk_start + row * block_lanes + col
            acc_ref[...] += jnp.where(idx < n, loss, 0.0)

        @pl.when(g == blocks_per_split - 1)
        def _():
            out_ref[...] = acc_ref[...]

    blk = (block_rows, block_lanes)
    partials = pl.pallas_call(
        kernel,
        out_shape=jax.ShapeDtypeStruct((n_split * block_rows, block_lanes),
                                       jnp.float32),
        grid_spec=pltpu.PrefetchScalarGridSpec(
            num_scalar_prefetch=0,
            grid=(n_split, blocks_per_split),
            in_specs=[
                pl.BlockSpec(blk, lambda s, g: (s * blocks_per_split + g, 0)),
                pl.BlockSpec(blk, lambda s, g: (s * blocks_per_split + g, 0)),
                pl.BlockSpec(blk, lambda s, g: (s * blocks_per_split + g, 0)),
            ],
            out_specs=pl.BlockSpec(blk, lambda s, g: (s, 0)),
            scratch_shapes=[pltpu.VMEM(blk, jnp.float32)],
        ),
        compiler_params=pltpu.CompilerParams(
            dimension_semantics=("parallel", "arbitrary")),
    )(x0, x1, tg)

    # reduction='mean' over all N * C elements (tiny cross-block reduce in XLA)
    return jnp.sum(partials) / (n * float(NUM_CLASSES))


def _reference(logits, target):
    """Pure-JAX reference mirroring the PyTorch forward."""
    logits = logits.astype(jnp.float32)
    onehot = jax.nn.one_hot(target.astype(jnp.int32), NUM_CLASSES,
                            dtype=jnp.float32)
    label = (1.0 - SMOOTHING) * onehot + SMOOTHING / 2.0
    probs = jax.nn.softmax(logits, axis=1)
    coeff = -(jnp.abs(label - probs) ** GAMMA)
    x = logits
    sp_m1 = jnp.where(-x > 50.0, x, -jnp.log1p(jnp.exp(jnp.minimum(-x, 50.0))))
    sp_p1 = jnp.where(x > 50.0, x, jnp.log1p(jnp.exp(jnp.minimum(x, 50.0))))
    log_probs = jnp.where(x >= 0.0, sp_m1, x - sp_p1)
    log_1_probs = jnp.where(x >= 0.0, -x + sp_m1, -sp_p1)
    loss = label * ALPHA * log_probs + (1.0 - label) * (1.0 - ALPHA) * log_1_probs
    loss = loss * coeff
    return jnp.mean(loss)


if __name__ == "__main__":
    key = jax.random.PRNGKey(0)
    k1, k2 = jax.random.split(key)
    N = 200
    logits = jax.random.normal(k1, (N, NUM_CLASSES), dtype=jnp.float32)
    target = jax.random.randint(k2, (N,), 0, NUM_CLASSES, dtype=jnp.int32)

    out = focal_loss_with_label_smoothing(logits, target)
    out = jax.block_until_ready(out)

    ref = _reference(logits, target)
    assert jnp.allclose(out, ref, rtol=1e-5, atol=1e-6), (out, ref)
    print("KERNEL_OK")
</pallas_src>

<mosaic_0001>
module attributes {stable_mosaic.version = 11 : i64} {
  func.func @kernel(%arg0: i32, %arg1: i32, %arg2: memref<8x4096xf32, #tpu.memory_space<vmem>>, %arg3: memref<8x4096xf32, #tpu.memory_space<vmem>>, %arg4: memref<8x4096xi32, #tpu.memory_space<vmem>>, %arg5: memref<8x4096xf32, #tpu.memory_space<vmem>>, %arg6: memref<8x4096xf32, #tpu.memory_space<vmem>>) attributes {dimension_semantics = [#tpu.dimension_semantics<parallel>, #tpu.dimension_semantics<arbitrary>], iteration_bounds = array<i64: 2, 1>, scalar_prefetch = 0 : i64, scratch_operands = 1 : i64, tpu.core_type = #tpu.core_type<tc>, window_params = [{transform_indices = @transform_0, window_bounds = array<i64: 8, 4096>}, {transform_indices = @transform_1, window_bounds = array<i64: 8, 4096>}, {transform_indices = @transform_2, window_bounds = array<i64: 8, 4096>}, {transform_indices = @transform_3, window_bounds = array<i64: 8, 4096>}]} {
    %c0_i32 = arith.constant 0 : i32
    %0 = arith.cmpi eq, %arg1, %c0_i32 : i32
    %1 = arith.extui %0 : i1 to i32
    %c0_i32_0 = arith.constant 0 : i32
    %2 = arith.cmpi ne, %1, %c0_i32_0 : i32
    scf.if %2 {
      %cst_36 = arith.constant 0.000000e+00 : f32
      %102 = vector.broadcast %cst_36 : f32 to vector<8x4096xf32>
      %c0_37 = arith.constant 0 : index
      %c0_38 = arith.constant 0 : index
      %103 = vector.load %arg6[%c0_37, %c0_38] : memref<8x4096xf32, #tpu.memory_space<vmem>>, vector<8x4096xf32>
      tpu.vector_store %arg6[%c0_37, %c0_38], %102 {strides = array<i32>} : memref<8x4096xf32, #tpu.memory_space<vmem>>, vector<8x4096xf32>,
    } else {
    }
    %c0 = arith.constant 0 : index
    %c0_1 = arith.constant 0 : index
    %3 = vector.load %arg2[%c0, %c0_1] : memref<8x4096xf32, #tpu.memory_space<vmem>>, vector<8x4096xf32>
    %c0_2 = arith.constant 0 : index
    %c0_3 = arith.constant 0 : index
    %4 = vector.load %arg3[%c0_2, %c0_3] : memref<8x4096xf32, #tpu.memory_space<vmem>>, vector<8x4096xf32>
    %c0_4 = arith.constant 0 : index
    %c0_5 = arith.constant 0 : index
    %5 = vector.load %arg4[%c0_4, %c0_5] : memref<8x4096xi32, #tpu.memory_space<vmem>>, vector<8x4096xi32>
    %c1_i32 = arith.constant 1 : i32
    %6 = vector.broadcast %c1_i32 : i32 to vector<8x4096xi32>
    %7 = arith.cmpi eq, %5, %6 : vector<8x4096xi32>
    %8 = arith.extui %7 : vector<8x4096xi1> to vector<8x4096xi32>
    %9 = arith.sitofp %8 : vector<8x4096xi32> to vector<8x4096xf32>
    %cst = arith.constant 0.939999997 : f32
    %10 = vector.broadcast %cst : f32 to vector<8x4096xf32>
    %11 = arith.mulf %10, %9 : vector<8x4096xf32>
    %cst_6 = arith.constant 3.000000e-02 : f32
    %12 = vector.broadcast %cst_6 : f32 to vector<8x4096xf32>
    %13 = arith.addf %11, %12 : vector<8x4096xf32>
    %cst_7 = arith.constant 1.000000e+00 : f32
    %14 = vector.broadcast %cst_7 : f32 to vector<8x4096xf32>
    %15 = arith.subf %14, %9 : vector<8x4096xf32>
    %cst_8 = arith.constant 0.939999997 : f32
    %16 = vector.broadcast %cst_8 : f32 to vector<8x4096xf32>
    %17 = arith.mulf %16, %15 : vector<8x4096xf32>
    %cst_9 = arith.constant 3.000000e-02 : f32
    %18 = vector.broadcast %cst_9 : f32 to vector<8x4096xf32>
    %19 = arith.addf %17, %18 : vector<8x4096xf32>
    %20 = arith.subf %4, %3 : vector<8x4096xf32>
    %21 = math.absf %20 : vector<8x4096xf32>
    %cst_10 = arith.constant 0.000000e+00 : f32
    %22 = vector.broadcast %cst_10 : f32 to vector<8x4096xf32>
    %23 = arith.subf %22, %21 : vector<8x4096xf32>
    %24 = math.exp %23 : vector<8x4096xf32>
    %cst_11 = arith.constant 1.000000e+00 : f32
    %25 = vector.broadcast %cst_11 : f32 to vector<8x4096xf32>
    %26 = arith.addf %25, %24 : vector<8x4096xf32>
    %cst_12 = arith.constant 1.000000e+00 : f32
    %27 = vector.broadcast %cst_12 : f32 to vector<8x4096xf32>
    %28 = arith.divf %27, %26 : vector<8x4096xf32>
    %29 = arith.mulf %24, %28 : vector<8x4096xf32>
    %cst_13 = arith.constant 0.000000e+00 : f32
    %30 = vector.broadcast %cst_13 : f32 to vector<8x4096xf32>
    %31 = arith.cmpf oge, %20, %30 : vector<8x4096xf32>
    %32 = arith.select %31, %28, %29 : vector<8x4096xi1>, vector<8x4096xf32>
    %33 = arith.select %31, %29, %28 : vector<8x4096xi1>, vector<8x4096xf32>
    %34 = arith.subf %19, %33 : vector<8x4096xf32>
    %35 = arith.subf %13, %32 : vector<8x4096xf32>
    %36 = arith.mulf %34, %34 : vector<8x4096xf32>
    %cst_14 = arith.constant 0.000000e+00 : f32
    %37 = vector.broadcast %cst_14 : f32 to vector<8x4096xf32>
    %38 = arith.subf %37, %36 : vector<8x4096xf32>
    %39 = arith.mulf %35, %35 : vector<8x4096xf32>
    %cst_15 = arith.constant 0.000000e+00 : f32
    %40 = vector.broadcast %cst_15 : f32 to vector<8x4096xf32>
    %41 = arith.subf %40, %39 : vector<8x4096xf32>
    %42 = math.absf %3 : vector<8x4096xf32>
    %cst_16 = arith.constant 0.000000e+00 : f32
    %43 = vector.broadcast %cst_16 : f32 to vector<8x4096xf32>
    %44 = arith.subf %43, %42 : vector<8x4096xf32>
    %45 = math.exp %44 : vector<8x4096xf32>
    %46 = math.log1p %45 : vector<8x4096xf32>
    %cst_17 = arith.constant 0.000000e+00 : f32
    %47 = vector.broadcast %cst_17 : f32 to vector<8x4096xf32>
    %48 = arith.minimumf %3, %47 : vector<8x4096xf32>
    %49 = arith.subf %48, %46 : vector<8x4096xf32>
    %cst_18 = arith.constant 0.000000e+00 : f32
    %50 = vector.broadcast %cst_18 : f32 to vector<8x4096xf32>
    %51 = arith.subf %50, %3 : vector<8x4096xf32>
    %cst_19 = arith.constant 0.000000e+00 : f32
    %52 = vector.broadcast %cst_19 : f32 to vector<8x4096xf32>
    %53 = arith.minimumf %51, %52 : vector<8x4096xf32>
    %54 = arith.subf %53, %46 : vector<8x4096xf32>
    %55 = math.absf %4 : vector<8x4096xf32>
    %cst_20 = arith.constant 0.000000e+00 : f32
    %56 = vector.broadcast %cst_20 : f32 to vector<8x4096xf32>
    %57 = arith.subf %56, %55 : vector<8x4096xf32>
    %58 = math.exp %57 : vector<8x4096xf32>
    %59 = math.log1p %58 : vector<8x4096xf32>
    %cst_21 = arith.constant 0.000000e+00 : f32
    %60 = vector.broadcast %cst_21 : f32 to vector<8x4096xf32>
    %61 = arith.minimumf %4, %60 : vector<8x4096xf32>
    %62 = arith.subf %61, %59 : vector<8x4096xf32>
    %cst_22 = arith.constant 0.000000e+00 : f32
    %63 = vector.broadcast %cst_22 : f32 to vector<8x4096xf32>
    %64 = arith.subf %63, %4 : vector<8x4096xf32>
    %cst_23 = arith.constant 0.000000e+00 : f32
    %65 = vector.broadcast %cst_23 : f32 to vector<8x4096xf32>
    %66 = arith.minimumf %64, %65 : vector<8x4096xf32>
    %67 = arith.subf %66, %59 : vector<8x4096xf32>
    %cst_24 = arith.constant 2.500000e-01 : f32
    %68 = vector.broadcast %cst_24 : f32 to vector<8x4096xf32>
    %69 = arith.mulf %19, %68 : vector<8x4096xf32>
    %70 = arith.mulf %69, %49 : vector<8x4096xf32>
    %cst_25 = arith.constant 1.000000e+00 : f32
    %71 = vector.broadcast %cst_25 : f32 to vector<8x4096xf32>
    %72 = arith.subf %71, %19 : vector<8x4096xf32>
    %cst_26 = arith.constant 7.500000e-01 : f32
    %73 = vector.broadcast %cst_26 : f32 to vector<8x4096xf32>
    %74 = arith.mulf %72, %73 : vector<8x4096xf32>
    %75 = arith.mulf %74, %54 : vector<8x4096xf32>
    %76 = arith.addf %70, %75 : vector<8x4096xf32>
    %77 = arith.mulf %76, %38 : vector<8x4096xf32>
    %cst_27 = arith.constant 2.500000e-01 : f32
    %78 = vector.broadcast %cst_27 : f32 to vector<8x4096xf32>
    %79 = arith.mulf %13, %78 : vector<8x4096xf32>
    %80 = arith.mulf %79, %62 : vector<8x4096xf32>
    %cst_28 = arith.constant 1.000000e+00 : f32
    %81 = vector.broadcast %cst_28 : f32 to vector<8x4096xf32>
    %82 = arith.subf %81, %13 : vector<8x4096xf32>
    %cst_29 = arith.constant 7.500000e-01 : f32
    %83 = vector.broadcast %cst_29 : f32 to vector<8x4096xf32>
    %84 = arith.mulf %82, %83 : vector<8x4096xf32>
    %85 = arith.mulf %84, %67 : vector<8x4096xf32>
    %86 = arith.addf %80, %85 : vector<8x4096xf32>
    %87 = arith.mulf %86, %41 : vector<8x4096xf32>
    %88 = arith.addf %77, %87 : vector<8x4096xf32>
    %c1_i32_30 = arith.constant 1 : i32
    %89 = arith.muli %arg0, %c1_i32_30 : i32
    %90 = arith.addi %89, %arg1 : i32
    %c32768_i32 = arith.constant 32768 : i32
    %91 = arith.muli %90, %c32768_i32 : i32
    %c32768_i32_31 = arith.constant 32768 : i32
    %92 = arith.addi %91, %c32768_i32_31 : i32
    %c200_i32 = arith.constant 200 : i32
    %93 = arith.cmpi sle, %92, %c200_i32 : i32
    %94 = arith.extui %93 : i1 to i32
    %c0_i32_32 = arith.constant 0 : i32
    %95 = arith.cmpi ne, %94, %c0_i32_32 : i32
    scf.if %95 {
      %c0_36 = arith.constant 0 : index
      %c0_37 = arith.constant 0 : index
      %102 = vector.load %arg6[%c0_36, %c0_37] : memref<8x4096xf32, #tpu.memory_space<vmem>>, vector<8x4096xf32>
      %103 = arith.addf %102, %88 : vector<8x4096xf32>
      %c0_38 = arith.constant 0 : index
      %c0_39 = arith.constant 0 : index
      %104 = vector.load %arg6[%c0_38, %c0_39] : memref<8x4096xf32, #tpu.memory_space<vmem>>, vector<8x4096xf32>
      tpu.vector_store %arg6[%c0_38, %c0_39], %103 {strides = array<i32>} : memref<8x4096xf32, #tpu.memory_space<vmem>>, vector<8x4096xf32>,
    } else {
    }
    %true = arith.constant true
    %96 = arith.xori %93, %true : i1
    %97 = arith.extui %96 : i1 to i32
    %c0_i32_33 = arith.constant 0 : i32
    %98 = arith.cmpi ne, %97, %c0_i32_33 : i32
    scf.if %98 {
      %102 = tpu.iota {dimensions = array<i32: 0>} : vector<8x4096xi32>
      %103 = tpu.iota {dimensions = array<i32: 1>} : vector<8x4096xi32>
      %c4096_i32 = arith.constant 4096 : i32
      %104 = vector.broadcast %c4096_i32 : i32 to vector<8x4096xi32>
      %105 = arith.muli %102, %104 : vector<8x4096xi32>
      %106 = vector.broadcast %91 : i32 to vector<8x4096xi32>
      %107 = arith.addi %106, %105 : vector<8x4096xi32>
      %108 = arith.addi %107, %103 : vector<8x4096xi32>
      %c0_36 = arith.constant 0 : index
      %c0_37 = arith.constant 0 : index
      %109 = vector.load %arg6[%c0_36, %c0_37] : memref<8x4096xf32, #tpu.memory_space<vmem>>, vector<8x4096xf32>
      %c200_i32_38 = arith.constant 200 : i32
      %110 = vector.broadcast %c200_i32_38 : i32 to vector<8x4096xi32>
      %111 = arith.cmpi slt, %108, %110 : vector<8x4096xi32>
      %cst_39 = arith.constant 0.000000e+00 : f32
      %112 = vector.broadcast %cst_39 : f32 to vector<8x4096xf32>
      %113 = arith.select %111, %88, %112 : vector<8x4096xi1>, vector<8x4096xf32>
      %114 = arith.addf %109, %113 : vector<8x4096xf32>
      %c0_40 = arith.constant 0 : index
      %c0_41 = arith.constant 0 : index
      %115 = vector.load %arg6[%c0_40, %c0_41] : memref<8x4096xf32, #tpu.memory_space<vmem>>, vector<8x4096xf32>
      tpu.vector_store %arg6[%c0_40, %c0_41], %114 {strides = array<i32>} : memref<8x4096xf32, #tpu.memory_space<vmem>>, vector<8x4096xf32>,
    } else {
    }
    %c0_i32_34 = arith.constant 0 : i32
    %99 = arith.cmpi eq, %arg1, %c0_i32_34 : i32
    %100 = arith.extui %99 : i1 to i32
    %c0_i32_35 = arith.constant 0 : i32
    %101 = arith.cmpi ne, %100, %c0_i32_35 : i32
    scf.if %101 {
      %c0_36 = arith.constant 0 : index
      %c0_37 = arith.constant 0 : index
      %102 = vector.load %arg6[%c0_36, %c0_37] : memref<8x4096xf32, #tpu.memory_space<vmem>>, vector<8x4096xf32>
      %c0_38 = arith.constant 0 : index
      %c0_39 = arith.constant 0 : index
      %103 = vector.load %arg5[%c0_38, %c0_39] : memref<8x4096xf32, #tpu.memory_space<vmem>>, vector<8x4096xf32>
      tpu.vector_store %arg5[%c0_38, %c0_39], %102 {strides = array<i32>} : memref<8x4096xf32, #tpu.memory_space<vmem>>, vector<8x4096xf32>,
    } else {
    }
    return
  }
  func.func @transform_0(%arg0: i32, %arg1: i32) -> (i32, i32) {
    %c1_i32 = arith.constant 1 : i32
    %0 = arith.muli %arg0, %c1_i32 : i32
    %1 = arith.addi %0, %arg1 : i32
    %c0_i32 = arith.constant 0 : i32
    %c0_i32_0 = arith.constant 0 : i32
    return %1, %c0_i32 : i32, i32
  }
  func.func @transform_1(%arg0: i32, %arg1: i32) -> (i32, i32) {
    %c1_i32 = arith.constant 1 : i32
    %0 = arith.muli %arg0, %c1_i32 : i32
    %1 = arith.addi %0, %arg1 : i32
    %c0_i32 = arith.constant 0 : i32
    %c0_i32_0 = arith.constant 0 : i32
    return %1, %c0_i32 : i32, i32
  }
  func.func @transform_2(%arg0: i32, %arg1: i32) -> (i32, i32) {
    %c1_i32 = arith.constant 1 : i32
    %0 = arith.muli %arg0, %c1_i32 : i32
    %1 = arith.addi %0, %arg1 : i32
    %c0_i32 = arith.constant 0 : i32
    %c0_i32_0 = arith.constant 0 : i32
    return %1, %c0_i32 : i32, i32
  }
  func.func @transform_3(%arg0: i32, %arg1: i32) -> (i32, i32) {
    %c0_i32 = arith.constant 0 : i32
    %c0_i32_0 = arith.constant 0 : i32
    return %arg0, %c0_i32 : i32, i32
  }
}

</mosaic_0001>

<llo_original>
// kernel: tpu_custom_call.1
$region0: #{tpu_custom_call.1}
  #allocation0 [shape = 'u32[]', space=smem, size = 0x4, offset = 0x4, fixed_abs, tag = 'smem constant byte address 0x4 - core index']
  #allocation1 [shape = 'u32[144,128]{1,0:T(1,128)}', space=vmem, size = 0x12000, scoped, tag = 'internal scratch']
  #allocation2 [shape = 'f32[8,4096]{1,0:T(8,128)}', space=vmem, size = 0x20000, scoped, tag = 'scratch operand']
  %s0 = inlined_call_operand.hbm [shape: f32[16,4096], index: 0, kind: input, shape index: {}]
  %s1 = inlined_call_operand.hbm [shape: f32[16,4096], index: 1, kind: input, shape index: {}]
  %s2 = inlined_call_operand.hbm [shape: s32[16,4096], index: 2, kind: input, shape index: {}]
  %s3 = inlined_call_operand.hbm [shape: f32[16,4096], index: 3, kind: output, shape index: {}]
  %s4 = sld [smem:[#allocation0]]
  $region73: #{tpu_custom_call.1} parent=0
    _
  %s6 = ssub.s32 1, %s4
  %s7 = scalar_select 0, %s6, %s4
  $region1: #{tpu_custom_call.1} parent=0
    #allocation3 [shape = 'u8[262144]{0}', space=vmem, size = 0x40000, scoped, tag = 'input window, operand 0']
    #allocation4 [shape = 's32[2]{0}', space=sflag, size = 0x8, scoped, tag = 'scoped memory for tpu_custom_call.1']
    #allocation5 [shape = 's32[2]{0}', space=sflag, size = 0x8, scoped, tag = 'scoped memory for tpu_custom_call.1']
    #allocation6 [shape = 'u8[262144]{0}', space=vmem, size = 0x40000, scoped, tag = 'input window, operand 1']
    #allocation7 [shape = 's32[2]{0}', space=sflag, size = 0x8, scoped, tag = 'scoped memory for tpu_custom_call.1']
    #allocation8 [shape = 'u8[262144]{0}', space=vmem, size = 0x40000, scoped, tag = 'input window, operand 2']
    #allocation9 [shape = 'u8[262144]{0}', space=vmem, size = 0x40000, scoped, tag = 'output window, operand 0']
    %8 = vsyncpa [#allocation4], 0
    %s9 = scalar_lea.sflag [#allocation4], 1
    %10 = vsyncpa %s9, 0
    %11 = vsyncpa [#allocation7], 0
    %s12 = scalar_lea.sflag [#allocation7], 1
    %13 = vsyncpa %s12, 0
    %14 = vsyncpa [#allocation5], 0
    %s15 = scalar_lea.sflag [#allocation5], 1
    %16 = vsyncpa %s15, 0
    loop: start=0, step=1, limit=4
    $region2: #{tpu_custom_call.1} parent=1 // loop_pre_header
      _
    $region3: #{tpu_custom_call.1} parent=1 // loop_header
      %s18 = sphi 0, %s22
      %p19 = scmp.ge.s32.totalorder %s18, 4
      %s25 = sphi 0, %s37
      %s26 = sphi 0, %s33
      %s27 = sphi 0, %s25
      %s28 = sphi 0, %s26
      %s29 = sphi 0, %s27
      %s30 = sphi 0, %s28
      %s42 = sphi 0, %s44
      %s45 = sphi 0, %s42
      %s46 = sphi 0, %s45
      %s62 = sphi 0, %s46
      %s70 = sphi 0, %s72
      %s73 = sphi 0, %s70
      %s74 = sphi 0, %s73
      %s90 = sphi 0, %s74
      %s98 = sphi 0, %s100
      %s101 = sphi 0, %s98
      %s102 = sphi 0, %s101
      %s118 = sphi 0, %s102
      %s124 = sphi 0, %s126
      %s127 = sphi 0, %s124
      %s128 = sphi 0, %s127
      %s144 = sphi 0, %s128
    $region4: #{tpu_custom_call.1} parent=1 // loop_header_branch
      %21 = sbr.rel (%p19) target = $region8
    $region5: #{tpu_custom_call.1} parent=1 // loop_body
      %s23 = ssub.s32 %s18, 1
      %s24 = ssub.s32 %s18, 2
      %s31 = sadd.s32 1, %s26
      %p32 = scmp.ge.s32.totalorder %s31, 1
      %s33 = scalar_select %p32, 0, %s31
      %s34 = sadd.s32 1, %s25
      %s35 = scalar_select %p32, %s34, %s25
      %p36 = scmp.ge.s32.totalorder %s35, 2
      %s37 = scalar_select %p36, 0, %s35
      %s38 = sadd.s32 %s25, %s26
      %s39 = sadd.s32 %s37, %s33
      %s40 = ssub.s32 %s38, %s39
      %p41 = scmp.eq.s32.totalorder %s40, 0
      %s43 = sadd.s32 %s42, 1
      %s44 = scalar_select %p41, %s42, %s43
      %p47 = pneg %p41
      %p48 = scmp.eq.s32.totalorder %s18, 1
      %p49 = por %p47, %p48
      %p50 = scmp.ne.s32.totalorder %s42, %s45
      %p51 = scmp.eq.s32.totalorder %s18, 0
      %p52 = por %p50, %p51
      %p53 = scmp.ne.s32.totalorder %s42, %s45
      %p54 = scmp.eq.s32.totalorder %s23, 1
      %p55 = por %p53, %p54
      %p56 = scmp.ne.s32.totalorder %s45, %s46
      %p57 = scmp.eq.s32.totalorder %s23, 0
      %p58 = por %p56, %p57
      %p59 = scmp.ne.s32.totalorder %s45, %s46
      %p60 = scmp.eq.s32.totalorder %s24, 1
      %p61 = por %p59, %p60
      %p63 = scmp.ne.s32.totalorder %s46, %s62
      %p64 = scmp.eq.s32.totalorder %s24, 0
      %p65 = por %p63, %p64
      %s66 = sadd.s32 %s25, %s26
      %s67 = sadd.s32 %s37, %s33
      %s68 = ssub.s32 %s66, %s67
      %p69 = scmp.eq.s32.totalorder %s68, 0
      %s71 = sadd.s32 %s70, 1
      %s72 = scalar_select %p69, %s70, %s71
      %p75 = pneg %p69
      %p76 = scmp.eq.s32.totalorder %s18, 1
      %p77 = por %p75, %p76
      %p78 = scmp.ne.s32.totalorder %s70, %s73
      %p79 = scmp.eq.s32.totalorder %s18, 0
      %p80 = por %p78, %p79
      %p81 = scmp.ne.s32.totalorder %s70, %s73
      %p82 = scmp.eq.s32.totalorder %s23, 1
      %p83 = por %p81, %p82
      %p84 = scmp.ne.s32.totalorder %s73, %s74
      %p85 = scmp.eq.s32.totalorder %s23, 0
      %p86 = por %p84, %p85
      %p87 = scmp.ne.s32.totalorder %s73, %s74
      %p88 = scmp.eq.s32.totalorder %s24, 1
      %p89 = por %p87, %p88
      %p91 = scmp.ne.s32.totalorder %s74, %s90
      %p92 = scmp.eq.s32.totalorder %s24, 0
      %p93 = por %p91, %p92
      %s94 = sadd.s32 %s25, %s26
      %s95 = sadd.s32 %s37, %s33
      %s96 = ssub.s32 %s94, %s95
      %p97 = scmp.eq.s32.totalorder %s96, 0
      %s99 = sadd.s32 %s98, 1
      %s100 = scalar_select %p97, %s98, %s99
      %p103 = pneg %p97
      %p104 = scmp.eq.s32.totalorder %s18, 1
      %p105 = por %p103, %p104
      %p106 = scmp.ne.s32.totalorder %s98, %s101
      %p107 = scmp.eq.s32.totalorder %s18, 0
      %p108 = por %p106, %p107
      %p109 = scmp.ne.s32.totalorder %s98, %s101
      %p110 = scmp.eq.s32.totalorder %s23, 1
      %p111 = por %p109, %p110
      %p112 = scmp.ne.s32.totalorder %s101, %s102
      %p113 = scmp.eq.s32.totalorder %s23, 0
      %p114 = por %p112, %p113
      %p115 = scmp.ne.s32.totalorder %s101, %s102
      %p116 = scmp.eq.s32.totalorder %s24, 1
      %p117 = por %p115, %p116
      %p119 = scmp.ne.s32.totalorder %s102, %s118
      %p120 = scmp.eq.s32.totalorder %s24, 0
      %p121 = por %p119, %p120
      %s122 = ssub.s32 %s25, %s37
      %p123 = scmp.eq.s32.totalorder %s122, 0
      %s125 = sadd.s32 %s124, 1
      %s126 = scalar_select %p123, %s124, %s125
      %p129 = pneg %p123
      %p130 = scmp.eq.s32.totalorder %s18, 1
      %p131 = por %p129, %p130
      %p132 = scmp.ne.s32.totalorder %s124, %s127
      %p133 = scmp.eq.s32.totalorder %s18, 0
      %p134 = por %p132, %p133
      %p135 = scmp.ne.s32.totalorder %s124, %s127
      %p136 = scmp.eq.s32.totalorder %s23, 1
      %p137 = por %p135, %p136
      %p138 = scmp.ne.s32.totalorder %s127, %s128
      %p139 = scmp.eq.s32.totalorder %s23, 0
      %p140 = por %p138, %p139
      %p141 = scmp.ne.s32.totalorder %s127, %s128
      %p142 = scmp.eq.s32.totalorder %s24, 1
      %p143 = por %p141, %p142
      %p145 = scmp.ne.s32.totalorder %s128, %s144
      %p146 = scmp.eq.s32.totalorder %s24, 0
      %p147 = por %p145, %p146
      %p148 = scmp.le.s32.totalorder 1, %s18
      %p149 = scmp.lt.s32.totalorder %s18, 3
      %p150 = pnand %p148, %p149
      %p151 = pneg %p150
      // Predicated region
      $region9: #{tpu_custom_call.1} parent=5 // pred_check
        _
      $region10: #{tpu_custom_call.1} parent=5 // pred_check_branch
        %153 = sbr.rel (%p150) target = $region12
      $region11: #{tpu_custom_call.1} parent=5 // pred_region
        %s154 = ssub.s32 %s18, 1
      $region12: #{tpu_custom_call.1} parent=5 // pred_fallthru
        _
      %p155 = scmp.lt.s32.totalorder %s18, 2
      // Predicated region
      $region13: #{tpu_custom_call.1} parent=5 // pred_check
        %p156 = pneg %p155
      $region14: #{tpu_custom_call.1} parent=5 // pred_check_branch
        %158 = sbr.rel (%p156) target = $region16
      $region15: #{tpu_custom_call.1} parent=5 // pred_region
        // Predicated region
        $region17: #{tpu_custom_call.1} parent=15 // pred_check
          %p159 = pneg %p52
        $region18: #{tpu_custom_call.1} parent=15 // pred_check_branch
          %161 = sbr.rel (%p159) target = $region20
        $region19: #{tpu_custom_call.1} parent=15 // pred_region
          %s162 = sand.u32 %s42, 1
          %s163 = scalar_lea.sflag [#allocation4], %s162
          %s164 = sand.u32 %s42, 1
          %s165 = smul.addr %s164, 256
          %s166 = scalar_lea.vmem [#allocation3], %s165
          %s167 = sadd.s32 %s25, %s26
          %s169 = ssub.s32 4096, 4096
          %170 = vsyncadd %s163, %s169
          %s171 = smul.addr %s167, 32
          %s172 = smul.addr %s171, 128
          %s173 = scalar_lea.hbm %s0, %s172
          %s175 = sshll.u32 %s166, 4
          %s176 = int_to_ptr.vmem [resolvable:$true] %s175
          %178 = dma.hbm_to_vmem [thread:$0]  %s173, 4096, %s176, %s163
        $region20: #{tpu_custom_call.1} parent=15 // pred_fallthru
          _
        // Predicated region
        $region21: #{tpu_custom_call.1} parent=15 // pred_check
          %p179 = pneg %p80
        $region22: #{tpu_custom_call.1} parent=15 // pred_check_branch
          %181 = sbr.rel (%p179) target = $region24
        $region23: #{tpu_custom_call.1} parent=15 // pred_region
          %s182 = sand.u32 %s18, 1
          %s183 = scalar_lea.sflag [#allocation7], %s182
          %s184 = sand.u32 %s70, 1
          %s185 = smul.addr %s184, 256
          %s186 = scalar_lea.vmem [#allocation6], %s185
          %s187 = sadd.s32 %s25, %s26
          %s189 = ssub.s32 4096, 4096
          %190 = vsyncadd %s183, %s189
          %s191 = smul.addr %s187, 32
          %s192 = smul.addr %s191, 128
          %s193 = scalar_lea.hbm %s1, %s192
          %s195 = sshll.u32 %s186, 4
          %s196 = int_to_ptr.vmem [resolvable:$true] %s195
          %198 = dma.hbm_to_vmem [thread:$0]  %s193, 4096, %s196, %s183
        $region24: #{tpu_custom_call.1} parent=15 // pred_fallthru
          _
        // Predicated region
        $region25: #{tpu_custom_call.1} parent=15 // pred_check
          %p199 = pneg %p108
        $region26: #{tpu_custom_call.1} parent=15 // pred_check_branch
          %201 = sbr.rel (%p199) target = $region28
        $region27: #{tpu_custom_call.1} parent=15 // pred_region
          %s202 = sand.u32 %s18, 1
          %s203 = scalar_lea.sflag [#allocation7], %s202
          %s204 = sand.u32 %s98, 1
          %s205 = smul.addr %s204, 256
          %s206 = scalar_lea.vmem [#allocation8], %s205
          %s207 = sadd.s32 %s25, %s26
          %s209 = ssub.s32 4096, 4096
          %210 = vsyncadd %s203, %s209
          %s211 = smul.addr %s207, 32
          %s212 = smul.addr %s211, 128
          %s213 = scalar_lea.hbm %s2, %s212
          %s215 = sshll.u32 %s206, 4
          %s216 = int_to_ptr.vmem [resolvable:$true] %s215
          %218 = dma.hbm_to_vmem [thread:$0]  %s213, 4096, %s216, %s203
        $region28: #{tpu_custom_call.1} parent=15 // pred_fallthru
          _
      $region16: #{tpu_custom_call.1} parent=5 // pred_fallthru
        _
      %p219 = scmp.le.s32.totalorder 1, %s18
      %p220 = scmp.lt.s32.totalorder %s18, 3
      %p221 = pnand %p219, %p220
      %p222 = pneg %p221
      // Predicated region
      $region29: #{tpu_custom_call.1} parent=5 // pred_check
        _
      $region30: #{tpu_custom_call.1} parent=5 // pred_check_branch
        %224 = sbr.rel (%p221) target = $region32
      $region31: #{tpu_custom_call.1} parent=5 // pred_region
        %s225 = ssub.s32 %s18, 1
        %s226 = sand.u32 %s45, 1
        %s227 = scalar_lea.sflag [#allocation4], %s226
        %s228 = sand.u32 %s45, 1
        %s229 = smul.addr %s228, 256
        %s230 = scalar_lea.vmem [#allocation3], %s229
        // Predicated region
        $region33: #{tpu_custom_call.1} parent=31 // pred_check
          %p231 = pneg %p58
        $region34: #{tpu_custom_call.1} parent=31 // pred_check_branch
          %233 = sbr.rel (%p231) target = $region36
        $region35: #{tpu_custom_call.1} parent=31 // pred_region
          %234 = dma.done %s227, 4096
        $region36: #{tpu_custom_call.1} parent=31 // pred_fallthru
          _
        %s235 = sand.u32 %s23, 1
        %s236 = scalar_lea.sflag [#allocation7], %s235
        %s237 = sand.u32 %s73, 1
        %s238 = smul.addr %s237, 256
        %s239 = scalar_lea.vmem [#allocation6], %s238
        // Predicated region
        $region37: #{tpu_custom_call.1} parent=31 // pred_check
          %p240 = pneg %p86
        $region38: #{tpu_custom_call.1} parent=31 // pred_check_branch
          %242 = sbr.rel (%p240) target = $region40
        $region39: #{tpu_custom_call.1} parent=31 // pred_region
          %243 = dma.done %s236, 4096
        $region40: #{tpu_custom_call.1} parent=31 // pred_fallthru
          _
        %s244 = sand.u32 %s23, 1
        %s245 = scalar_lea.sflag [#allocation7], %s244
        %s246 = sand.u32 %s101, 1
        %s247 = smul.addr %s246, 256
        %s248 = scalar_lea.vmem [#allocation8], %s247
        // Predicated region
        $region41: #{tpu_custom_call.1} parent=31 // pred_check
          %p249 = pneg %p114
        $region42: #{tpu_custom_call.1} parent=31 // pred_check_branch
          %251 = sbr.rel (%p249) target = $region44
        $region43: #{tpu_custom_call.1} parent=31 // pred_region
          %252 = dma.done %s245, 4096
        $region44: #{tpu_custom_call.1} parent=31 // pred_fallthru
          _
        %s253 = sand.u32 %s45, 1
        %s254 = scalar_lea.sflag [#allocation4], %s253
        %s255 = sand.u32 %s45, 1
        %s256 = smul.addr %s255, 256
        %s257 = scalar_lea.vmem [#allocation3], %s256
        %p258 = pneg %p58
        %p259 = pneg %p55
        %s260 = sand.u32 %s23, 1
        %s261 = scalar_lea.sflag [#allocation7], %s260
        %s262 = sand.u32 %s73, 1
        %s263 = smul.addr %s262, 256
        %s264 = scalar_lea.vmem [#allocation6], %s263
        %p265 = pneg %p86
        %p266 = pneg %p83
        %s267 = sand.u32 %s23, 1
        %s268 = scalar_lea.sflag [#allocation7], %s267
        %s269 = sand.u32 %s101, 1
        %s270 = smul.addr %s269, 256
        %s271 = scalar_lea.vmem [#allocation8], %s270
        %p272 = pneg %p114
        %p273 = pneg %p111
        %p274 = pneg %p140
        %p275 = pneg %p137
        %s276 = sand.u32 %s127, 1
        %s277 = scalar_lea.sflag [#allocation5], %s276
        %s278 = sand.u32 %s127, 1
        %s279 = smul.addr %s278, 256
        %s280 = scalar_lea.vmem [#allocation9], %s279
        %s281 = sadd.s32 %s27, %s28
        %s282 = sadd.s32 %s27, %s28
        %s283 = sadd.s32 %s27, %s28
        %p284 = scmp.eq.s32.totalorder %s28, 0
        // Predicated region
        $region45: #{tpu_custom_call.1} parent=31 // pred_check
          %p285 = pneg %p284
        $region46: #{tpu_custom_call.1} parent=31 // pred_check_branch
          %287 = sbr.rel (%p285) target = $region48
        $region47: #{tpu_custom_call.1} parent=31 // pred_region
          %288 = vst [vmem:[#allocation2] sm:$0xff] 0.0
          %289 = vst [vmem:[#allocation2 + $0x8] sm:$0xff] 0.0
          %290 = vst [vmem:[#allocation2 + $0x10] sm:$0xff] 0.0
          %291 = vst [vmem:[#allocation2 + $0x18] sm:$0xff] 0.0
          %292 = vst [vmem:[#allocation2 + $0x20] sm:$0xff] 0.0
          %293 = vst [vmem:[#allocation2 + $0x28] sm:$0xff] 0.0
          %294 = vst [vmem:[#allocation2 + $0x30] sm:$0xff] 0.0
          %295 = vst [vmem:[#allocation2 + $0x38] sm:$0xff] 0.0
          %296 = vst [vmem:[#allocation2 + $0x40] sm:$0xff] 0.0
          %297 = vst [vmem:[#allocation2 + $0x48] sm:$0xff] 0.0
          %298 = vst [vmem:[#allocation2 + $0x50] sm:$0xff] 0.0
          %299 = vst [vmem:[#allocation2 + $0x58] sm:$0xff] 0.0
          %300 = vst [vmem:[#allocation2 + $0x60] sm:$0xff] 0.0
          %301 = vst [vmem:[#allocation2 + $0x68] sm:$0xff] 0.0
          %302 = vst [vmem:[#allocation2 + $0x70] sm:$0xff] 0.0
          %303 = vst [vmem:[#allocation2 + $0x78] sm:$0xff] 0.0
          %304 = vst [vmem:[#allocation2 + $0x80] sm:$0xff] 0.0
          %305 = vst [vmem:[#allocation2 + $0x88] sm:$0xff] 0.0
          %306 = vst [vmem:[#allocation2 + $0x90] sm:$0xff] 0.0
          %307 = vst [vmem:[#allocation2 + $0x98] sm:$0xff] 0.0
          %308 = vst [vmem:[#allocation2 + $0xa0] sm:$0xff] 0.0
          %309 = vst [vmem:[#allocation2 + $0xa8] sm:$0xff] 0.0
          %310 = vst [vmem:[#allocation2 + $0xb0] sm:$0xff] 0.0
          %311 = vst [vmem:[#allocation2 + $0xb8] sm:$0xff] 0.0
          %312 = vst [vmem:[#allocation2 + $0xc0] sm:$0xff] 0.0
          %313 = vst [vmem:[#allocation2 + $0xc8] sm:$0xff] 0.0
          %314 = vst [vmem:[#allocation2 + $0xd0] sm:$0xff] 0.0
          %315 = vst [vmem:[#allocation2 + $0xd8] sm:$0xff] 0.0
          %316 = vst [vmem:[#allocation2 + $0xe0] sm:$0xff] 0.0
          %317 = vst [vmem:[#allocation2 + $0xe8] sm:$0xff] 0.0
          %318 = vst [vmem:[#allocation2 + $0xf0] sm:$0xff] 0.0
          %319 = vst [vmem:[#allocation2 + $0xf8] sm:$0xff] 0.0
        $region48: #{tpu_custom_call.1} parent=31 // pred_fallthru
          _
        %v320 = vld [vmem:[%s230] sm:$0xff]
        %v321 = vld [vmem:[%s230 + $0x8] sm:$0xff]
        %v322 = vld [vmem:[%s230 + $0x10] sm:$0xff]
        %v323 = vld [vmem:[%s230 + $0x18] sm:$0xff]
        %v324 = vld [vmem:[%s230 + $0x20] sm:$0xff]
        %v325 = vld [vmem:[%s230 + $0x28] sm:$0xff]
        %v326 = vld [vmem:[%s230 + $0x30] sm:$0xff]
        %v327 = vld [vmem:[%s230 + $0x38] sm:$0xff]
        %v328 = vld [vmem:[%s230 + $0x40] sm:$0xff]
        %v329 = vld [vmem:[%s230 + $0x48] sm:$0xff]
        %v330 = vld [vmem:[%s230 + $0x50] sm:$0xff]
        %v331 = vld [vmem:[%s230 + $0x58] sm:$0xff]
        %v332 = vld [vmem:[%s230 + $0x60] sm:$0xff]
        %v333 = vld [vmem:[%s230 + $0x68] sm:$0xff]
        %v334 = vld [vmem:[%s230 + $0x70] sm:$0xff]
        %v335 = vld [vmem:[%s230 + $0x78] sm:$0xff]
        %v336 = vld [vmem:[%s230 + $0x80] sm:$0xff]
        %v337 = vld [vmem:[%s230 + $0x88] sm:$0xff]
        %v338 = vld [vmem:[%s230 + $0x90] sm:$0xff]
        %v339 = vld [vmem:[%s230 + $0x98] sm:$0xff]
        %v340 = vld [vmem:[%s230 + $0xa0] sm:$0xff]
        %v341 = vld [vmem:[%s230 + $0xa8] sm:$0xff]
        %v342 = vld [vmem:[%s230 + $0xb0] sm:$0xff]
        %v343 = vld [vmem:[%s230 + $0xb8] sm:$0xff]
        %v344 = vld [vmem:[%s230 + $0xc0] sm:$0xff]
        %v345 = vld [vmem:[%s230 + $0xc8] sm:$0xff]
        %v346 = vld [vmem:[%s230 + $0xd0] sm:$0xff]
        %v347 = vld [vmem:[%s230 + $0xd8] sm:$0xff]
        %v348 = vld [vmem:[%s230 + $0xe0] sm:$0xff]
        %v349 = vld [vmem:[%s230 + $0xe8] sm:$0xff]
        %v350 = vld [vmem:[%s230 + $0xf0] sm:$0xff]
        %v351 = vld [vmem:[%s230 + $0xf8] sm:$0xff]
        %v352 = vld [vmem:[%s239] sm:$0xff]
        %v353 = vld [vmem:[%s239 + $0x8] sm:$0xff]
        %v354 = vld [vmem:[%s239 + $0x10] sm:$0xff]
        %v355 = vld [vmem:[%s239 + $0x18] sm:$0xff]
        %v356 = vld [vmem:[%s239 + $0x20] sm:$0xff]
        %v357 = vld [vmem:[%s239 + $0x28] sm:$0xff]
        %v358 = vld [vmem:[%s239 + $0x30] sm:$0xff]
        %v359 = vld [vmem:[%s239 + $0x38] sm:$0xff]
        %v360 = vld [vmem:[%s239 + $0x40] sm:$0xff]
        %v361 = vld [vmem:[%s239 + $0x48] sm:$0xff]
        %v362 = vld [vmem:[%s239 + $0x50] sm:$0xff]
        %v363 = vld [vmem:[%s239 + $0x58] sm:$0xff]
        %v364 = vld [vmem:[%s239 + $0x60] sm:$0xff]
        %v365 = vld [vmem:[%s239 + $0x68] sm:$0xff]
        %v366 = vld [vmem:[%s239 + $0x70] sm:$0xff]
        %v367 = vld [vmem:[%s239 + $0x78] sm:$0xff]
        %v368 = vld [vmem:[%s239 + $0x80] sm:$0xff]
        %v369 = vld [vmem:[%s239 + $0x88] sm:$0xff]
        %v370 = vld [vmem:[%s239 + $0x90] sm:$0xff]
        %v371 = vld [vmem:[%s239 + $0x98] sm:$0xff]
        %v372 = vld [vmem:[%s239 + $0xa0] sm:$0xff]
        %v373 = vld [vmem:[%s239 + $0xa8] sm:$0xff]
        %v374 = vld [vmem:[%s239 + $0xb0] sm:$0xff]
        %v375 = vld [vmem:[%s239 + $0xb8] sm:$0xff]
        %v376 = vld [vmem:[%s239 + $0xc0] sm:$0xff]
        %v377 = vld [vmem:[%s239 + $0xc8] sm:$0xff]
        %v378 = vld [vmem:[%s239 + $0xd0] sm:$0xff]
        %v379 = vld [vmem:[%s239 + $0xd8] sm:$0xff]
        %v380 = vld [vmem:[%s239 + $0xe0] sm:$0xff]
        %v381 = vld [vmem:[%s239 + $0xe8] sm:$0xff]
        %v382 = vld [vmem:[%s239 + $0xf0] sm:$0xff]
        %v383 = vld [vmem:[%s239 + $0xf8] sm:$0xff]
        %v384 = vld [vmem:[%s248] sm:$0xff]
        %v385 = vld [vmem:[%s248 + $0x8] sm:$0xff]
        %v386 = vld [vmem:[%s248 + $0x10] sm:$0xff]
        %v387 = vld [vmem:[%s248 + $0x18] sm:$0xff]
        %v388 = vld [vmem:[%s248 + $0x20] sm:$0xff]
        %v389 = vld [vmem:[%s248 + $0x28] sm:$0xff]
        %v390 = vld [vmem:[%s248 + $0x30] sm:$0xff]
        %v391 = vld [vmem:[%s248 + $0x38] sm:$0xff]
        %v392 = vld [vmem:[%s248 + $0x40] sm:$0xff]
        %v393 = vld [vmem:[%s248 + $0x48] sm:$0xff]
        %v394 = vld [vmem:[%s248 + $0x50] sm:$0xff]
        %v395 = vld [vmem:[%s248 + $0x58] sm:$0xff]
        %v396 = vld [vmem:[%s248 + $0x60] sm:$0xff]
        %v397 = vld [vmem:[%s248 + $0x68] sm:$0xff]
        %v398 = vld [vmem:[%s248 + $0x70] sm:$0xff]
        %v399 = vld [vmem:[%s248 + $0x78] sm:$0xff]
        %v400 = vld [vmem:[%s248 + $0x80] sm:$0xff]
        %v401 = vld [vmem:[%s248 + $0x88] sm:$0xff]
        %v402 = vld [vmem:[%s248 + $0x90] sm:$0xff]
        %v403 = vld [vmem:[%s248 + $0x98] sm:$0xff]
        %v404 = vld [vmem:[%s248 + $0xa0] sm:$0xff]
        %v405 = vld [vmem:[%s248 + $0xa8] sm:$0xff]
        %v406 = vld [vmem:[%s248 + $0xb0] sm:$0xff]
        %v407 = vld [vmem:[%s248 + $0xb8] sm:$0xff]
        %v408 = vld [vmem:[%s248 + $0xc0] sm:$0xff]
        %v409 = vld [vmem:[%s248 + $0xc8] sm:$0xff]
        %v410 = vld [vmem:[%s248 + $0xd0] sm:$0xff]
        %v411 = vld [vmem:[%s248 + $0xd8] sm:$0xff]
        %v412 = vld [vmem:[%s248 + $0xe0] sm:$0xff]
        %v413 = vld [vmem:[%s248 + $0xe8] sm:$0xff]
        %v414 = vld [vmem:[%s248 + $0xf0] sm:$0xff]
        %v415 = vld [vmem:[%s248 + $0xf8] sm:$0xff]
        %vm416 = vcmp.eq.s32.totalorder %v384, 1
        %vm417 = vcmp.eq.s32.totalorder %v385, 1
        %vm418 = vcmp.eq.s32.totalorder %v386, 1
        %vm419 = vcmp.eq.s32.totalorder %v387, 1
        %vm420 = vcmp.eq.s32.totalorder %v388, 1
        %vm421 = vcmp.eq.s32.totalorder %v389, 1
        %vm422 = vcmp.eq.s32.totalorder %v390, 1
        %vm423 = vcmp.eq.s32.totalorder %v391, 1
        %vm424 = vcmp.eq.s32.totalorder %v392, 1
        %vm425 = vcmp.eq.s32.totalorder %v393, 1
        %vm426 = vcmp.eq.s32.totalorder %v394, 1
        %vm427 = vcmp.eq.s32.totalorder %v395, 1
        %vm428 = vcmp.eq.s32.totalorder %v396, 1
        %vm429 = vcmp.eq.s32.totalorder %v397, 1
        %vm430 = vcmp.eq.s32.totalorder %v398, 1
        %vm431 = vcmp.eq.s32.totalorder %v399, 1
        %vm432 = vcmp.eq.s32.totalorder %v400, 1
        %vm433 = vcmp.eq.s32.totalorder %v401, 1
        %vm434 = vcmp.eq.s32.totalorder %v402, 1
        %vm435 = vcmp.eq.s32.totalorder %v403, 1
        %vm436 = vcmp.eq.s32.totalorder %v404, 1
        %vm437 = vcmp.eq.s32.totalorder %v405, 1
        %vm438 = vcmp.eq.s32.totalorder %v406, 1
        %vm439 = vcmp.eq.s32.totalorder %v407, 1
        %vm440 = vcmp.eq.s32.totalorder %v408, 1
        %vm441 = vcmp.eq.s32.totalorder %v409, 1
        %vm442 = vcmp.eq.s32.totalorder %v410, 1
        %vm443 = vcmp.eq.s32.totalorder %v411, 1
        %vm444 = vcmp.eq.s32.totalorder %v412, 1
        %vm445 = vcmp.eq.s32.totalorder %v413, 1
        %vm446 = vcmp.eq.s32.totalorder %v414, 1
        %vm447 = vcmp.eq.s32.totalorder %v415, 1
        %v448 = vsel %vm416, 1, 0
        %v449 = vsel %vm417, 1, 0
        %v450 = vsel %vm418, 1, 0
        %v451 = vsel %vm419, 1, 0
        %v452 = vsel %vm420, 1, 0
        %v453 = vsel %vm421, 1, 0
        %v454 = vsel %vm422, 1, 0
        %v455 = vsel %vm423, 1, 0
        %v456 = vsel %vm424, 1, 0
        %v457 = vsel %vm425, 1, 0
        %v458 = vsel %vm426, 1, 0
        %v459 = vsel %vm427, 1, 0
        %v460 = vsel %vm428, 1, 0
        %v461 = vsel %vm429, 1, 0
        %v462 = vsel %vm430, 1, 0
        %v463 = vsel %vm431, 1, 0
        %v464 = vsel %vm432, 1, 0
        %v465 = vsel %vm433, 1, 0
        %v466 = vsel %vm434, 1, 0
        %v467 = vsel %vm435, 1, 0
        %v468 = vsel %vm436, 1, 0
        %v469 = vsel %vm437, 1, 0
        %v470 = vsel %vm438, 1, 0
        %v471 = vsel %vm439, 1, 0
        %v472 = vsel %vm440, 1, 0
        %v473 = vsel %vm441, 1, 0
        %v474 = vsel %vm442, 1, 0
        %v475 = vsel %vm443, 1, 0
        %v476 = vsel %vm444, 1, 0
        %v477 = vsel %vm445, 1, 0
        %v478 = vsel %vm446, 1, 0
        %v479 = vsel %vm447, 1, 0
        %v480 = vcvt.s32.f32 %v448
        %v481 = vcvt.s32.f32 %v449
        %v482 = vcvt.s32.f32 %v450
        %v483 = vcvt.s32.f32 %v451
        %v484 = vcvt.s32.f32 %v452
        %v485 = vcvt.s32.f32 %v453
        %v486 = vcvt.s32.f32 %v454
        %v487 = vcvt.s32.f32 %v455
        %v488 = vcvt.s32.f32 %v456
        %v489 = vcvt.s32.f32 %v457
        %v490 = vcvt.s32.f32 %v458
        %v491 = vcvt.s32.f32 %v459
        %v492 = vcvt.s32.f32 %v460
        %v493 = vcvt.s32.f32 %v461
        %v494 = vcvt.s32.f32 %v462
        %v495 = vcvt.s32.f32 %v463
        %v496 = vcvt.s32.f32 %v464
        %v497 = vcvt.s32.f32 %v465
        %v498 = vcvt.s32.f32 %v466
        %v499 = vcvt.s32.f32 %v467
        %v500 = vcvt.s32.f32 %v468
        %v501 = vcvt.s32.f32 %v469
        %v502 = vcvt.s32.f32 %v470
        %v503 = vcvt.s32.f32 %v471
        %v504 = vcvt.s32.f32 %v472
        %v505 = vcvt.s32.f32 %v473
        %v506 = vcvt.s32.f32 %v474
        %v507 = vcvt.s32.f32 %v475
        %v508 = vcvt.s32.f32 %v476
        %v509 = vcvt.s32.f32 %v477
        %v510 = vcvt.s32.f32 %v478
        %v511 = vcvt.s32.f32 %v479
        %v512 = vmul.f32 %v480, 0.94
        %v513 = vmul.f32 %v481, 0.94
        %v514 = vmul.f32 %v482, 0.94
        %v515 = vmul.f32 %v483, 0.94
        %v516 = vmul.f32 %v484, 0.94
        %v517 = vmul.f32 %v485, 0.94
        %v518 = vmul.f32 %v486, 0.94
        %v519 = vmul.f32 %v487, 0.94
        %v520 = vmul.f32 %v488, 0.94
        %v521 = vmul.f32 %v489, 0.94
        %v522 = vmul.f32 %v490, 0.94
        %v523 = vmul.f32 %v491, 0.94
        %v524 = vmul.f32 %v492, 0.94
        %v525 = vmul.f32 %v493, 0.94
        %v526 = vmul.f32 %v494, 0.94
        %v527 = vmul.f32 %v495, 0.94
        %v528 = vmul.f32 %v496, 0.94
        %v529 = vmul.f32 %v497, 0.94
        %v530 = vmul.f32 %v498, 0.94
        %v531 = vmul.f32 %v499, 0.94
        %v532 = vmul.f32 %v500, 0.94
        %v533 = vmul.f32 %v501, 0.94
        %v534 = vmul.f32 %v502, 0.94
        %v535 = vmul.f32 %v503, 0.94
        %v536 = vmul.f32 %v504, 0.94
        %v537 = vmul.f32 %v505, 0.94
        %v538 = vmul.f32 %v506, 0.94
        %v539 = vmul.f32 %v507, 0.94
        %v540 = vmul.f32 %v508, 0.94
        %v541 = vmul.f32 %v509, 0.94
        %v542 = vmul.f32 %v510, 0.94
        %v543 = vmul.f32 %v511, 0.94
        %v544 = vadd.f32 %v512, 0.03
        %v545 = vadd.f32 %v513, 0.03
        %v546 = vadd.f32 %v514, 0.03
        %v547 = vadd.f32 %v515, 0.03
        %v548 = vadd.f32 %v516, 0.03
        %v549 = vadd.f32 %v517, 0.03
        %v550 = vadd.f32 %v518, 0.03
        %v551 = vadd.f32 %v519, 0.03
        %v552 = vadd.f32 %v520, 0.03
        %v553 = vadd.f32 %v521, 0.03
        %v554 = vadd.f32 %v522, 0.03
        %v555 = vadd.f32 %v523, 0.03
        %v556 = vadd.f32 %v524, 0.03
        %v557 = vadd.f32 %v525, 0.03
        %v558 = vadd.f32 %v526, 0.03
        %v559 = vadd.f32 %v527, 0.03
        %v560 = vadd.f32 %v528, 0.03
        %v561 = vadd.f32 %v529, 0.03
        %v562 = vadd.f32 %v530, 0.03
        %v563 = vadd.f32 %v531, 0.03
        %v564 = vadd.f32 %v532, 0.03
        %v565 = vadd.f32 %v533, 0.03
        %v566 = vadd.f32 %v534, 0.03
        %v567 = vadd.f32 %v535, 0.03
        %v568 = vadd.f32 %v536, 0.03
        %v569 = vadd.f32 %v537, 0.03
        %v570 = vadd.f32 %v538, 0.03
        %v571 = vadd.f32 %v539, 0.03
        %v572 = vadd.f32 %v540, 0.03
        %v573 = vadd.f32 %v541, 0.03
        %v574 = vadd.f32 %v542, 0.03
        %v575 = vadd.f32 %v543, 0.03
        %v576 = vsub.f32 1.0, %v480
        %v577 = vsub.f32 1.0, %v481
        %v578 = vsub.f32 1.0, %v482
        %v579 = vsub.f32 1.0, %v483
        %v580 = vsub.f32 1.0, %v484
        %v581 = vsub.f32 1.0, %v485
        %v582 = vsub.f32 1.0, %v486
        %v583 = vsub.f32 1.0, %v487
        %v584 = vsub.f32 1.0, %v488
        %v585 = vsub.f32 1.0, %v489
        %v586 = vsub.f32 1.0, %v490
        %v587 = vsub.f32 1.0, %v491
        %v588 = vsub.f32 1.0, %v492
        %v589 = vsub.f32 1.0, %v493
        %v590 = vsub.f32 1.0, %v494
        %v591 = vsub.f32 1.0, %v495
        %v592 = vsub.f32 1.0, %v496
        %v593 = vsub.f32 1.0, %v497
        %v594 = vsub.f32 1.0, %v498
        %v595 = vsub.f32 1.0, %v499
        %v596 = vsub.f32 1.0, %v500
        %v597 = vsub.f32 1.0, %v501
        %v598 = vsub.f32 1.0, %v502
        %v599 = vsub.f32 1.0, %v503
        %v600 = vsub.f32 1.0, %v504
        %v601 = vsub.f32 1.0, %v505
        %v602 = vsub.f32 1.0, %v506
        %v603 = vsub.f32 1.0, %v507
        %v604 = vsub.f32 1.0, %v508
        %v605 = vsub.f32 1.0, %v509
        %v606 = vsub.f32 1.0, %v510
        %v607 = vsub.f32 1.0, %v511
        %v608 = vmul.f32 %v576, 0.94
        %v609 = vmul.f32 %v577, 0.94
        %v610 = vmul.f32 %v578, 0.94
        %v611 = vmul.f32 %v579, 0.94
        %v612 = vmul.f32 %v580, 0.94
        %v613 = vmul.f32 %v581, 0.94
        %v614 = vmul.f32 %v582, 0.94
        %v615 = vmul.f32 %v583, 0.94
        %v616 = vmul.f32 %v584, 0.94
        %v617 = vmul.f32 %v585, 0.94
        %v618 = vmul.f32 %v586, 0.94
        %v619 = vmul.f32 %v587, 0.94
        %v620 = vmul.f32 %v588, 0.94
        %v621 = vmul.f32 %v589, 0.94
        %v622 = vmul.f32 %v590, 0.94
        %v623 = vmul.f32 %v591, 0.94
        %v624 = vmul.f32 %v592, 0.94
        %v625 = vmul.f32 %v593, 0.94
        %v626 = vmul.f32 %v594, 0.94
        %v627 = vmul.f32 %v595, 0.94
        %v628 = vmul.f32 %v596, 0.94
        %v629 = vmul.f32 %v597, 0.94
        %v630 = vmul.f32 %v598, 0.94
        %v631 = vmul.f32 %v599, 0.94
        %v632 = vmul.f32 %v600, 0.94
        %v633 = vmul.f32 %v601, 0.94
        %v634 = vmul.f32 %v602, 0.94
        %v635 = vmul.f32 %v603, 0.94
        %v636 = vmul.f32 %v604, 0.94
        %v637 = vmul.f32 %v605, 0.94
        %v638 = vmul.f32 %v606, 0.94
        %v639 = vmul.f32 %v607, 0.94
        %v640 = vadd.f32 %v608, 0.03
        %v641 = vadd.f32 %v609, 0.03
        %v642 = vadd.f32 %v610, 0.03
        %v643 = vadd.f32 %v611, 0.03
        %v644 = vadd.f32 %v612, 0.03
        %v645 = vadd.f32 %v613, 0.03
        %v646 = vadd.f32 %v614, 0.03
        %v647 = vadd.f32 %v615, 0.03
        %v648 = vadd.f32 %v616, 0.03
        %v649 = vadd.f32 %v617, 0.03
        %v650 = vadd.f32 %v618, 0.03
        %v651 = vadd.f32 %v619, 0.03
        %v652 = vadd.f32 %v620, 0.03
        %v653 = vadd.f32 %v621, 0.03
        %v654 = vadd.f32 %v622, 0.03
        %v655 = vadd.f32 %v623, 0.03
        %v656 = vadd.f32 %v624, 0.03
        %v657 = vadd.f32 %v625, 0.03
        %v658 = vadd.f32 %v626, 0.03
        %v659 = vadd.f32 %v627, 0.03
        %v660 = vadd.f32 %v628, 0.03
        %v661 = vadd.f32 %v629, 0.03
        %v662 = vadd.f32 %v630, 0.03
        %v663 = vadd.f32 %v631, 0.03
        %v664 = vadd.f32 %v632, 0.03
        %v665 = vadd.f32 %v633, 0.03
        %v666 = vadd.f32 %v634, 0.03
        %v667 = vadd.f32 %v635, 0.03
        %v668 = vadd.f32 %v636, 0.03
        %v669 = vadd.f32 %v637, 0.03
        %v670 = vadd.f32 %v638, 0.03
        %v671 = vadd.f32 %v639, 0.03
        %v672 = vsub.f32 %v352, %v320
        %v673 = vsub.f32 %v353, %v321
        %v674 = vsub.f32 %v354, %v322
        %v675 = vsub.f32 %v355, %v323
        %v676 = vsub.f32 %v356, %v324
        %v677 = vsub.f32 %v357, %v325
        %v678 = vsub.f32 %v358, %v326
        %v679 = vsub.f32 %v359, %v327
        %v680 = vsub.f32 %v360, %v328
        %v681 = vsub.f32 %v361, %v329
        %v682 = vsub.f32 %v362, %v330
        %v683 = vsub.f32 %v363, %v331
        %v684 = vsub.f32 %v364, %v332
        %v685 = vsub.f32 %v365, %v333
        %v686 = vsub.f32 %v366, %v334
        %v687 = vsub.f32 %v367, %v335
        %v688 = vsub.f32 %v368, %v336
        %v689 = vsub.f32 %v369, %v337
        %v690 = vsub.f32 %v370, %v338
        %v691 = vsub.f32 %v371, %v339
        %v692 = vsub.f32 %v372, %v340
        %v693 = vsub.f32 %v373, %v341
        %v694 = vsub.f32 %v374, %v342
        %v695 = vsub.f32 %v375, %v343
        %v696 = vsub.f32 %v376, %v344
        %v697 = vsub.f32 %v377, %v345
        %v698 = vsub.f32 %v378, %v346
        %v699 = vsub.f32 %v379, %v347
        %v700 = vsub.f32 %v380, %v348
        %v701 = vsub.f32 %v381, %v349
        %v702 = vsub.f32 %v382, %v350
        %v703 = vsub.f32 %v383, %v351
        %v704 = vand.u32 2147483647, %v672
        %v705 = vand.u32 2147483647, %v673
        %v706 = vand.u32 2147483647, %v674
        %v707 = vand.u32 2147483647, %v675
        %v708 = vand.u32 2147483647, %v676
        %v709 = vand.u32 2147483647, %v677
        %v710 = vand.u32 2147483647, %v678
        %v711 = vand.u32 2147483647, %v679
        %v712 = vand.u32 2147483647, %v680
        %v713 = vand.u32 2147483647, %v681
        %v714 = vand.u32 2147483647, %v682
        %v715 = vand.u32 2147483647, %v683
        %v716 = vand.u32 2147483647, %v684
        %v717 = vand.u32 2147483647, %v685
        %v718 = vand.u32 2147483647, %v686
        %v719 = vand.u32 2147483647, %v687
        %v720 = vand.u32 2147483647, %v688
        %v721 = vand.u32 2147483647, %v689
        %v722 = vand.u32 2147483647, %v690
        %v723 = vand.u32 2147483647, %v691
        %v724 = vand.u32 2147483647, %v692
        %v725 = vand.u32 2147483647, %v693
        %v726 = vand.u32 2147483647, %v694
        %v727 = vand.u32 2147483647, %v695
        %v728 = vand.u32 2147483647, %v696
        %v729 = vand.u32 2147483647, %v697
        %v730 = vand.u32 2147483647, %v698
        %v731 = vand.u32 2147483647, %v699
        %v732 = vand.u32 2147483647, %v700
        %v733 = vand.u32 2147483647, %v701
        %v734 = vand.u32 2147483647, %v702
        %v735 = vand.u32 2147483647, %v703
        %v736 = vsub.f32 0.0, %v704
        %v737 = vsub.f32 0.0, %v705
        %v738 = vsub.f32 0.0, %v706
        %v739 = vsub.f32 0.0, %v707
        %v740 = vsub.f32 0.0, %v708
        %v741 = vsub.f32 0.0, %v709
        %v742 = vsub.f32 0.0, %v710
        %v743 = vsub.f32 0.0, %v711
        %v744 = vsub.f32 0.0, %v712
        %v745 = vsub.f32 0.0, %v713
        %v746 = vsub.f32 0.0, %v714
        %v747 = vsub.f32 0.0, %v715
        %v748 = vsub.f32 0.0, %v716
        %v749 = vsub.f32 0.0, %v717
        %v750 = vsub.f32 0.0, %v718
        %v751 = vsub.f32 0.0, %v719
        %v752 = vsub.f32 0.0, %v720
        %v753 = vsub.f32 0.0, %v721
        %v754 = vsub.f32 0.0, %v722
        %v755 = vsub.f32 0.0, %v723
        %v756 = vsub.f32 0.0, %v724
        %v757 = vsub.f32 0.0, %v725
        %v758 = vsub.f32 0.0, %v726
        %v759 = vsub.f32 0.0, %v727
        %v760 = vsub.f32 0.0, %v728
        %v761 = vsub.f32 0.0, %v729
        %v762 = vsub.f32 0.0, %v730
        %v763 = vsub.f32 0.0, %v731
        %v764 = vsub.f32 0.0, %v732
        %v765 = vsub.f32 0.0, %v733
        %v766 = vsub.f32 0.0, %v734
        %v767 = vsub.f32 0.0, %v735
        %v768 = vmul.f32 %v736, 1.442695
        %v769 = vpow.pop %v768
        %v770 = vmul.f32 %v737, 1.442695
        %v771 = vpow.pop %v770
        %v772 = vmul.f32 %v738, 1.442695
        %v773 = vpow.pop %v772
        %v774 = vmul.f32 %v739, 1.442695
        %v775 = vpow.pop %v774
        %v776 = vmul.f32 %v740, 1.442695
        %v777 = vpow.pop %v776
        %v778 = vmul.f32 %v741, 1.442695
        %v779 = vpow.pop %v778
        %v780 = vmul.f32 %v742, 1.442695
        %v781 = vpow.pop %v780
        %v782 = vmul.f32 %v743, 1.442695
        %v783 = vpow.pop %v782
        %v784 = vmul.f32 %v744, 1.442695
        %v785 = vpow.pop %v784
        %v786 = vmul.f32 %v745, 1.442695
        %v787 = vpow.pop %v786
        %v788 = vmul.f32 %v746, 1.442695
        %v789 = vpow.pop %v788
        %v790 = vmul.f32 %v747, 1.442695
        %v791 = vpow.pop %v790
        %v792 = vmul.f32 %v748, 1.442695
        %v793 = vpow.pop %v792
        %v794 = vmul.f32 %v749, 1.442695
        %v795 = vpow.pop %v794
        %v796 = vmul.f32 %v750, 1.442695
        %v797 = vpow.pop %v796
        %v798 = vmul.f32 %v751, 1.442695
        %v799 = vpow.pop %v798
        %v800 = vmul.f32 %v752, 1.442695
        %v801 = vpow.pop %v800
        %v802 = vmul.f32 %v753, 1.442695
        %v803 = vpow.pop %v802
        %v804 = vmul.f32 %v754, 1.442695
        %v805 = vpow.pop %v804
        %v806 = vmul.f32 %v755, 1.442695
        %v807 = vpow.pop %v806
        %v808 = vmul.f32 %v756, 1.442695
        %v809 = vpow.pop %v808
        %v810 = vmul.f32 %v757, 1.442695
        %v811 = vpow.pop %v810
        %v812 = vmul.f32 %v758, 1.442695
        %v813 = vpow.pop %v812
        %v814 = vmul.f32 %v759, 1.442695
        %v815 = vpow.pop %v814
        %v816 = vmul.f32 %v760, 1.442695
        %v817 = vpow.pop %v816
        %v818 = vmul.f32 %v761, 1.442695
        %v819 = vpow.pop %v818
        %v820 = vmul.f32 %v762, 1.442695
        %v821 = vpow.pop %v820
        %v822 = vmul.f32 %v763, 1.442695
        %v823 = vpow.pop %v822
        %v824 = vmul.f32 %v764, 1.442695
        %v825 = vpow.pop %v824
        %v826 = vmul.f32 %v765, 1.442695
        %v827 = vpow.pop %v826
        %v828 = vmul.f32 %v766, 1.442695
        %v829 = vpow.pop %v828
        %v830 = vmul.f32 %v767, 1.442695
        %v831 = vpow.pop %v830
        %v832 = vadd.f32 %v769, 1.0
        %v833 = vadd.f32 %v771, 1.0
        %v834 = vadd.f32 %v773, 1.0
        %v835 = vadd.f32 %v775, 1.0
        %v836 = vadd.f32 %v777, 1.0
        %v837 = vadd.f32 %v779, 1.0
        %v838 = vadd.f32 %v781, 1.0
        %v839 = vadd.f32 %v783, 1.0
        %v840 = vadd.f32 %v785, 1.0
        %v841 = vadd.f32 %v787, 1.0
        %v842 = vadd.f32 %v789, 1.0
        %v843 = vadd.f32 %v791, 1.0
        %v844 = vadd.f32 %v793, 1.0
        %v845 = vadd.f32 %v795, 1.0
        %v846 = vadd.f32 %v797, 1.0
        %v847 = vadd.f32 %v799, 1.0
        %v848 = vadd.f32 %v801, 1.0
        %v849 = vadd.f32 %v803, 1.0
        %v850 = vadd.f32 %v805, 1.0
        %v851 = vadd.f32 %v807, 1.0
        %v852 = vadd.f32 %v809, 1.0
        %v853 = vadd.f32 %v811, 1.0
        %v854 = vadd.f32 %v813, 1.0
        %v855 = vadd.f32 %v815, 1.0
        %v856 = vadd.f32 %v817, 1.0
        %v857 = vadd.f32 %v819, 1.0
        %v858 = vadd.f32 %v821, 1.0
        %v859 = vadd.f32 %v823, 1.0
        %v860 = vadd.f32 %v825, 1.0
        %v861 = vadd.f32 %v827, 1.0
        %v862 = vadd.f32 %v829, 1.0
        %v863 = vadd.f32 %v831, 1.0
        %v864 = vrcp.pop %v832
        %v865 = vmul.f32 1.0, %v864
        %v866 = vrcp.pop %v833
        %v867 = vmul.f32 1.0, %v866
        %v868 = vrcp.pop %v834
        %v869 = vmul.f32 1.0, %v868
        %v870 = vrcp.pop %v835
        %v871 = vmul.f32 1.0, %v870
        %v872 = vrcp.pop %v836
        %v873 = vmul.f32 1.0, %v872
        %v874 = vrcp.pop %v837
        %v875 = vmul.f32 1.0, %v874
        %v876 = vrcp.pop %v838
        %v877 = vmul.f32 1.0, %v876
        %v878 = vrcp.pop %v839
        %v879 = vmul.f32 1.0, %v878
        %v880 = vrcp.pop %v840
        %v881 = vmul.f32 1.0, %v880
        %v882 = vrcp.pop %v841
        %v883 = vmul.f32 1.0, %v882
        %v884 = vrcp.pop %v842
        %v885 = vmul.f32 1.0, %v884
        %v886 = vrcp.pop %v843
        %v887 = vmul.f32 1.0, %v886
        %v888 = vrcp.pop %v844
        %v889 = vmul.f32 1.0, %v888
        %v890 = vrcp.pop %v845
        %v891 = vmul.f32 1.0, %v890
        %v892 = vrcp.pop %v846
        %v893 = vmul.f32 1.0, %v892
        %v894 = vrcp.pop %v847
        %v895 = vmul.f32 1.0, %v894
        %v896 = vrcp.pop %v848
        %v897 = vmul.f32 1.0, %v896
        %v898 = vrcp.pop %v849
        %v899 = vmul.f32 1.0, %v898
        %v900 = vrcp.pop %v850
        %v901 = vmul.f32 1.0, %v900
        %v902 = vrcp.pop %v851
        %v903 = vmul.f32 1.0, %v902
        %v904 = vrcp.pop %v852
        %v905 = vmul.f32 1.0, %v904
        %v906 = vrcp.pop %v853
        %v907 = vmul.f32 1.0, %v906
        %v908 = vrcp.pop %v854
        %v909 = vmul.f32 1.0, %v908
        %v910 = vrcp.pop %v855
        %v911 = vmul.f32 1.0, %v910
        %v912 = vrcp.pop %v856
        %v913 = vmul.f32 1.0, %v912
        %v914 = vrcp.pop %v857
        %v915 = vmul.f32 1.0, %v914
        %v916 = vrcp.pop %v858
        %v917 = vmul.f32 1.0, %v916
        %v918 = vrcp.pop %v859
        %v919 = vmul.f32 1.0, %v918
        %v920 = vrcp.pop %v860
        %v921 = vmul.f32 1.0, %v920
        %v922 = vrcp.pop %v861
        %v923 = vmul.f32 1.0, %v922
        %v924 = vrcp.pop %v862
        %v925 = vmul.f32 1.0, %v924
        %v926 = vrcp.pop %v863
        %v927 = vmul.f32 1.0, %v926
        %v928 = vmul.f32 %v769, %v865
        %v929 = vmul.f32 %v771, %v867
        %v930 = vmul.f32 %v773, %v869
        %v931 = vmul.f32 %v775, %v871
        %v932 = vmul.f32 %v777, %v873
        %v933 = vmul.f32 %v779, %v875
        %v934 = vmul.f32 %v781, %v877
        %v935 = vmul.f32 %v783, %v879
        %v936 = vmul.f32 %v785, %v881
        %v937 = vmul.f32 %v787, %v883
        %v938 = vmul.f32 %v789, %v885
        %v939 = vmul.f32 %v791, %v887
        %v940 = vmul.f32 %v793, %v889
        %v941 = vmul.f32 %v795, %v891
        %v942 = vmul.f32 %v797, %v893
        %v943 = vmul.f32 %v799, %v895
        %v944 = vmul.f32 %v801, %v897
        %v945 = vmul.f32 %v803, %v899
        %v946 = vmul.f32 %v805, %v901
        %v947 = vmul.f32 %v807, %v903
        %v948 = vmul.f32 %v809, %v905
        %v949 = vmul.f32 %v811, %v907
        %v950 = vmul.f32 %v813, %v909
        %v951 = vmul.f32 %v815, %v911
        %v952 = vmul.f32 %v817, %v913
        %v953 = vmul.f32 %v819, %v915
        %v954 = vmul.f32 %v821, %v917
        %v955 = vmul.f32 %v823, %v919
        %v956 = vmul.f32 %v825, %v921
        %v957 = vmul.f32 %v827, %v923
        %v958 = vmul.f32 %v829, %v925
        %v959 = vmul.f32 %v831, %v927
        %vm960 = vcmp.ge.f32.partialorder %v672, 0.0
        %vm961 = vcmp.ge.f32.partialorder %v673, 0.0
        %vm962 = vcmp.ge.f32.partialorder %v674, 0.0
        %vm963 = vcmp.ge.f32.partialorder %v675, 0.0
        %vm964 = vcmp.ge.f32.partialorder %v676, 0.0
        %vm965 = vcmp.ge.f32.partialorder %v677, 0.0
        %vm966 = vcmp.ge.f32.partialorder %v678, 0.0
        %vm967 = vcmp.ge.f32.partialorder %v679, 0.0
        %vm968 = vcmp.ge.f32.partialorder %v680, 0.0
        %vm969 = vcmp.ge.f32.partialorder %v681, 0.0
        %vm970 = vcmp.ge.f32.partialorder %v682, 0.0
        %vm971 = vcmp.ge.f32.partialorder %v683, 0.0
        %vm972 = vcmp.ge.f32.partialorder %v684, 0.0
        %vm973 = vcmp.ge.f32.partialorder %v685, 0.0
        %vm974 = vcmp.ge.f32.partialorder %v686, 0.0
        %vm975 = vcmp.ge.f32.partialorder %v687, 0.0
        %vm976 = vcmp.ge.f32.partialorder %v688, 0.0
        %vm977 = vcmp.ge.f32.partialorder %v689, 0.0
        %vm978 = vcmp.ge.f32.partialorder %v690, 0.0
        %vm979 = vcmp.ge.f32.partialorder %v691, 0.0
        %vm980 = vcmp.ge.f32.partialorder %v692, 0.0
        %vm981 = vcmp.ge.f32.partialorder %v693, 0.0
        %vm982 = vcmp.ge.f32.partialorder %v694, 0.0
        %vm983 = vcmp.ge.f32.partialorder %v695, 0.0
        %vm984 = vcmp.ge.f32.partialorder %v696, 0.0
        %vm985 = vcmp.ge.f32.partialorder %v697, 0.0
        %vm986 = vcmp.ge.f32.partialorder %v698, 0.0
        %vm987 = vcmp.ge.f32.partialorder %v699, 0.0
        %vm988 = vcmp.ge.f32.partialorder %v700, 0.0
        %vm989 = vcmp.ge.f32.partialorder %v701, 0.0
        %vm990 = vcmp.ge.f32.partialorder %v702, 0.0
        %vm991 = vcmp.ge.f32.partialorder %v703, 0.0
        %v992 = vsel %vm960, %v865, %v928
        %v993 = vsel %vm961, %v867, %v929
        %v994 = vsel %vm962, %v869, %v930
        %v995 = vsel %vm963, %v871, %v931
        %v996 = vsel %vm964, %v873, %v932
        %v997 = vsel %vm965, %v875, %v933
        %v998 = vsel %vm966, %v877, %v934
        %v999 = vsel %vm967, %v879, %v935
        %v1000 = vsel %vm968, %v881, %v936
        %v1001 = vsel %vm969, %v883, %v937
        %v1002 = vsel %vm970, %v885, %v938
        %v1003 = vsel %vm971, %v887, %v939
        %v1004 = vsel %vm972, %v889, %v940
        %v1005 = vsel %vm973, %v891, %v941
        %v1006 = vsel %vm974, %v893, %v942
        %v1007 = vsel %vm975, %v895, %v943
        %v1008 = vsel %vm976, %v897, %v944
        %v1009 = vsel %vm977, %v899, %v945
        %v1010 = vsel %vm978, %v901, %v946
        %v1011 = vsel %vm979, %v903, %v947
        %v1012 = vsel %vm980, %v905, %v948
        %v1013 = vsel %vm981, %v907, %v949
        %v1014 = vsel %vm982, %v909, %v950
        %v1015 = vsel %vm983, %v911, %v951
        %v1016 = vsel %vm984, %v913, %v952
        %v1017 = vsel %vm985, %v915, %v953
        %v1018 = vsel %vm986, %v917, %v954
        %v1019 = vsel %vm987, %v919, %v955
        %v1020 = vsel %vm988, %v921, %v956
        %v1021 = vsel %vm989, %v923, %v957
        %v1022 = vsel %vm990, %v925, %v958
        %v1023 = vsel %vm991, %v927, %v959
        %v1024 = vsel %vm960, %v928, %v865
        %v1025 = vsel %vm961, %v929, %v867
        %v1026 = vsel %vm962, %v930, %v869
        %v1027 = vsel %vm963, %v931, %v871
        %v1028 = vsel %vm964, %v932, %v873
        %v1029 = vsel %vm965, %v933, %v875
        %v1030 = vsel %vm966, %v934, %v877
        %v1031 = vsel %vm967, %v935, %v879
        %v1032 = vsel %vm968, %v936, %v881
        %v1033 = vsel %vm969, %v937, %v883
        %v1034 = vsel %vm970, %v938, %v885
        %v1035 = vsel %vm971, %v939, %v887
        %v1036 = vsel %vm972, %v940, %v889
        %v1037 = vsel %vm973, %v941, %v891
        %v1038 = vsel %vm974, %v942, %v893
        %v1039 = vsel %vm975, %v943, %v895
        %v1040 = vsel %vm976, %v944, %v897
        %v1041 = vsel %vm977, %v945, %v899
        %v1042 = vsel %vm978, %v946, %v901
        %v1043 = vsel %vm979, %v947, %v903
        %v1044 = vsel %vm980, %v948, %v905
        %v1045 = vsel %vm981, %v949, %v907
        %v1046 = vsel %vm982, %v950, %v909
        %v1047 = vsel %vm983, %v951, %v911
        %v1048 = vsel %vm984, %v952, %v913
        %v1049 = vsel %vm985, %v953, %v915
        %v1050 = vsel %vm986, %v954, %v917
        %v1051 = vsel %vm987, %v955, %v919
        %v1052 = vsel %vm988, %v956, %v921
        %v1053 = vsel %vm989, %v957, %v923
        %v1054 = vsel %vm990, %v958, %v925
        %v1055 = vsel %vm991, %v959, %v927
        %v1056 = vsub.f32 %v640, %v1024
        %v1057 = vsub.f32 %v641, %v1025
        %v1058 = vsub.f32 %v642, %v1026
        %v1059 = vsub.f32 %v643, %v1027
        %v1060 = vsub.f32 %v644, %v1028
        %v1061 = vsub.f32 %v645, %v1029
        %v1062 = vsub.f32 %v646, %v1030
        %v1063 = vsub.f32 %v647, %v1031
        %v1064 = vsub.f32 %v648, %v1032
        %v1065 = vsub.f32 %v649, %v1033
        %v1066 = vsub.f32 %v650, %v1034
        %v1067 = vsub.f32 %v651, %v1035
        %v1068 = vsub.f32 %v652, %v1036
        %v1069 = vsub.f32 %v653, %v1037
        %v1070 = vsub.f32 %v654, %v1038
        %v1071 = vsub.f32 %v655, %v1039
        %v1072 = vsub.f32 %v656, %v1040
        %v1073 = vsub.f32 %v657, %v1041
        %v1074 = vsub.f32 %v658, %v1042
        %v1075 = vsub.f32 %v659, %v1043
        %v1076 = vsub.f32 %v660, %v1044
        %v1077 = vsub.f32 %v661, %v1045
        %v1078 = vsub.f32 %v662, %v1046
        %v1079 = vsub.f32 %v663, %v1047
        %v1080 = vsub.f32 %v664, %v1048
        %v1081 = vsub.f32 %v665, %v1049
        %v1082 = vsub.f32 %v666, %v1050
        %v1083 = vsub.f32 %v667, %v1051
        %v1084 = vsub.f32 %v668, %v1052
        %v1085 = vsub.f32 %v669, %v1053
        %v1086 = vsub.f32 %v670, %v1054
        %v1087 = vsub.f32 %v671, %v1055
        %v1088 = vsub.f32 %v544, %v992
        %v1089 = vsub.f32 %v545, %v993
        %v1090 = vsub.f32 %v546, %v994
        %v1091 = vsub.f32 %v547, %v995
        %v1092 = vsub.f32 %v548, %v996
        %v1093 = vsub.f32 %v549, %v997
        %v1094 = vsub.f32 %v550, %v998
        %v1095 = vsub.f32 %v551, %v999
        %v1096 = vsub.f32 %v552, %v1000
        %v1097 = vsub.f32 %v553, %v1001
        %v1098 = vsub.f32 %v554, %v1002
        %v1099 = vsub.f32 %v555, %v1003
        %v1100 = vsub.f32 %v556, %v1004
        %v1101 = vsub.f32 %v557, %v1005
        %v1102 = vsub.f32 %v558, %v1006
        %v1103 = vsub.f32 %v559, %v1007
        %v1104 = vsub.f32 %v560, %v1008
        %v1105 = vsub.f32 %v561, %v1009
        %v1106 = vsub.f32 %v562, %v1010
        %v1107 = vsub.f32 %v563, %v1011
        %v1108 = vsub.f32 %v564, %v1012
        %v1109 = vsub.f32 %v565, %v1013
        %v1110 = vsub.f32 %v566, %v1014
        %v1111 = vsub.f32 %v567, %v1015
        %v1112 = vsub.f32 %v568, %v1016
        %v1113 = vsub.f32 %v569, %v1017
        %v1114 = vsub.f32 %v570, %v1018
        %v1115 = vsub.f32 %v571, %v1019
        %v1116 = vsub.f32 %v572, %v1020
        %v1117 = vsub.f32 %v573, %v1021
        %v1118 = vsub.f32 %v574, %v1022
        %v1119 = vsub.f32 %v575, %v1023
        %v1120 = vmul.f32 %v1056, %v1056
        %v1121 = vmul.f32 %v1057, %v1057
        %v1122 = vmul.f32 %v1058, %v1058
        %v1123 = vmul.f32 %v1059, %v1059
        %v1124 = vmul.f32 %v1060, %v1060
        %v1125 = vmul.f32 %v1061, %v1061
        %v1126 = vmul.f32 %v1062, %v1062
        %v1127 = vmul.f32 %v1063, %v1063
        %v1128 = vmul.f32 %v1064, %v1064
        %v1129 = vmul.f32 %v1065, %v1065
        %v1130 = vmul.f32 %v1066, %v1066
        %v1131 = vmul.f32 %v1067, %v1067
        %v1132 = vmul.f32 %v1068, %v1068
        %v1133 = vmul.f32 %v1069, %v1069
        %v1134 = vmul.f32 %v1070, %v1070
        %v1135 = vmul.f32 %v1071, %v1071
        %v1136 = vmul.f32 %v1072, %v1072
        %v1137 = vmul.f32 %v1073, %v1073
        %v1138 = vmul.f32 %v1074, %v1074
        %v1139 = vmul.f32 %v1075, %v1075
        %v1140 = vmul.f32 %v1076, %v1076
        %v1141 = vmul.f32 %v1077, %v1077
        %v1142 = vmul.f32 %v1078, %v1078
        %v1143 = vmul.f32 %v1079, %v1079
        %v1144 = vmul.f32 %v1080, %v1080
        %v1145 = vmul.f32 %v1081, %v1081
        %v1146 = vmul.f32 %v1082, %v1082
        %v1147 = vmul.f32 %v1083, %v1083
        %v1148 = vmul.f32 %v1084, %v1084
        %v1149 = vmul.f32 %v1085, %v1085
        %v1150 = vmul.f32 %v1086, %v1086
        %v1151 = vmul.f32 %v1087, %v1087
        %v1152 = vsub.f32 0.0, %v1120
        %v1153 = vsub.f32 0.0, %v1121
        %v1154 = vsub.f32 0.0, %v1122
        %v1155 = vsub.f32 0.0, %v1123
        %v1156 = vsub.f32 0.0, %v1124
        %v1157 = vsub.f32 0.0, %v1125
        %v1158 = vsub.f32 0.0, %v1126
        %v1159 = vsub.f32 0.0, %v1127
        %v1160 = vsub.f32 0.0, %v1128
        %v1161 = vsub.f32 0.0, %v1129
        %v1162 = vsub.f32 0.0, %v1130
        %v1163 = vsub.f32 0.0, %v1131
        %v1164 = vsub.f32 0.0, %v1132
        %v1165 = vsub.f32 0.0, %v1133
        %v1166 = vsub.f32 0.0, %v1134
        %v1167 = vsub.f32 0.0, %v1135
        %v1168 = vsub.f32 0.0, %v1136
        %v1169 = vsub.f32 0.0, %v1137
        %v1170 = vsub.f32 0.0, %v1138
        %v1171 = vsub.f32 0.0, %v1139
        %v1172 = vsub.f32 0.0, %v1140
        %v1173 = vsub.f32 0.0, %v1141
        %v1174 = vsub.f32 0.0, %v1142
        %v1175 = vsub.f32 0.0, %v1143
        %v1176 = vsub.f32 0.0, %v1144
        %v1177 = vsub.f32 0.0, %v1145
        %v1178 = vsub.f32 0.0, %v1146
        %v1179 = vsub.f32 0.0, %v1147
        %v1180 = vsub.f32 0.0, %v1148
        %v1181 = vsub.f32 0.0, %v1149
        %v1182 = vsub.f32 0.0, %v1150
        %v1183 = vsub.f32 0.0, %v1151
        %v1184 = vmul.f32 %v1088, %v1088
        %v1185 = vmul.f32 %v1089, %v1089
        %v1186 = vmul.f32 %v1090, %v1090
        %v1187 = vmul.f32 %v1091, %v1091
        %v1188 = vmul.f32 %v1092, %v1092
        %v1189 = vmul.f32 %v1093, %v1093
        %v1190 = vmul.f32 %v1094, %v1094
        %v1191 = vmul.f32 %v1095, %v1095
        %v1192 = vmul.f32 %v1096, %v1096
        %v1193 = vmul.f32 %v1097, %v1097
        %v1194 = vmul.f32 %v1098, %v1098
        %v1195 = vmul.f32 %v1099, %v1099
        %v1196 = vmul.f32 %v1100, %v1100
        %v1197 = vmul.f32 %v1101, %v1101
        %v1198 = vmul.f32 %v1102, %v1102
        %v1199 = vmul.f32 %v1103, %v1103
        %v1200 = vmul.f32 %v1104, %v1104
        %v1201 = vmul.f32 %v1105, %v1105
        %v1202 = vmul.f32 %v1106, %v1106
        %v1203 = vmul.f32 %v1107, %v1107
        %v1204 = vmul.f32 %v1108, %v1108
        %v1205 = vmul.f32 %v1109, %v1109
        %v1206 = vmul.f32 %v1110, %v1110
        %v1207 = vmul.f32 %v1111, %v1111
        %v1208 = vmul.f32 %v1112, %v1112
        %v1209 = vmul.f32 %v1113, %v1113
        %v1210 = vmul.f32 %v1114, %v1114
        %v1211 = vmul.f32 %v1115, %v1115
        %v1212 = vmul.f32 %v1116, %v1116
        %v1213 = vmul.f32 %v1117, %v1117
        %v1214 = vmul.f32 %v1118, %v1118
        %v1215 = vmul.f32 %v1119, %v1119
        %v1216 = vsub.f32 0.0, %v1184
        %v1217 = vsub.f32 0.0, %v1185
        %v1218 = vsub.f32 0.0, %v1186
        %v1219 = vsub.f32 0.0, %v1187
        %v1220 = vsub.f32 0.0, %v1188
        %v1221 = vsub.f32 0.0, %v1189
        %v1222 = vsub.f32 0.0, %v1190
        %v1223 = vsub.f32 0.0, %v1191
        %v1224 = vsub.f32 0.0, %v1192
        %v1225 = vsub.f32 0.0, %v1193
        %v1226 = vsub.f32 0.0, %v1194
        %v1227 = vsub.f32 0.0, %v1195
        %v1228 = vsub.f32 0.0, %v1196
        %v1229 = vsub.f32 0.0, %v1197
        %v1230 = vsub.f32 0.0, %v1198
        %v1231 = vsub.f32 0.0, %v1199
        %v1232 = vsub.f32 0.0, %v1200
        %v1233 = vsub.f32 0.0, %v1201
        %v1234 = vsub.f32 0.0, %v1202
        %v1235 = vsub.f32 0.0, %v1203
        %v1236 = vsub.f32 0.0, %v1204
        %v1237 = vsub.f32 0.0, %v1205
        %v1238 = vsub.f32 0.0, %v1206
        %v1239 = vsub.f32 0.0, %v1207
        %v1240 = vsub.f32 0.0, %v1208
        %v1241 = vsub.f32 0.0, %v1209
        %v1242 = vsub.f32 0.0, %v1210
        %v1243 = vsub.f32 0.0, %v1211
        %v1244 = vsub.f32 0.0, %v1212
        %v1245 = vsub.f32 0.0, %v1213
        %v1246 = vsub.f32 0.0, %v1214
        %v1247 = vsub.f32 0.0, %v1215
        %v1248 = vand.u32 2147483647, %v320
        %v1249 = vand.u32 2147483647, %v321
        %v1250 = vand.u32 2147483647, %v322
        %v1251 = vand.u32 2147483647, %v323
        %v1252 = vand.u32 2147483647, %v324
        %v1253 = vand.u32 2147483647, %v325
        %v1254 = vand.u32 2147483647, %v326
        %v1255 = vand.u32 2147483647, %v327
        %v1256 = vand.u32 2147483647, %v328
        %v1257 = vand.u32 2147483647, %v329
        %v1258 = vand.u32 2147483647, %v330
        %v1259 = vand.u32 2147483647, %v331
        %v1260 = vand.u32 2147483647, %v332
        %v1261 = vand.u32 2147483647, %v333
        %v1262 = vand.u32 2147483647, %v334
        %v1263 = vand.u32 2147483647, %v335
        %v1264 = vand.u32 2147483647, %v336
        %v1265 = vand.u32 2147483647, %v337
        %v1266 = vand.u32 2147483647, %v338
        %v1267 = vand.u32 2147483647, %v339
        %v1268 = vand.u32 2147483647, %v340
        %v1269 = vand.u32 2147483647, %v341
        %v1270 = vand.u32 2147483647, %v342
        %v1271 = vand.u32 2147483647, %v343
        %v1272 = vand.u32 2147483647, %v344
        %v1273 = vand.u32 2147483647, %v345
        %v1274 = vand.u32 2147483647, %v346
        %v1275 = vand.u32 2147483647, %v347
        %v1276 = vand.u32 2147483647, %v348
        %v1277 = vand.u32 2147483647, %v349
        %v1278 = vand.u32 2147483647, %v350
        %v1279 = vand.u32 2147483647, %v351
        %v1280 = vsub.f32 0.0, %v1248
        %v1281 = vsub.f32 0.0, %v1249
        %v1282 = vsub.f32 0.0, %v1250
        %v1283 = vsub.f32 0.0, %v1251
        %v1284 = vsub.f32 0.0, %v1252
        %v1285 = vsub.f32 0.0, %v1253
        %v1286 = vsub.f32 0.0, %v1254
        %v1287 = vsub.f32 0.0, %v1255
        %v1288 = vsub.f32 0.0, %v1256
        %v1289 = vsub.f32 0.0, %v1257
        %v1290 = vsub.f32 0.0, %v1258
        %v1291 = vsub.f32 0.0, %v1259
        %v1292 = vsub.f32 0.0, %v1260
        %v1293 = vsub.f32 0.0, %v1261
        %v1294 = vsub.f32 0.0, %v1262
        %v1295 = vsub.f32 0.0, %v1263
        %v1296 = vsub.f32 0.0, %v1264
        %v1297 = vsub.f32 0.0, %v1265
        %v1298 = vsub.f32 0.0, %v1266
        %v1299 = vsub.f32 0.0, %v1267
        %v1300 = vsub.f32 0.0, %v1268
        %v1301 = vsub.f32 0.0, %v1269
        %v1302 = vsub.f32 0.0, %v1270
        %v1303 = vsub.f32 0.0, %v1271
        %v1304 = vsub.f32 0.0, %v1272
        %v1305 = vsub.f32 0.0, %v1273
        %v1306 = vsub.f32 0.0, %v1274
        %v1307 = vsub.f32 0.0, %v1275
        %v1308 = vsub.f32 0.0, %v1276
        %v1309 = vsub.f32 0.0, %v1277
        %v1310 = vsub.f32 0.0, %v1278
        %v1311 = vsub.f32 0.0, %v1279
        %v1312 = vmul.f32 %v1280, 1.442695
        %v1313 = vpow.pop %v1312
        %v1314 = vmul.f32 %v1281, 1.442695
        %v1315 = vpow.pop %v1314
        %v1316 = vmul.f32 %v1282, 1.442695
        %v1317 = vpow.pop %v1316
        %v1318 = vmul.f32 %v1283, 1.442695
        %v1319 = vpow.pop %v1318
        %v1320 = vmul.f32 %v1284, 1.442695
        %v1321 = vpow.pop %v1320
        %v1322 = vmul.f32 %v1285, 1.442695
        %v1323 = vpow.pop %v1322
        %v1324 = vmul.f32 %v1286, 1.442695
        %v1325 = vpow.pop %v1324
        %v1326 = vmul.f32 %v1287, 1.442695
        %v1327 = vpow.pop %v1326
        %v1328 = vmul.f32 %v1288, 1.442695
        %v1329 = vpow.pop %v1328
        %v1330 = vmul.f32 %v1289, 1.442695
        %v1331 = vpow.pop %v1330
        %v1332 = vmul.f32 %v1290, 1.442695
        %v1333 = vpow.pop %v1332
        %v1334 = vmul.f32 %v1291, 1.442695
        %v1335 = vpow.pop %v1334
        %v1336 = vmul.f32 %v1292, 1.442695
        %v1337 = vpow.pop %v1336
        %v1338 = vmul.f32 %v1293, 1.442695
        %v1339 = vpow.pop %v1338
        %v1340 = vmul.f32 %v1294, 1.442695
        %v1341 = vpow.pop %v1340
        %v1342 = vmul.f32 %v1295, 1.442695
        %v1343 = vpow.pop %v1342
        %v1344 = vmul.f32 %v1296, 1.442695
        %v1345 = vpow.pop %v1344
        %v1346 = vmul.f32 %v1297, 1.442695
        %v1347 = vpow.pop %v1346
        %v1348 = vmul.f32 %v1298, 1.442695
        %v1349 = vpow.pop %v1348
        %v1350 = vmul.f32 %v1299, 1.442695
        %v1351 = vpow.pop %v1350
        %v1352 = vmul.f32 %v1300, 1.442695
        %v1353 = vpow.pop %v1352
        %v1354 = vmul.f32 %v1301, 1.442695
        %v1355 = vpow.pop %v1354
        %v1356 = vmul.f32 %v1302, 1.442695
        %v1357 = vpow.pop %v1356
        %v1358 = vmul.f32 %v1303, 1.442695
        %v1359 = vpow.pop %v1358
        %v1360 = vmul.f32 %v1304, 1.442695
        %v1361 = vpow.pop %v1360
        %v1362 = vmul.f32 %v1305, 1.442695
        %v1363 = vpow.pop %v1362
        %v1364 = vmul.f32 %v1306, 1.442695
        %v1365 = vpow.pop %v1364
        %v1366 = vmul.f32 %v1307, 1.442695
        %v1367 = vpow.pop %v1366
        %v1368 = vmul.f32 %v1308, 1.442695
        %v1369 = vpow.pop %v1368
        %v1370 = vmul.f32 %v1309, 1.442695
        %v1371 = vpow.pop %v1370
        %v1372 = vmul.f32 %v1310, 1.442695
        %v1373 = vpow.pop %v1372
        %v1374 = vmul.f32 %v1311, 1.442695
        %v1375 = vpow.pop %v1374
        %v1376 = vadd.f32 %v1313, 1.0
        %v1377 = vlog2.pop %v1376
        %v1378 = vmul.f32 %v1377, 0.6931472
        %v1379 = vmul.f32 -0.5, %v1313
        %v1380 = vadd.f32 %v1379, 1.0
        %v1381 = vmul.f32 %v1380, %v1313
        %v1382 = vand.u32 2147483647, %v1313
        %vm1383 = vcmp.lt.f32.partialorder %v1382, 0.0004427343
        %v1384 = vsel %vm1383, %v1381, %v1378
        %v1385 = vadd.f32 %v1315, 1.0
        %v1386 = vlog2.pop %v1385
        %v1387 = vmul.f32 %v1386, 0.6931472
        %v1388 = vmul.f32 -0.5, %v1315
        %v1389 = vadd.f32 %v1388, 1.0
        %v1390 = vmul.f32 %v1389, %v1315
        %v1391 = vand.u32 2147483647, %v1315
        %vm1392 = vcmp.lt.f32.partialorder %v1391, 0.0004427343
        %v1393 = vsel %vm1392, %v1390, %v1387
        %v1394 = vadd.f32 %v1317, 1.0
        %v1395 = vlog2.pop %v1394
        %v1396 = vmul.f32 %v1395, 0.6931472
        %v1397 = vmul.f32 -0.5, %v1317
        %v1398 = vadd.f32 %v1397, 1.0
        %v1399 = vmul.f32 %v1398, %v1317
        %v1400 = vand.u32 2147483647, %v1317
        %vm1401 = vcmp.lt.f32.partialorder %v1400, 0.0004427343
        %v1402 = vsel %vm1401, %v1399, %v1396
        %v1403 = vadd.f32 %v1319, 1.0
        %v1404 = vlog2.pop %v1403
        %v1405 = vmul.f32 %v1404, 0.6931472
        %v1406 = vmul.f32 -0.5, %v1319
        %v1407 = vadd.f32 %v1406, 1.0
        %v1408 = vmul.f32 %v1407, %v1319
        %v1409 = vand.u32 2147483647, %v1319
        %vm1410 = vcmp.lt.f32.partialorder %v1409, 0.0004427343
        %v1411 = vsel %vm1410, %v1408, %v1405
        %v1412 = vadd.f32 %v1321, 1.0
        %v1413 = vlog2.pop %v1412
        %v1414 = vmul.f32 %v1413, 0.6931472
        %v1415 = vmul.f32 -0.5, %v1321
        %v1416 = vadd.f32 %v1415, 1.0
        %v1417 = vmul.f32 %v1416, %v1321
        %v1418 = vand.u32 2147483647, %v1321
        %vm1419 = vcmp.lt.f32.partialorder %v1418, 0.0004427343
        %v1420 = vsel %vm1419, %v1417, %v1414
        %v1421 = vadd.f32 %v1323, 1.0
        %v1422 = vlog2.pop %v1421
        %v1423 = vmul.f32 %v1422, 0.6931472
        %v1424 = vmul.f32 -0.5, %v1323
        %v1425 = vadd.f32 %v1424, 1.0
        %v1426 = vmul.f32 %v1425, %v1323
        %v1427 = vand.u32 2147483647, %v1323
        %vm1428 = vcmp.lt.f32.partialorder %v1427, 0.0004427343
        %v1429 = vsel %vm1428, %v1426, %v1423
        %v1430 = vadd.f32 %v1325, 1.0
        %v1431 = vlog2.pop %v1430
        %v1432 = vmul.f32 %v1431, 0.6931472
        %v1433 = vmul.f32 -0.5, %v1325
        %v1434 = vadd.f32 %v1433, 1.0
        %v1435 = vmul.f32 %v1434, %v1325
        %v1436 = vand.u32 2147483647, %v1325
        %vm1437 = vcmp.lt.f32.partialorder %v1436, 0.0004427343
        %v1438 = vsel %vm1437, %v1435, %v1432
        %v1439 = vadd.f32 %v1327, 1.0
        %v1440 = vlog2.pop %v1439
        %v1441 = vmul.f32 %v1440, 0.6931472
        %v1442 = vmul.f32 -0.5, %v1327
        %v1443 = vadd.f32 %v1442, 1.0
        %v1444 = vmul.f32 %v1443, %v1327
        %v1445 = vand.u32 2147483647, %v1327
        %vm1446 = vcmp.lt.f32.partialorder %v1445, 0.0004427343
        %v1447 = vsel %vm1446, %v1444, %v1441
        %v1448 = vadd.f32 %v1329, 1.0
        %v1449 = vlog2.pop %v1448
        %v1450 = vmul.f32 %v1449, 0.6931472
        %v1451 = vmul.f32 -0.5, %v1329
        %v1452 = vadd.f32 %v1451, 1.0
        %v1453 = vmul.f32 %v1452, %v1329
        %v1454 = vand.u32 2147483647, %v1329
        %vm1455 = vcmp.lt.f32.partialorder %v1454, 0.0004427343
        %v1456 = vsel %vm1455, %v1453, %v1450
        %v1457 = vadd.f32 %v1331, 1.0
        %v1458 = vlog2.pop %v1457
        %v1459 = vmul.f32 %v1458, 0.6931472
        %v1460 = vmul.f32 -0.5, %v1331
        %v1461 = vadd.f32 %v1460, 1.0
        %v1462 = vmul.f32 %v1461, %v1331
        %v1463 = vand.u32 2147483647, %v1331
        %vm1464 = vcmp.lt.f32.partialorder %v1463, 0.0004427343
        %v1465 = vsel %vm1464, %v1462, %v1459
        %v1466 = vadd.f32 %v1333, 1.0
        %v1467 = vlog2.pop %v1466
        %v1468 = vmul.f32 %v1467, 0.6931472
        %v1469 = vmul.f32 -0.5, %v1333
        %v1470 = vadd.f32 %v1469, 1.0
        %v1471 = vmul.f32 %v1470, %v1333
        %v1472 = vand.u32 2147483647, %v1333
        %vm1473 = vcmp.lt.f32.partialorder %v1472, 0.0004427343
        %v1474 = vsel %vm1473, %v1471, %v1468
        %v1475 = vadd.f32 %v1335, 1.0
        %v1476 = vlog2.pop %v1475
        %v1477 = vmul.f32 %v1476, 0.6931472
        %v1478 = vmul.f32 -0.5, %v1335
        %v1479 = vadd.f32 %v1478, 1.0
        %v1480 = vmul.f32 %v1479, %v1335
        %v1481 = vand.u32 2147483647, %v1335
        %vm1482 = vcmp.lt.f32.partialorder %v1481, 0.0004427343
        %v1483 = vsel %vm1482, %v1480, %v1477
        %v1484 = vadd.f32 %v1337, 1.0
        %v1485 = vlog2.pop %v1484
        %v1486 = vmul.f32 %v1485, 0.6931472
        %v1487 = vmul.f32 -0.5, %v1337
        %v1488 = vadd.f32 %v1487, 1.0
        %v1489 = vmul.f32 %v1488, %v1337
        %v1490 = vand.u32 2147483647, %v1337
        %vm1491 = vcmp.lt.f32.partialorder %v1490, 0.0004427343
        %v1492 = vsel %vm1491, %v1489, %v1486
        %v1493 = vadd.f32 %v1339, 1.0
        %v1494 = vlog2.pop %v1493
        %v1495 = vmul.f32 %v1494, 0.6931472
        %v1496 = vmul.f32 -0.5, %v1339
        %v1497 = vadd.f32 %v1496, 1.0
        %v1498 = vmul.f32 %v1497, %v1339
        %v1499 = vand.u32 2147483647, %v1339
        %vm1500 = vcmp.lt.f32.partialorder %v1499, 0.0004427343
        %v1501 = vsel %vm1500, %v1498, %v1495
        %v1502 = vadd.f32 %v1341, 1.0
        %v1503 = vlog2.pop %v1502
        %v1504 = vmul.f32 %v1503, 0.6931472
        %v1505 = vmul.f32 -0.5, %v1341
        %v1506 = vadd.f32 %v1505, 1.0
        %v1507 = vmul.f32 %v1506, %v1341
        %v1508 = vand.u32 2147483647, %v1341
        %vm1509 = vcmp.lt.f32.partialorder %v1508, 0.0004427343
        %v1510 = vsel %vm1509, %v1507, %v1504
        %v1511 = vadd.f32 %v1343, 1.0
        %v1512 = vlog2.pop %v1511
        %v1513 = vmul.f32 %v1512, 0.6931472
        %v1514 = vmul.f32 -0.5, %v1343
        %v1515 = vadd.f32 %v1514, 1.0
        %v1516 = vmul.f32 %v1515, %v1343
        %v1517 = vand.u32 2147483647, %v1343
        %vm1518 = vcmp.lt.f32.partialorder %v1517, 0.0004427343
        %v1519 = vsel %vm1518, %v1516, %v1513
        %v1520 = vadd.f32 %v1345, 1.0
        %v1521 = vlog2.pop %v1520
        %v1522 = vmul.f32 %v1521, 0.6931472
        %v1523 = vmul.f32 -0.5, %v1345
        %v1524 = vadd.f32 %v1523, 1.0
        %v1525 = vmul.f32 %v1524, %v1345
        %v1526 = vand.u32 2147483647, %v1345
        %vm1527 = vcmp.lt.f32.partialorder %v1526, 0.0004427343
        %v1528 = vsel %vm1527, %v1525, %v1522
        %v1529 = vadd.f32 %v1347, 1.0
        %v1530 = vlog2.pop %v1529
        %v1531 = vmul.f32 %v1530, 0.6931472
        %v1532 = vmul.f32 -0.5, %v1347
        %v1533 = vadd.f32 %v1532, 1.0
        %v1534 = vmul.f32 %v1533, %v1347
        %v1535 = vand.u32 2147483647, %v1347
        %vm1536 = vcmp.lt.f32.partialorder %v1535, 0.0004427343
        %v1537 = vsel %vm1536, %v1534, %v1531
        %v1538 = vadd.f32 %v1349, 1.0
        %v1539 = vlog2.pop %v1538
        %v1540 = vmul.f32 %v1539, 0.6931472
        %v1541 = vmul.f32 -0.5, %v1349
        %v1542 = vadd.f32 %v1541, 1.0
        %v1543 = vmul.f32 %v1542, %v1349
        %v1544 = vand.u32 2147483647, %v1349
        %vm1545 = vcmp.lt.f32.partialorder %v1544, 0.0004427343
        %v1546 = vsel %vm1545, %v1543, %v1540
        %v1547 = vadd.f32 %v1351, 1.0
        %v1548 = vlog2.pop %v1547
        %v1549 = vmul.f32 %v1548, 0.6931472
        %v1550 = vmul.f32 -0.5, %v1351
        %v1551 = vadd.f32 %v1550, 1.0
        %v1552 = vmul.f32 %v1551, %v1351
        %v1553 = vand.u32 2147483647, %v1351
        %vm1554 = vcmp.lt.f32.partialorder %v1553, 0.0004427343
        %v1555 = vsel %vm1554, %v1552, %v1549
        %v1556 = vadd.f32 %v1353, 1.0
        %v1557 = vlog2.pop %v1556
        %v1558 = vmul.f32 %v1557, 0.6931472
        %v1559 = vmul.f32 -0.5, %v1353
        %v1560 = vadd.f32 %v1559, 1.0
        %v1561 = vmul.f32 %v1560, %v1353
        %v1562 = vand.u32 2147483647, %v1353
        %vm1563 = vcmp.lt.f32.partialorder %v1562, 0.0004427343
        %v1564 = vsel %vm1563, %v1561, %v1558
        %v1565 = vadd.f32 %v1355, 1.0
        %v1566 = vlog2.pop %v1565
        %v1567 = vmul.f32 %v1566, 0.6931472
        %v1568 = vmul.f32 -0.5, %v1355
        %v1569 = vadd.f32 %v1568, 1.0
        %v1570 = vmul.f32 %v1569, %v1355
        %v1571 = vand.u32 2147483647, %v1355
        %vm1572 = vcmp.lt.f32.partialorder %v1571, 0.0004427343
        %v1573 = vsel %vm1572, %v1570, %v1567
        %v1574 = vadd.f32 %v1357, 1.0
        %v1575 = vlog2.pop %v1574
        %v1576 = vmul.f32 %v1575, 0.6931472
        %v1577 = vmul.f32 -0.5, %v1357
        %v1578 = vadd.f32 %v1577, 1.0
        %v1579 = vmul.f32 %v1578, %v1357
        %v1580 = vand.u32 2147483647, %v1357
        %vm1581 = vcmp.lt.f32.partialorder %v1580, 0.0004427343
        %v1582 = vsel %vm1581, %v1579, %v1576
        %v1583 = vadd.f32 %v1359, 1.0
        %v1584 = vlog2.pop %v1583
        %v1585 = vmul.f32 %v1584, 0.6931472
        %v1586 = vmul.f32 -0.5, %v1359
        %v1587 = vadd.f32 %v1586, 1.0
        %v1588 = vmul.f32 %v1587, %v1359
        %v1589 = vand.u32 2147483647, %v1359
        %vm1590 = vcmp.lt.f32.partialorder %v1589, 0.0004427343
        %v1591 = vsel %vm1590, %v1588, %v1585
        %v1592 = vadd.f32 %v1361, 1.0
        %v1593 = vlog2.pop %v1592
        %v1594 = vmul.f32 %v1593, 0.6931472
        %v1595 = vmul.f32 -0.5, %v1361
        %v1596 = vadd.f32 %v1595, 1.0
        %v1597 = vmul.f32 %v1596, %v1361
        %v1598 = vand.u32 2147483647, %v1361
        %vm1599 = vcmp.lt.f32.partialorder %v1598, 0.0004427343
        %v1600 = vsel %vm1599, %v1597, %v1594
        %v1601 = vadd.f32 %v1363, 1.0
        %v1602 = vlog2.pop %v1601
        %v1603 = vmul.f32 %v1602, 0.6931472
        %v1604 = vmul.f32 -0.5, %v1363
        %v1605 = vadd.f32 %v1604, 1.0
        %v1606 = vmul.f32 %v1605, %v1363
        %v1607 = vand.u32 2147483647, %v1363
        %vm1608 = vcmp.lt.f32.partialorder %v1607, 0.0004427343
        %v1609 = vsel %vm1608, %v1606, %v1603
        %v1610 = vadd.f32 %v1365, 1.0
        %v1611 = vlog2.pop %v1610
        %v1612 = vmul.f32 %v1611, 0.6931472
        %v1613 = vmul.f32 -0.5, %v1365
        %v1614 = vadd.f32 %v1613, 1.0
        %v1615 = vmul.f32 %v1614, %v1365
        %v1616 = vand.u32 2147483647, %v1365
        %vm1617 = vcmp.lt.f32.partialorder %v1616, 0.0004427343
        %v1618 = vsel %vm1617, %v1615, %v1612
        %v1619 = vadd.f32 %v1367, 1.0
        %v1620 = vlog2.pop %v1619
        %v1621 = vmul.f32 %v1620, 0.6931472
        %v1622 = vmul.f32 -0.5, %v1367
        %v1623 = vadd.f32 %v1622, 1.0
        %v1624 = vmul.f32 %v1623, %v1367
        %v1625 = vand.u32 2147483647, %v1367
        %vm1626 = vcmp.lt.f32.partialorder %v1625, 0.0004427343
        %v1627 = vsel %vm1626, %v1624, %v1621
        %v1628 = vadd.f32 %v1369, 1.0
        %v1629 = vlog2.pop %v1628
        %v1630 = vmul.f32 %v1629, 0.6931472
        %v1631 = vmul.f32 -0.5, %v1369
        %v1632 = vadd.f32 %v1631, 1.0
        %v1633 = vmul.f32 %v1632, %v1369
        %v1634 = vand.u32 2147483647, %v1369
        %vm1635 = vcmp.lt.f32.partialorder %v1634, 0.0004427343
        %v1636 = vsel %vm1635, %v1633, %v1630
        %v1637 = vadd.f32 %v1371, 1.0
        %v1638 = vlog2.pop %v1637
        %v1639 = vmul.f32 %v1638, 0.6931472
        %v1640 = vmul.f32 -0.5, %v1371
        %v1641 = vadd.f32 %v1640, 1.0
        %v1642 = vmul.f32 %v1641, %v1371
        %v1643 = vand.u32 2147483647, %v1371
        %vm1644 = vcmp.lt.f32.partialorder %v1643, 0.0004427343
        %v1645 = vsel %vm1644, %v1642, %v1639
        %v1646 = vadd.f32 %v1373, 1.0
        %v1647 = vlog2.pop %v1646
        %v1648 = vmul.f32 %v1647, 0.6931472
        %v1649 = vmul.f32 -0.5, %v1373
        %v1650 = vadd.f32 %v1649, 1.0
        %v1651 = vmul.f32 %v1650, %v1373
        %v1652 = vand.u32 2147483647, %v1373
        %vm1653 = vcmp.lt.f32.partialorder %v1652, 0.0004427343
        %v1654 = vsel %vm1653, %v1651, %v1648
        %v1655 = vadd.f32 %v1375, 1.0
        %v1656 = vlog2.pop %v1655
        %v1657 = vmul.f32 %v1656, 0.6931472
        %v1658 = vmul.f32 -0.5, %v1375
        %v1659 = vadd.f32 %v1658, 1.0
        %v1660 = vmul.f32 %v1659, %v1375
        %v1661 = vand.u32 2147483647, %v1375
        %vm1662 = vcmp.lt.f32.partialorder %v1661, 0.0004427343
        %v1663 = vsel %vm1662, %v1660, %v1657
        %v1664 = vmin.f32 %v320, 0.0
        %v1665 = vmin.f32 %v321, 0.0
        %v1666 = vmin.f32 %v322, 0.0
        %v1667 = vmin.f32 %v323, 0.0
        %v1668 = vmin.f32 %v324, 0.0
        %v1669 = vmin.f32 %v325, 0.0
        %v1670 = vmin.f32 %v326, 0.0
        %v1671 = vmin.f32 %v327, 0.0
        %v1672 = vmin.f32 %v328, 0.0
        %v1673 = vmin.f32 %v329, 0.0
        %v1674 = vmin.f32 %v330, 0.0
        %v1675 = vmin.f32 %v331, 0.0
        %v1676 = vmin.f32 %v332, 0.0
        %v1677 = vmin.f32 %v333, 0.0
        %v1678 = vmin.f32 %v334, 0.0
        %v1679 = vmin.f32 %v335, 0.0
        %v1680 = vmin.f32 %v336, 0.0
        %v1681 = vmin.f32 %v337, 0.0
        %v1682 = vmin.f32 %v338, 0.0
        %v1683 = vmin.f32 %v339, 0.0
        %v1684 = vmin.f32 %v340, 0.0
        %v1685 = vmin.f32 %v341, 0.0
        %v1686 = vmin.f32 %v342, 0.0
        %v1687 = vmin.f32 %v343, 0.0
        %v1688 = vmin.f32 %v344, 0.0
        %v1689 = vmin.f32 %v345, 0.0
        %v1690 = vmin.f32 %v346, 0.0
        %v1691 = vmin.f32 %v347, 0.0
        %v1692 = vmin.f32 %v348, 0.0
        %v1693 = vmin.f32 %v349, 0.0
        %v1694 = vmin.f32 %v350, 0.0
        %v1695 = vmin.f32 %v351, 0.0
        %v1696 = vsub.f32 %v1664, %v1384
        %v1697 = vsub.f32 %v1665, %v1393
        %v1698 = vsub.f32 %v1666, %v1402
        %v1699 = vsub.f32 %v1667, %v1411
        %v1700 = vsub.f32 %v1668, %v1420
        %v1701 = vsub.f32 %v1669, %v1429
        %v1702 = vsub.f32 %v1670, %v1438
        %v1703 = vsub.f32 %v1671, %v1447
        %v1704 = vsub.f32 %v1672, %v1456
        %v1705 = vsub.f32 %v1673, %v1465
        %v1706 = vsub.f32 %v1674, %v1474
        %v1707 = vsub.f32 %v1675, %v1483
        %v1708 = vsub.f32 %v1676, %v1492
        %v1709 = vsub.f32 %v1677, %v1501
        %v1710 = vsub.f32 %v1678, %v1510
        %v1711 = vsub.f32 %v1679, %v1519
        %v1712 = vsub.f32 %v1680, %v1528
        %v1713 = vsub.f32 %v1681, %v1537
        %v1714 = vsub.f32 %v1682, %v1546
        %v1715 = vsub.f32 %v1683, %v1555
        %v1716 = vsub.f32 %v1684, %v1564
        %v1717 = vsub.f32 %v1685, %v1573
        %v1718 = vsub.f32 %v1686, %v1582
        %v1719 = vsub.f32 %v1687, %v1591
        %v1720 = vsub.f32 %v1688, %v1600
        %v1721 = vsub.f32 %v1689, %v1609
        %v1722 = vsub.f32 %v1690, %v1618
        %v1723 = vsub.f32 %v1691, %v1627
        %v1724 = vsub.f32 %v1692, %v1636
        %v1725 = vsub.f32 %v1693, %v1645
        %v1726 = vsub.f32 %v1694, %v1654
        %v1727 = vsub.f32 %v1695, %v1663
        %v1728 = vsub.f32 0.0, %v320
        %v1729 = vsub.f32 0.0, %v321
        %v1730 = vsub.f32 0.0, %v322
        %v1731 = vsub.f32 0.0, %v323
        %v1732 = vsub.f32 0.0, %v324
        %v1733 = vsub.f32 0.0, %v325
        %v1734 = vsub.f32 0.0, %v326
        %v1735 = vsub.f32 0.0, %v327
        %v1736 = vsub.f32 0.0, %v328
        %v1737 = vsub.f32 0.0, %v329
        %v1738 = vsub.f32 0.0, %v330
        %v1739 = vsub.f32 0.0, %v331
        %v1740 = vsub.f32 0.0, %v332
        %v1741 = vsub.f32 0.0, %v333
        %v1742 = vsub.f32 0.0, %v334
        %v1743 = vsub.f32 0.0, %v335
        %v1744 = vsub.f32 0.0, %v336
        %v1745 = vsub.f32 0.0, %v337
        %v1746 = vsub.f32 0.0, %v338
        %v1747 = vsub.f32 0.0, %v339
        %v1748 = vsub.f32 0.0, %v340
        %v1749 = vsub.f32 0.0, %v341
        %v1750 = vsub.f32 0.0, %v342
        %v1751 = vsub.f32 0.0, %v343
        %v1752 = vsub.f32 0.0, %v344
        %v1753 = vsub.f32 0.0, %v345
        %v1754 = vsub.f32 0.0, %v346
        %v1755 = vsub.f32 0.0, %v347
        %v1756 = vsub.f32 0.0, %v348
        %v1757 = vsub.f32 0.0, %v349
        %v1758 = vsub.f32 0.0, %v350
        %v1759 = vsub.f32 0.0, %v351
        %v1760 = vmin.f32 %v1728, 0.0
        %v1761 = vmin.f32 %v1729, 0.0
        %v1762 = vmin.f32 %v1730, 0.0
        %v1763 = vmin.f32 %v1731, 0.0
        %v1764 = vmin.f32 %v1732, 0.0
        %v1765 = vmin.f32 %v1733, 0.0
        %v1766 = vmin.f32 %v1734, 0.0
        %v1767 = vmin.f32 %v1735, 0.0
        %v1768 = vmin.f32 %v1736, 0.0
        %v1769 = vmin.f32 %v1737, 0.0
        %v1770 = vmin.f32 %v1738, 0.0
        %v1771 = vmin.f32 %v1739, 0.0
        %v1772 = vmin.f32 %v1740, 0.0
        %v1773 = vmin.f32 %v1741, 0.0
        %v1774 = vmin.f32 %v1742, 0.0
        %v1775 = vmin.f32 %v1743, 0.0
        %v1776 = vmin.f32 %v1744, 0.0
        %v1777 = vmin.f32 %v1745, 0.0
        %v1778 = vmin.f32 %v1746, 0.0
        %v1779 = vmin.f32 %v1747, 0.0
        %v1780 = vmin.f32 %v1748, 0.0
        %v1781 = vmin.f32 %v1749, 0.0
        %v1782 = vmin.f32 %v1750, 0.0
        %v1783 = vmin.f32 %v1751, 0.0
        %v1784 = vmin.f32 %v1752, 0.0
        %v1785 = vmin.f32 %v1753, 0.0
        %v1786 = vmin.f32 %v1754, 0.0
        %v1787 = vmin.f32 %v1755, 0.0
        %v1788 = vmin.f32 %v1756, 0.0
        %v1789 = vmin.f32 %v1757, 0.0
        %v1790 = vmin.f32 %v1758, 0.0
        %v1791 = vmin.f32 %v1759, 0.0
        %v1792 = vsub.f32 %v1760, %v1384
        %v1793 = vsub.f32 %v1761, %v1393
        %v1794 = vsub.f32 %v1762, %v1402
        %v1795 = vsub.f32 %v1763, %v1411
        %v1796 = vsub.f32 %v1764, %v1420
        %v1797 = vsub.f32 %v1765, %v1429
        %v1798 = vsub.f32 %v1766, %v1438
        %v1799 = vsub.f32 %v1767, %v1447
        %v1800 = vsub.f32 %v1768, %v1456
        %v1801 = vsub.f32 %v1769, %v1465
        %v1802 = vsub.f32 %v1770, %v1474
        %v1803 = vsub.f32 %v1771, %v1483
        %v1804 = vsub.f32 %v1772, %v1492
        %v1805 = vsub.f32 %v1773, %v1501
        %v1806 = vsub.f32 %v1774, %v1510
        %v1807 = vsub.f32 %v1775, %v1519
        %v1808 = vsub.f32 %v1776, %v1528
        %v1809 = vsub.f32 %v1777, %v1537
        %v1810 = vsub.f32 %v1778, %v1546
        %v1811 = vsub.f32 %v1779, %v1555
        %v1812 = vsub.f32 %v1780, %v1564
        %v1813 = vsub.f32 %v1781, %v1573
        %v1814 = vsub.f32 %v1782, %v1582
        %v1815 = vsub.f32 %v1783, %v1591
        %v1816 = vsub.f32 %v1784, %v1600
        %v1817 = vsub.f32 %v1785, %v1609
        %v1818 = vsub.f32 %v1786, %v1618
        %v1819 = vsub.f32 %v1787, %v1627
        %v1820 = vsub.f32 %v1788, %v1636
        %v1821 = vsub.f32 %v1789, %v1645
        %v1822 = vsub.f32 %v1790, %v1654
        %v1823 = vsub.f32 %v1791, %v1663
        %v1824 = vand.u32 2147483647, %v352
        %v1825 = vand.u32 2147483647, %v353
        %v1826 = vand.u32 2147483647, %v354
        %v1827 = vand.u32 2147483647, %v355
        %v1828 = vand.u32 2147483647, %v356
        %v1829 = vand.u32 2147483647, %v357
        %v1830 = vand.u32 2147483647, %v358
        %v1831 = vand.u32 2147483647, %v359
        %v1832 = vand.u32 2147483647, %v360
        %v1833 = vand.u32 2147483647, %v361
        %v1834 = vand.u32 2147483647, %v362
        %v1835 = vand.u32 2147483647, %v363
        %v1836 = vand.u32 2147483647, %v364
        %v1837 = vand.u32 2147483647, %v365
        %v1838 = vand.u32 2147483647, %v366
        %v1839 = vand.u32 2147483647, %v367
        %v1840 = vand.u32 2147483647, %v368
        %v1841 = vand.u32 2147483647, %v369
        %v1842 = vand.u32 2147483647, %v370
        %v1843 = vand.u32 2147483647, %v371
        %v1844 = vand.u32 2147483647, %v372
        %v1845 = vand.u32 2147483647, %v373
        %v1846 = vand.u32 2147483647, %v374
        %v1847 = vand.u32 2147483647, %v375
        %v1848 = vand.u32 2147483647, %v376
        %v1849 = vand.u32 2147483647, %v377
        %v1850 = vand.u32 2147483647, %v378
        %v1851 = vand.u32 2147483647, %v379
        %v1852 = vand.u32 2147483647, %v380
        %v1853 = vand.u32 2147483647, %v381
        %v1854 = vand.u32 2147483647, %v382
        %v1855 = vand.u32 2147483647, %v383
        %v1856 = vsub.f32 0.0, %v1824
        %v1857 = vsub.f32 0.0, %v1825
        %v1858 = vsub.f32 0.0, %v1826
        %v1859 = vsub.f32 0.0, %v1827
        %v1860 = vsub.f32 0.0, %v1828
        %v1861 = vsub.f32 0.0, %v1829
        %v1862 = vsub.f32 0.0, %v1830
        %v1863 = vsub.f32 0.0, %v1831
        %v1864 = vsub.f32 0.0, %v1832
        %v1865 = vsub.f32 0.0, %v1833
        %v1866 = vsub.f32 0.0, %v1834
        %v1867 = vsub.f32 0.0, %v1835
        %v1868 = vsub.f32 0.0, %v1836
        %v1869 = vsub.f32 0.0, %v1837
        %v1870 = vsub.f32 0.0, %v1838
        %v1871 = vsub.f32 0.0, %v1839
        %v1872 = vsub.f32 0.0, %v1840
        %v1873 = vsub.f32 0.0, %v1841
        %v1874 = vsub.f32 0.0, %v1842
        %v1875 = vsub.f32 0.0, %v1843
        %v1876 = vsub.f32 0.0, %v1844
        %v1877 = vsub.f32 0.0, %v1845
        %v1878 = vsub.f32 0.0, %v1846
        %v1879 = vsub.f32 0.0, %v1847
        %v1880 = vsub.f32 0.0, %v1848
        %v1881 = vsub.f32 0.0, %v1849
        %v1882 = vsub.f32 0.0, %v1850
        %v1883 = vsub.f32 0.0, %v1851
        %v1884 = vsub.f32 0.0, %v1852
        %v1885 = vsub.f32 0.0, %v1853
        %v1886 = vsub.f32 0.0, %v1854
        %v1887 = vsub.f32 0.0, %v1855
        %v1888 = vmul.f32 %v1856, 1.442695
        %v1889 = vpow.pop %v1888
        %v1890 = vmul.f32 %v1857, 1.442695
        %v1891 = vpow.pop %v1890
        %v1892 = vmul.f32 %v1858, 1.442695
        %v1893 = vpow.pop %v1892
        %v1894 = vmul.f32 %v1859, 1.442695
        %v1895 = vpow.pop %v1894
        %v1896 = vmul.f32 %v1860, 1.442695
        %v1897 = vpow.pop %v1896
        %v1898 = vmul.f32 %v1861, 1.442695
        %v1899 = vpow.pop %v1898
        %v1900 = vmul.f32 %v1862, 1.442695
        %v1901 = vpow.pop %v1900
        %v1902 = vmul.f32 %v1863, 1.442695
        %v1903 = vpow.pop %v1902
        %v1904 = vmul.f32 %v1864, 1.442695
        %v1905 = vpow.pop %v1904
        %v1906 = vmul.f32 %v1865, 1.442695
        %v1907 = vpow.pop %v1906
        %v1908 = vmul.f32 %v1866, 1.442695
        %v1909 = vpow.pop %v1908
        %v1910 = vmul.f32 %v1867, 1.442695
        %v1911 = vpow.pop %v1910
        %v1912 = vmul.f32 %v1868, 1.442695
        %v1913 = vpow.pop %v1912
        %v1914 = vmul.f32 %v1869, 1.442695
        %v1915 = vpow.pop %v1914
        %v1916 = vmul.f32 %v1870, 1.442695
        %v1917 = vpow.pop %v1916
        %v1918 = vmul.f32 %v1871, 1.442695
        %v1919 = vpow.pop %v1918
        %v1920 = vmul.f32 %v1872, 1.442695
        %v1921 = vpow.pop %v1920
        %v1922 = vmul.f32 %v1873, 1.442695
        %v1923 = vpow.pop %v1922
        %v1924 = vmul.f32 %v1874, 1.442695
        %v1925 = vpow.pop %v1924
        %v1926 = vmul.f32 %v1875, 1.442695
        %v1927 = vpow.pop %v1926
        %v1928 = vmul.f32 %v1876, 1.442695
        %v1929 = vpow.pop %v1928
        %v1930 = vmul.f32 %v1877, 1.442695
        %v1931 = vpow.pop %v1930
        %v1932 = vmul.f32 %v1878, 1.442695
        %v1933 = vpow.pop %v1932
        %v1934 = vmul.f32 %v1879, 1.442695
        %v1935 = vpow.pop %v1934
        %v1936 = vmul.f32 %v1880, 1.442695
        %v1937 = vpow.pop %v1936
        %v1938 = vmul.f32 %v1881, 1.442695
        %v1939 = vpow.pop %v1938
        %v1940 = vmul.f32 %v1882, 1.442695
        %v1941 = vpow.pop %v1940
        %v1942 = vmul.f32 %v1883, 1.442695
        %v1943 = vpow.pop %v1942
        %v1944 = vmul.f32 %v1884, 1.442695
        %v1945 = vpow.pop %v1944
        %v1946 = vmul.f32 %v1885, 1.442695
        %v1947 = vpow.pop %v1946
        %v1948 = vmul.f32 %v1886, 1.442695
        %v1949 = vpow.pop %v1948
        %v1950 = vmul.f32 %v1887, 1.442695
        %v1951 = vpow.pop %v1950
        %v1952 = vadd.f32 %v1889, 1.0
        %v1953 = vlog2.pop %v1952
        %v1954 = vmul.f32 %v1953, 0.6931472
        %v1955 = vmul.f32 -0.5, %v1889
        %v1956 = vadd.f32 %v1955, 1.0
        %v1957 = vmul.f32 %v1956, %v1889
        %v1958 = vand.u32 2147483647, %v1889
        %vm1959 = vcmp.lt.f32.partialorder %v1958, 0.0004427343
        %v1960 = vsel %vm1959, %v1957, %v1954
        %v1961 = vadd.f32 %v1891, 1.0
        %v1962 = vlog2.pop %v1961
        %v1963 = vmul.f32 %v1962, 0.6931472
        %v1964 = vmul.f32 -0.5, %v1891
        %v1965 = vadd.f32 %v1964, 1.0
        %v1966 = vmul.f32 %v1965, %v1891
        %v1967 = vand.u32 2147483647, %v1891
        %vm1968 = vcmp.lt.f32.partialorder %v1967, 0.0004427343
        %v1969 = vsel %vm1968, %v1966, %v1963
        %v1970 = vadd.f32 %v1893, 1.0
        %v1971 = vlog2.pop %v1970
        %v1972 = vmul.f32 %v1971, 0.6931472
        %v1973 = vmul.f32 -0.5, %v1893
        %v1974 = vadd.f32 %v1973, 1.0
        %v1975 = vmul.f32 %v1974, %v1893
        %v1976 = vand.u32 2147483647, %v1893
        %vm1977 = vcmp.lt.f32.partialorder %v1976, 0.0004427343
        %v1978 = vsel %vm1977, %v1975, %v1972
        %v1979 = vadd.f32 %v1895, 1.0
        %v1980 = vlog2.pop %v1979
        %v1981 = vmul.f32 %v1980, 0.6931472
        %v1982 = vmul.f32 -0.5, %v1895
        %v1983 = vadd.f32 %v1982, 1.0
        %v1984 = vmul.f32 %v1983, %v1895
        %v1985 = vand.u32 2147483647, %v1895
        %vm1986 = vcmp.lt.f32.partialorder %v1985, 0.0004427343
        %v1987 = vsel %vm1986, %v1984, %v1981
        %v1988 = vadd.f32 %v1897, 1.0
        %v1989 = vlog2.pop %v1988
        %v1990 = vmul.f32 %v1989, 0.6931472
        %v1991 = vmul.f32 -0.5, %v1897
        %v1992 = vadd.f32 %v1991, 1.0
        %v1993 = vmul.f32 %v1992, %v1897
        %v1994 = vand.u32 2147483647, %v1897
        %vm1995 = vcmp.lt.f32.partialorder %v1994, 0.0004427343
        %v1996 = vsel %vm1995, %v1993, %v1990
        %v1997 = vadd.f32 %v1899, 1.0
        %v1998 = vlog2.pop %v1997
        %v1999 = vmul.f32 %v1998, 0.6931472
        %v2000 = vmul.f32 -0.5, %v1899
        %v2001 = vadd.f32 %v2000, 1.0
        %v2002 = vmul.f32 %v2001, %v1899
        %v2003 = vand.u32 2147483647, %v1899
        %vm2004 = vcmp.lt.f32.partialorder %v2003, 0.0004427343
        %v2005 = vsel %vm2004, %v2002, %v1999
        %v2006 = vadd.f32 %v1901, 1.0
        %v2007 = vlog2.pop %v2006
        %v2008 = vmul.f32 %v2007, 0.6931472
        %v2009 = vmul.f32 -0.5, %v1901
        %v2010 = vadd.f32 %v2009, 1.0
        %v2011 = vmul.f32 %v2010, %v1901
        %v2012 = vand.u32 2147483647, %v1901
        %vm2013 = vcmp.lt.f32.partialorder %v2012, 0.0004427343
        %v2014 = vsel %vm2013, %v2011, %v2008
        %v2015 = vadd.f32 %v1903, 1.0
        %v2016 = vlog2.pop %v2015
        %v2017 = vmul.f32 %v2016, 0.6931472
        %v2018 = vmul.f32 -0.5, %v1903
        %v2019 = vadd.f32 %v2018, 1.0
        %v2020 = vmul.f32 %v2019, %v1903
        %v2021 = vand.u32 2147483647, %v1903
        %vm2022 = vcmp.lt.f32.partialorder %v2021, 0.0004427343
        %v2023 = vsel %vm2022, %v2020, %v2017
        %v2024 = vadd.f32 %v1905, 1.0
        %v2025 = vlog2.pop %v2024
        %v2026 = vmul.f32 %v2025, 0.6931472
        %v2027 = vmul.f32 -0.5, %v1905
        %v2028 = vadd.f32 %v2027, 1.0
        %v2029 = vmul.f32 %v2028, %v1905
        %v2030 = vand.u32 2147483647, %v1905
        %vm2031 = vcmp.lt.f32.partialorder %v2030, 0.0004427343
        %v2032 = vsel %vm2031, %v2029, %v2026
        %v2033 = vadd.f32 %v1907, 1.0
        %v2034 = vlog2.pop %v2033
        %v2035 = vmul.f32 %v2034, 0.6931472
        %v2036 = vmul.f32 -0.5, %v1907
        %v2037 = vadd.f32 %v2036, 1.0
        %v2038 = vmul.f32 %v2037, %v1907
        %v2039 = vand.u32 2147483647, %v1907
        %vm2040 = vcmp.lt.f32.partialorder %v2039, 0.0004427343
        %v2041 = vsel %vm2040, %v2038, %v2035
        %v2042 = vadd.f32 %v1909, 1.0
        %v2043 = vlog2.pop %v2042
        %v2044 = vmul.f32 %v2043, 0.6931472
        %v2045 = vmul.f32 -0.5, %v1909
        %v2046 = vadd.f32 %v2045, 1.0
        %v2047 = vmul.f32 %v2046, %v1909
        %v2048 = vand.u32 2147483647, %v1909
        %vm2049 = vcmp.lt.f32.partialorder %v2048, 0.0004427343
        %v2050 = vsel %vm2049, %v2047, %v2044
        %v2051 = vadd.f32 %v1911, 1.0
        %v2052 = vlog2.pop %v2051
        %v2053 = vmul.f32 %v2052, 0.6931472
        %v2054 = vmul.f32 -0.5, %v1911
        %v2055 = vadd.f32 %v2054, 1.0
        %v2056 = vmul.f32 %v2055, %v1911
        %v2057 = vand.u32 2147483647, %v1911
        %vm2058 = vcmp.lt.f32.partialorder %v2057, 0.0004427343
        %v2059 = vsel %vm2058, %v2056, %v2053
        %v2060 = vadd.f32 %v1913, 1.0
        %v2061 = vlog2.pop %v2060
        %v2062 = vmul.f32 %v2061, 0.6931472
        %v2063 = vmul.f32 -0.5, %v1913
        %v2064 = vadd.f32 %v2063, 1.0
        %v2065 = vmul.f32 %v2064, %v1913
        %v2066 = vand.u32 2147483647, %v1913
        %vm2067 = vcmp.lt.f32.partialorder %v2066, 0.0004427343
        %v2068 = vsel %vm2067, %v2065, %v2062
        %v2069 = vadd.f32 %v1915, 1.0
        %v2070 = vlog2.pop %v2069
        %v2071 = vmul.f32 %v2070, 0.6931472
        %v2072 = vmul.f32 -0.5, %v1915
        %v2073 = vadd.f32 %v2072, 1.0
        %v2074 = vmul.f32 %v2073, %v1915
        %v2075 = vand.u32 2147483647, %v1915
        %vm2076 = vcmp.lt.f32.partialorder %v2075, 0.0004427343
        %v2077 = vsel %vm2076, %v2074, %v2071
        %v2078 = vadd.f32 %v1917, 1.0
        %v2079 = vlog2.pop %v2078
        %v2080 = vmul.f32 %v2079, 0.6931472
        %v2081 = vmul.f32 -0.5, %v1917
        %v2082 = vadd.f32 %v2081, 1.0
        %v2083 = vmul.f32 %v2082, %v1917
        %v2084 = vand.u32 2147483647, %v1917
        %vm2085 = vcmp.lt.f32.partialorder %v2084, 0.0004427343
        %v2086 = vsel %vm2085, %v2083, %v2080
        %v2087 = vadd.f32 %v1919, 1.0
        %v2088 = vlog2.pop %v2087
        %v2089 = vmul.f32 %v2088, 0.6931472
        %v2090 = vmul.f32 -0.5, %v1919
        %v2091 = vadd.f32 %v2090, 1.0
        %v2092 = vmul.f32 %v2091, %v1919
        %v2093 = vand.u32 2147483647, %v1919
        %vm2094 = vcmp.lt.f32.partialorder %v2093, 0.0004427343
        %v2095 = vsel %vm2094, %v2092, %v2089
        %v2096 = vadd.f32 %v1921, 1.0
        %v2097 = vlog2.pop %v2096
        %v2098 = vmul.f32 %v2097, 0.6931472
        %v2099 = vmul.f32 -0.5, %v1921
        %v2100 = vadd.f32 %v2099, 1.0
        %v2101 = vmul.f32 %v2100, %v1921
        %v2102 = vand.u32 2147483647, %v1921
        %vm2103 = vcmp.lt.f32.partialorder %v2102, 0.0004427343
        %v2104 = vsel %vm2103, %v2101, %v2098
        %v2105 = vadd.f32 %v1923, 1.0
        %v2106 = vlog2.pop %v2105
        %v2107 = vmul.f32 %v2106, 0.6931472
        %v2108 = vmul.f32 -0.5, %v1923
        %v2109 = vadd.f32 %v2108, 1.0
        %v2110 = vmul.f32 %v2109, %v1923
        %v2111 = vand.u32 2147483647, %v1923
        %vm2112 = vcmp.lt.f32.partialorder %v2111, 0.0004427343
        %v2113 = vsel %vm2112, %v2110, %v2107
        %v2114 = vadd.f32 %v1925, 1.0
        %v2115 = vlog2.pop %v2114
        %v2116 = vmul.f32 %v2115, 0.6931472
        %v2117 = vmul.f32 -0.5, %v1925
        %v2118 = vadd.f32 %v2117, 1.0
        %v2119 = vmul.f32 %v2118, %v1925
        %v2120 = vand.u32 2147483647, %v1925
        %vm2121 = vcmp.lt.f32.partialorder %v2120, 0.0004427343
        %v2122 = vsel %vm2121, %v2119, %v2116
        %v2123 = vadd.f32 %v1927, 1.0
        %v2124 = vlog2.pop %v2123
        %v2125 = vmul.f32 %v2124, 0.6931472
        %v2126 = vmul.f32 -0.5, %v1927
        %v2127 = vadd.f32 %v2126, 1.0
        %v2128 = vmul.f32 %v2127, %v1927
        %v2129 = vand.u32 2147483647, %v1927
        %vm2130 = vcmp.lt.f32.partialorder %v2129, 0.0004427343
        %v2131 = vsel %vm2130, %v2128, %v2125
        %v2132 = vadd.f32 %v1929, 1.0
        %v2133 = vlog2.pop %v2132
        %v2134 = vmul.f32 %v2133, 0.6931472
        %v2135 = vmul.f32 -0.5, %v1929
        %v2136 = vadd.f32 %v2135, 1.0
        %v2137 = vmul.f32 %v2136, %v1929
        %v2138 = vand.u32 2147483647, %v1929
        %vm2139 = vcmp.lt.f32.partialorder %v2138, 0.0004427343
        %v2140 = vsel %vm2139, %v2137, %v2134
        %v2141 = vadd.f32 %v1931, 1.0
        %v2142 = vlog2.pop %v2141
        %v2143 = vmul.f32 %v2142, 0.6931472
        %v2144 = vmul.f32 -0.5, %v1931
        %v2145 = vadd.f32 %v2144, 1.0
        %v2146 = vmul.f32 %v2145, %v1931
        %v2147 = vand.u32 2147483647, %v1931
        %vm2148 = vcmp.lt.f32.partialorder %v2147, 0.0004427343
        %v2149 = vsel %vm2148, %v2146, %v2143
        %v2150 = vadd.f32 %v1933, 1.0
        %v2151 = vlog2.pop %v2150
        %v2152 = vmul.f32 %v2151, 0.6931472
        %v2153 = vmul.f32 -0.5, %v1933
        %v2154 = vadd.f32 %v2153, 1.0
        %v2155 = vmul.f32 %v2154, %v1933
        %v2156 = vand.u32 2147483647, %v1933
        %vm2157 = vcmp.lt.f32.partialorder %v2156, 0.0004427343
        %v2158 = vsel %vm2157, %v2155, %v2152
        %v2159 = vadd.f32 %v1935, 1.0
        %v2160 = vlog2.pop %v2159
        %v2161 = vmul.f32 %v2160, 0.6931472
        %v2162 = vmul.f32 -0.5, %v1935
        %v2163 = vadd.f32 %v2162, 1.0
        %v2164 = vmul.f32 %v2163, %v1935
        %v2165 = vand.u32 2147483647, %v1935
        %vm2166 = vcmp.lt.f32.partialorder %v2165, 0.0004427343
        %v2167 = vsel %vm2166, %v2164, %v2161
        %v2168 = vadd.f32 %v1937, 1.0
        %v2169 = vlog2.pop %v2168
        %v2170 = vmul.f32 %v2169, 0.6931472
        %v2171 = vmul.f32 -0.5, %v1937
        %v2172 = vadd.f32 %v2171, 1.0
        %v2173 = vmul.f32 %v2172, %v1937
        %v2174 = vand.u32 2147483647, %v1937
        %vm2175 = vcmp.lt.f32.partialorder %v2174, 0.0004427343
        %v2176 = vsel %vm2175, %v2173, %v2170
        %v2177 = vadd.f32 %v1939, 1.0
        %v2178 = vlog2.pop %v2177
        %v2179 = vmul.f32 %v2178, 0.6931472
        %v2180 = vmul.f32 -0.5, %v1939
        %v2181 = vadd.f32 %v2180, 1.0
        %v2182 = vmul.f32 %v2181, %v1939
        %v2183 = vand.u32 2147483647, %v1939
        %vm2184 = vcmp.lt.f32.partialorder %v2183, 0.0004427343
        %v2185 = vsel %vm2184, %v2182, %v2179
        %v2186 = vadd.f32 %v1941, 1.0
        %v2187 = vlog2.pop %v2186
        %v2188 = vmul.f32 %v2187, 0.6931472
        %v2189 = vmul.f32 -0.5, %v1941
        %v2190 = vadd.f32 %v2189, 1.0
        %v2191 = vmul.f32 %v2190, %v1941
        %v2192 = vand.u32 2147483647, %v1941
        %vm2193 = vcmp.lt.f32.partialorder %v2192, 0.0004427343
        %v2194 = vsel %vm2193, %v2191, %v2188
        %v2195 = vadd.f32 %v1943, 1.0
        %v2196 = vlog2.pop %v2195
        %v2197 = vmul.f32 %v2196, 0.6931472
        %v2198 = vmul.f32 -0.5, %v1943
        %v2199 = vadd.f32 %v2198, 1.0
        %v2200 = vmul.f32 %v2199, %v1943
        %v2201 = vand.u32 2147483647, %v1943
        %vm2202 = vcmp.lt.f32.partialorder %v2201, 0.0004427343
        %v2203 = vsel %vm2202, %v2200, %v2197
        %v2204 = vadd.f32 %v1945, 1.0
        %v2205 = vlog2.pop %v2204
        %v2206 = vmul.f32 %v2205, 0.6931472
        %v2207 = vmul.f32 -0.5, %v1945
        %v2208 = vadd.f32 %v2207, 1.0
        %v2209 = vmul.f32 %v2208, %v1945
        %v2210 = vand.u32 2147483647, %v1945
        %vm2211 = vcmp.lt.f32.partialorder %v2210, 0.0004427343
        %v2212 = vsel %vm2211, %v2209, %v2206
        %v2213 = vadd.f32 %v1947, 1.0
        %v2214 = vlog2.pop %v2213
        %v2215 = vmul.f32 %v2214, 0.6931472
        %v2216 = vmul.f32 -0.5, %v1947
        %v2217 = vadd.f32 %v2216, 1.0
        %v2218 = vmul.f32 %v2217, %v1947
        %v2219 = vand.u32 2147483647, %v1947
        %vm2220 = vcmp.lt.f32.partialorder %v2219, 0.0004427343
        %v2221 = vsel %vm2220, %v2218, %v2215
        %v2222 = vadd.f32 %v1949, 1.0
        %v2223 = vlog2.pop %v2222
        %v2224 = vmul.f32 %v2223, 0.6931472
        %v2225 = vmul.f32 -0.5, %v1949
        %v2226 = vadd.f32 %v2225, 1.0
        %v2227 = vmul.f32 %v2226, %v1949
        %v2228 = vand.u32 2147483647, %v1949
        %vm2229 = vcmp.lt.f32.partialorder %v2228, 0.0004427343
        %v2230 = vsel %vm2229, %v2227, %v2224
        %v2231 = vadd.f32 %v1951, 1.0
        %v2232 = vlog2.pop %v2231
        %v2233 = vmul.f32 %v2232, 0.6931472
        %v2234 = vmul.f32 -0.5, %v1951
        %v2235 = vadd.f32 %v2234, 1.0
        %v2236 = vmul.f32 %v2235, %v1951
        %v2237 = vand.u32 2147483647, %v1951
        %vm2238 = vcmp.lt.f32.partialorder %v2237, 0.0004427343
        %v2239 = vsel %vm2238, %v2236, %v2233
        %v2240 = vmin.f32 %v352, 0.0
        %v2241 = vmin.f32 %v353, 0.0
        %v2242 = vmin.f32 %v354, 0.0
        %v2243 = vmin.f32 %v355, 0.0
        %v2244 = vmin.f32 %v356, 0.0
        %v2245 = vmin.f32 %v357, 0.0
        %v2246 = vmin.f32 %v358, 0.0
        %v2247 = vmin.f32 %v359, 0.0
        %v2248 = vmin.f32 %v360, 0.0
        %v2249 = vmin.f32 %v361, 0.0
        %v2250 = vmin.f32 %v362, 0.0
        %v2251 = vmin.f32 %v363, 0.0
        %v2252 = vmin.f32 %v364, 0.0
        %v2253 = vmin.f32 %v365, 0.0
        %v2254 = vmin.f32 %v366, 0.0
        %v2255 = vmin.f32 %v367, 0.0
        %v2256 = vmin.f32 %v368, 0.0
        %v2257 = vmin.f32 %v369, 0.0
        %v2258 = vmin.f32 %v370, 0.0
        %v2259 = vmin.f32 %v371, 0.0
        %v2260 = vmin.f32 %v372, 0.0
        %v2261 = vmin.f32 %v373, 0.0
        %v2262 = vmin.f32 %v374, 0.0
        %v2263 = vmin.f32 %v375, 0.0
        %v2264 = vmin.f32 %v376, 0.0
        %v2265 = vmin.f32 %v377, 0.0
        %v2266 = vmin.f32 %v378, 0.0
        %v2267 = vmin.f32 %v379, 0.0
        %v2268 = vmin.f32 %v380, 0.0
        %v2269 = vmin.f32 %v381, 0.0
        %v2270 = vmin.f32 %v382, 0.0
        %v2271 = vmin.f32 %v383, 0.0
        %v2272 = vsub.f32 %v2240, %v1960
        %v2273 = vsub.f32 %v2241, %v1969
        %v2274 = vsub.f32 %v2242, %v1978
        %v2275 = vsub.f32 %v2243, %v1987
        %v2276 = vsub.f32 %v2244, %v1996
        %v2277 = vsub.f32 %v2245, %v2005
        %v2278 = vsub.f32 %v2246, %v2014
        %v2279 = vsub.f32 %v2247, %v2023
        %v2280 = vsub.f32 %v2248, %v2032
        %v2281 = vsub.f32 %v2249, %v2041
        %v2282 = vsub.f32 %v2250, %v2050
        %v2283 = vsub.f32 %v2251, %v2059
        %v2284 = vsub.f32 %v2252, %v2068
        %v2285 = vsub.f32 %v2253, %v2077
        %v2286 = vsub.f32 %v2254, %v2086
        %v2287 = vsub.f32 %v2255, %v2095
        %v2288 = vsub.f32 %v2256, %v2104
        %v2289 = vsub.f32 %v2257, %v2113
        %v2290 = vsub.f32 %v2258, %v2122
        %v2291 = vsub.f32 %v2259, %v2131
        %v2292 = vsub.f32 %v2260, %v2140
        %v2293 = vsub.f32 %v2261, %v2149
        %v2294 = vsub.f32 %v2262, %v2158
        %v2295 = vsub.f32 %v2263, %v2167
        %v2296 = vsub.f32 %v2264, %v2176
        %v2297 = vsub.f32 %v2265, %v2185
        %v2298 = vsub.f32 %v2266, %v2194
        %v2299 = vsub.f32 %v2267, %v2203
        %v2300 = vsub.f32 %v2268, %v2212
        %v2301 = vsub.f32 %v2269, %v2221
        %v2302 = vsub.f32 %v2270, %v2230
        %v2303 = vsub.f32 %v2271, %v2239
        %v2304 = vsub.f32 0.0, %v352
        %v2305 = vsub.f32 0.0, %v353
        %v2306 = vsub.f32 0.0, %v354
        %v2307 = vsub.f32 0.0, %v355
        %v2308 = vsub.f32 0.0, %v356
        %v2309 = vsub.f32 0.0, %v357
        %v2310 = vsub.f32 0.0, %v358
        %v2311 = vsub.f32 0.0, %v359
        %v2312 = vsub.f32 0.0, %v360
        %v2313 = vsub.f32 0.0, %v361
        %v2314 = vsub.f32 0.0, %v362
        %v2315 = vsub.f32 0.0, %v363
        %v2316 = vsub.f32 0.0, %v364
        %v2317 = vsub.f32 0.0, %v365
        %v2318 = vsub.f32 0.0, %v366
        %v2319 = vsub.f32 0.0, %v367
        %v2320 = vsub.f32 0.0, %v368
        %v2321 = vsub.f32 0.0, %v369
        %v2322 = vsub.f32 0.0, %v370
        %v2323 = vsub.f32 0.0, %v371
        %v2324 = vsub.f32 0.0, %v372
        %v2325 = vsub.f32 0.0, %v373
        %v2326 = vsub.f32 0.0, %v374
        %v2327 = vsub.f32 0.0, %v375
        %v2328 = vsub.f32 0.0, %v376
        %v2329 = vsub.f32 0.0, %v377
        %v2330 = vsub.f32 0.0, %v378
        %v2331 = vsub.f32 0.0, %v379
        %v2332 = vsub.f32 0.0, %v380
        %v2333 = vsub.f32 0.0, %v381
        %v2334 = vsub.f32 0.0, %v382
        %v2335 = vsub.f32 0.0, %v383
        %v2336 = vmin.f32 %v2304, 0.0
        %v2337 = vmin.f32 %v2305, 0.0
        %v2338 = vmin.f32 %v2306, 0.0
        %v2339 = vmin.f32 %v2307, 0.0
        %v2340 = vmin.f32 %v2308, 0.0
        %v2341 = vmin.f32 %v2309, 0.0
        %v2342 = vmin.f32 %v2310, 0.0
        %v2343 = vmin.f32 %v2311, 0.0
        %v2344 = vmin.f32 %v2312, 0.0
        %v2345 = vmin.f32 %v2313, 0.0
        %v2346 = vmin.f32 %v2314, 0.0
        %v2347 = vmin.f32 %v2315, 0.0
        %v2348 = vmin.f32 %v2316, 0.0
        %v2349 = vmin.f32 %v2317, 0.0
        %v2350 = vmin.f32 %v2318, 0.0
        %v2351 = vmin.f32 %v2319, 0.0
        %v2352 = vmin.f32 %v2320, 0.0
        %v2353 = vmin.f32 %v2321, 0.0
        %v2354 = vmin.f32 %v2322, 0.0
        %v2355 = vmin.f32 %v2323, 0.0
        %v2356 = vmin.f32 %v2324, 0.0
        %v2357 = vmin.f32 %v2325, 0.0
        %v2358 = vmin.f32 %v2326, 0.0
        %v2359 = vmin.f32 %v2327, 0.0
        %v2360 = vmin.f32 %v2328, 0.0
        %v2361 = vmin.f32 %v2329, 0.0
        %v2362 = vmin.f32 %v2330, 0.0
        %v2363 = vmin.f32 %v2331, 0.0
        %v2364 = vmin.f32 %v2332, 0.0
        %v2365 = vmin.f32 %v2333, 0.0
        %v2366 = vmin.f32 %v2334, 0.0
        %v2367 = vmin.f32 %v2335, 0.0
        %v2368 = vsub.f32 %v2336, %v1960
        %v2369 = vsub.f32 %v2337, %v1969
        %v2370 = vsub.f32 %v2338, %v1978
        %v2371 = vsub.f32 %v2339, %v1987
        %v2372 = vsub.f32 %v2340, %v1996
        %v2373 = vsub.f32 %v2341, %v2005
        %v2374 = vsub.f32 %v2342, %v2014
        %v2375 = vsub.f32 %v2343, %v2023
        %v2376 = vsub.f32 %v2344, %v2032
        %v2377 = vsub.f32 %v2345, %v2041
        %v2378 = vsub.f32 %v2346, %v2050
        %v2379 = vsub.f32 %v2347, %v2059
        %v2380 = vsub.f32 %v2348, %v2068
        %v2381 = vsub.f32 %v2349, %v2077
        %v2382 = vsub.f32 %v2350, %v2086
        %v2383 = vsub.f32 %v2351, %v2095
        %v2384 = vsub.f32 %v2352, %v2104
        %v2385 = vsub.f32 %v2353, %v2113
        %v2386 = vsub.f32 %v2354, %v2122
        %v2387 = vsub.f32 %v2355, %v2131
        %v2388 = vsub.f32 %v2356, %v2140
        %v2389 = vsub.f32 %v2357, %v2149
        %v2390 = vsub.f32 %v2358, %v2158
        %v2391 = vsub.f32 %v2359, %v2167
        %v2392 = vsub.f32 %v2360, %v2176
        %v2393 = vsub.f32 %v2361, %v2185
        %v2394 = vsub.f32 %v2362, %v2194
        %v2395 = vsub.f32 %v2363, %v2203
        %v2396 = vsub.f32 %v2364, %v2212
        %v2397 = vsub.f32 %v2365, %v2221
        %v2398 = vsub.f32 %v2366, %v2230
        %v2399 = vsub.f32 %v2367, %v2239
        %v2400 = vmul.f32 %v640, 0.25
        %v2401 = vmul.f32 %v641, 0.25
        %v2402 = vmul.f32 %v642, 0.25
        %v2403 = vmul.f32 %v643, 0.25
        %v2404 = vmul.f32 %v644, 0.25
        %v2405 = vmul.f32 %v645, 0.25
        %v2406 = vmul.f32 %v646, 0.25
        %v2407 = vmul.f32 %v647, 0.25
        %v2408 = vmul.f32 %v648, 0.25
        %v2409 = vmul.f32 %v649, 0.25
        %v2410 = vmul.f32 %v650, 0.25
        %v2411 = vmul.f32 %v651, 0.25
        %v2412 = vmul.f32 %v652, 0.25
        %v2413 = vmul.f32 %v653, 0.25
        %v2414 = vmul.f32 %v654, 0.25
        %v2415 = vmul.f32 %v655, 0.25
        %v2416 = vmul.f32 %v656, 0.25
        %v2417 = vmul.f32 %v657, 0.25
        %v2418 = vmul.f32 %v658, 0.25
        %v2419 = vmul.f32 %v659, 0.25
        %v2420 = vmul.f32 %v660, 0.25
        %v2421 = vmul.f32 %v661, 0.25
        %v2422 = vmul.f32 %v662, 0.25
        %v2423 = vmul.f32 %v663, 0.25
        %v2424 = vmul.f32 %v664, 0.25
        %v2425 = vmul.f32 %v665, 0.25
        %v2426 = vmul.f32 %v666, 0.25
        %v2427 = vmul.f32 %v667, 0.25
        %v2428 = vmul.f32 %v668, 0.25
        %v2429 = vmul.f32 %v669, 0.25
        %v2430 = vmul.f32 %v670, 0.25
        %v2431 = vmul.f32 %v671, 0.25
        %v2432 = vmul.f32 %v2400, %v1696
        %v2433 = vmul.f32 %v2401, %v1697
        %v2434 = vmul.f32 %v2402, %v1698
        %v2435 = vmul.f32 %v2403, %v1699
        %v2436 = vmul.f32 %v2404, %v1700
        %v2437 = vmul.f32 %v2405, %v1701
        %v2438 = vmul.f32 %v2406, %v1702
        %v2439 = vmul.f32 %v2407, %v1703
        %v2440 = vmul.f32 %v2408, %v1704
        %v2441 = vmul.f32 %v2409, %v1705
        %v2442 = vmul.f32 %v2410, %v1706
        %v2443 = vmul.f32 %v2411, %v1707
        %v2444 = vmul.f32 %v2412, %v1708
        %v2445 = vmul.f32 %v2413, %v1709
        %v2446 = vmul.f32 %v2414, %v1710
        %v2447 = vmul.f32 %v2415, %v1711
        %v2448 = vmul.f32 %v2416, %v1712
        %v2449 = vmul.f32 %v2417, %v1713
        %v2450 = vmul.f32 %v2418, %v1714
        %v2451 = vmul.f32 %v2419, %v1715
        %v2452 = vmul.f32 %v2420, %v1716
        %v2453 = vmul.f32 %v2421, %v1717
        %v2454 = vmul.f32 %v2422, %v1718
        %v2455 = vmul.f32 %v2423, %v1719
        %v2456 = vmul.f32 %v2424, %v1720
        %v2457 = vmul.f32 %v2425, %v1721
        %v2458 = vmul.f32 %v2426, %v1722
        %v2459 = vmul.f32 %v2427, %v1723
        %v2460 = vmul.f32 %v2428, %v1724
        %v2461 = vmul.f32 %v2429, %v1725
        %v2462 = vmul.f32 %v2430, %v1726
        %v2463 = vmul.f32 %v2431, %v1727
        %v2464 = vsub.f32 1.0, %v640
        %v2465 = vsub.f32 1.0, %v641
        %v2466 = vsub.f32 1.0, %v642
        %v2467 = vsub.f32 1.0, %v643
        %v2468 = vsub.f32 1.0, %v644
        %v2469 = vsub.f32 1.0, %v645
        %v2470 = vsub.f32 1.0, %v646
        %v2471 = vsub.f32 1.0, %v647
        %v2472 = vsub.f32 1.0, %v648
        %v2473 = vsub.f32 1.0, %v649
        %v2474 = vsub.f32 1.0, %v650
        %v2475 = vsub.f32 1.0, %v651
        %v2476 = vsub.f32 1.0, %v652
        %v2477 = vsub.f32 1.0, %v653
        %v2478 = vsub.f32 1.0, %v654
        %v2479 = vsub.f32 1.0, %v655
        %v2480 = vsub.f32 1.0, %v656
        %v2481 = vsub.f32 1.0, %v657
        %v2482 = vsub.f32 1.0, %v658
        %v2483 = vsub.f32 1.0, %v659
        %v2484 = vsub.f32 1.0, %v660
        %v2485 = vsub.f32 1.0, %v661
        %v2486 = vsub.f32 1.0, %v662
        %v2487 = vsub.f32 1.0, %v663
        %v2488 = vsub.f32 1.0, %v664
        %v2489 = vsub.f32 1.0, %v665
        %v2490 = vsub.f32 1.0, %v666
        %v2491 = vsub.f32 1.0, %v667
        %v2492 = vsub.f32 1.0, %v668
        %v2493 = vsub.f32 1.0, %v669
        %v2494 = vsub.f32 1.0, %v670
        %v2495 = vsub.f32 1.0, %v671
        %v2496 = vmul.f32 %v2464, 0.75
        %v2497 = vmul.f32 %v2465, 0.75
        %v2498 = vmul.f32 %v2466, 0.75
        %v2499 = vmul.f32 %v2467, 0.75
        %v2500 = vmul.f32 %v2468, 0.75
        %v2501 = vmul.f32 %v2469, 0.75
        %v2502 = vmul.f32 %v2470, 0.75
        %v2503 = vmul.f32 %v2471, 0.75
        %v2504 = vmul.f32 %v2472, 0.75
        %v2505 = vmul.f32 %v2473, 0.75
        %v2506 = vmul.f32 %v2474, 0.75
        %v2507 = vmul.f32 %v2475, 0.75
        %v2508 = vmul.f32 %v2476, 0.75
        %v2509 = vmul.f32 %v2477, 0.75
        %v2510 = vmul.f32 %v2478, 0.75
        %v2511 = vmul.f32 %v2479, 0.75
        %v2512 = vmul.f32 %v2480, 0.75
        %v2513 = vmul.f32 %v2481, 0.75
        %v2514 = vmul.f32 %v2482, 0.75
        %v2515 = vmul.f32 %v2483, 0.75
        %v2516 = vmul.f32 %v2484, 0.75
        %v2517 = vmul.f32 %v2485, 0.75
        %v2518 = vmul.f32 %v2486, 0.75
        %v2519 = vmul.f32 %v2487, 0.75
        %v2520 = vmul.f32 %v2488, 0.75
        %v2521 = vmul.f32 %v2489, 0.75
        %v2522 = vmul.f32 %v2490, 0.75
        %v2523 = vmul.f32 %v2491, 0.75
        %v2524 = vmul.f32 %v2492, 0.75
        %v2525 = vmul.f32 %v2493, 0.75
        %v2526 = vmul.f32 %v2494, 0.75
        %v2527 = vmul.f32 %v2495, 0.75
        %v2528 = vmul.f32 %v2496, %v1792
        %v2529 = vmul.f32 %v2497, %v1793
        %v2530 = vmul.f32 %v2498, %v1794
        %v2531 = vmul.f32 %v2499, %v1795
        %v2532 = vmul.f32 %v2500, %v1796
        %v2533 = vmul.f32 %v2501, %v1797
        %v2534 = vmul.f32 %v2502, %v1798
        %v2535 = vmul.f32 %v2503, %v1799
        %v2536 = vmul.f32 %v2504, %v1800
        %v2537 = vmul.f32 %v2505, %v1801
        %v2538 = vmul.f32 %v2506, %v1802
        %v2539 = vmul.f32 %v2507, %v1803
        %v2540 = vmul.f32 %v2508, %v1804
        %v2541 = vmul.f32 %v2509, %v1805
        %v2542 = vmul.f32 %v2510, %v1806
        %v2543 = vmul.f32 %v2511, %v1807
        %v2544 = vmul.f32 %v2512, %v1808
        %v2545 = vmul.f32 %v2513, %v1809
        %v2546 = vmul.f32 %v2514, %v1810
        %v2547 = vmul.f32 %v2515, %v1811
        %v2548 = vmul.f32 %v2516, %v1812
        %v2549 = vmul.f32 %v2517, %v1813
        %v2550 = vmul.f32 %v2518, %v1814
        %v2551 = vmul.f32 %v2519, %v1815
        %v2552 = vmul.f32 %v2520, %v1816
        %v2553 = vmul.f32 %v2521, %v1817
        %v2554 = vmul.f32 %v2522, %v1818
        %v2555 = vmul.f32 %v2523, %v1819
        %v2556 = vmul.f32 %v2524, %v1820
        %v2557 = vmul.f32 %v2525, %v1821
        %v2558 = vmul.f32 %v2526, %v1822
        %v2559 = vmul.f32 %v2527, %v1823
        %v2560 = vadd.f32 %v2432, %v2528
        %v2561 = vadd.f32 %v2433, %v2529
        %v2562 = vadd.f32 %v2434, %v2530
        %v2563 = vadd.f32 %v2435, %v2531
        %v2564 = vadd.f32 %v2436, %v2532
        %v2565 = vadd.f32 %v2437, %v2533
        %v2566 = vadd.f32 %v2438, %v2534
        %v2567 = vadd.f32 %v2439, %v2535
        %v2568 = vadd.f32 %v2440, %v2536
        %v2569 = vadd.f32 %v2441, %v2537
        %v2570 = vadd.f32 %v2442, %v2538
        %v2571 = vadd.f32 %v2443, %v2539
        %v2572 = vadd.f32 %v2444, %v2540
        %v2573 = vadd.f32 %v2445, %v2541
        %v2574 = vadd.f32 %v2446, %v2542
        %v2575 = vadd.f32 %v2447, %v2543
        %v2576 = vadd.f32 %v2448, %v2544
        %v2577 = vadd.f32 %v2449, %v2545
        %v2578 = vadd.f32 %v2450, %v2546
        %v2579 = vadd.f32 %v2451, %v2547
        %v2580 = vadd.f32 %v2452, %v2548
        %v2581 = vadd.f32 %v2453, %v2549
        %v2582 = vadd.f32 %v2454, %v2550
        %v2583 = vadd.f32 %v2455, %v2551
        %v2584 = vadd.f32 %v2456, %v2552
        %v2585 = vadd.f32 %v2457, %v2553
        %v2586 = vadd.f32 %v2458, %v2554
        %v2587 = vadd.f32 %v2459, %v2555
        %v2588 = vadd.f32 %v2460, %v2556
        %v2589 = vadd.f32 %v2461, %v2557
        %v2590 = vadd.f32 %v2462, %v2558
        %v2591 = vadd.f32 %v2463, %v2559
        %v2592 = vmul.f32 %v2560, %v1152
        %v2593 = vmul.f32 %v2561, %v1153
        %v2594 = vmul.f32 %v2562, %v1154
        %v2595 = vmul.f32 %v2563, %v1155
        %v2596 = vmul.f32 %v2564, %v1156
        %v2597 = vmul.f32 %v2565, %v1157
        %v2598 = vmul.f32 %v2566, %v1158
        %v2599 = vmul.f32 %v2567, %v1159
        %v2600 = vmul.f32 %v2568, %v1160
        %v2601 = vmul.f32 %v2569, %v1161
        %v2602 = vmul.f32 %v2570, %v1162
        %v2603 = vmul.f32 %v2571, %v1163
        %v2604 = vmul.f32 %v2572, %v1164
        %v2605 = vmul.f32 %v2573, %v1165
        %v2606 = vmul.f32 %v2574, %v1166
        %v2607 = vmul.f32 %v2575, %v1167
        %v2608 = vmul.f32 %v2576, %v1168
        %v2609 = vmul.f32 %v2577, %v1169
        %v2610 = vmul.f32 %v2578, %v1170
        %v2611 = vmul.f32 %v2579, %v1171
        %v2612 = vmul.f32 %v2580, %v1172
        %v2613 = vmul.f32 %v2581, %v1173
        %v2614 = vmul.f32 %v2582, %v1174
        %v2615 = vmul.f32 %v2583, %v1175
        %v2616 = vmul.f32 %v2584, %v1176
        %v2617 = vmul.f32 %v2585, %v1177
        %v2618 = vmul.f32 %v2586, %v1178
        %v2619 = vmul.f32 %v2587, %v1179
        %v2620 = vmul.f32 %v2588, %v1180
        %v2621 = vmul.f32 %v2589, %v1181
        %v2622 = vmul.f32 %v2590, %v1182
        %v2623 = vmul.f32 %v2591, %v1183
        %v2624 = vmul.f32 %v544, 0.25
        %v2625 = vmul.f32 %v545, 0.25
        %v2626 = vmul.f32 %v546, 0.25
        %v2627 = vmul.f32 %v547, 0.25
        %v2628 = vmul.f32 %v548, 0.25
        %v2629 = vmul.f32 %v549, 0.25
        %v2630 = vmul.f32 %v550, 0.25
        %v2631 = vmul.f32 %v551, 0.25
        %v2632 = vmul.f32 %v552, 0.25
        %v2633 = vmul.f32 %v553, 0.25
        %v2634 = vmul.f32 %v554, 0.25
        %v2635 = vmul.f32 %v555, 0.25
        %v2636 = vmul.f32 %v556, 0.25
        %v2637 = vmul.f32 %v557, 0.25
        %v2638 = vmul.f32 %v558, 0.25
        %v2639 = vmul.f32 %v559, 0.25
        %v2640 = vmul.f32 %v560, 0.25
        %v2641 = vmul.f32 %v561, 0.25
        %v2642 = vmul.f32 %v562, 0.25
        %v2643 = vmul.f32 %v563, 0.25
        %v2644 = vmul.f32 %v564, 0.25
        %v2645 = vmul.f32 %v565, 0.25
        %v2646 = vmul.f32 %v566, 0.25
        %v2647 = vmul.f32 %v567, 0.25
        %v2648 = vmul.f32 %v568, 0.25
        %v2649 = vmul.f32 %v569, 0.25
        %v2650 = vmul.f32 %v570, 0.25
        %v2651 = vmul.f32 %v571, 0.25
        %v2652 = vmul.f32 %v572, 0.25
        %v2653 = vmul.f32 %v573, 0.25
        %v2654 = vmul.f32 %v574, 0.25
        %v2655 = vmul.f32 %v575, 0.25
        %v2656 = vmul.f32 %v2624, %v2272
        %v2657 = vmul.f32 %v2625, %v2273
        %v2658 = vmul.f32 %v2626, %v2274
        %v2659 = vmul.f32 %v2627, %v2275
        %v2660 = vmul.f32 %v2628, %v2276
        %v2661 = vmul.f32 %v2629, %v2277
        %v2662 = vmul.f32 %v2630, %v2278
        %v2663 = vmul.f32 %v2631, %v2279
        %v2664 = vmul.f32 %v2632, %v2280
        %v2665 = vmul.f32 %v2633, %v2281
        %v2666 = vmul.f32 %v2634, %v2282
        %v2667 = vmul.f32 %v2635, %v2283
        %v2668 = vmul.f32 %v2636, %v2284
        %v2669 = vmul.f32 %v2637, %v2285
        %v2670 = vmul.f32 %v2638, %v2286
        %v2671 = vmul.f32 %v2639, %v2287
        %v2672 = vmul.f32 %v2640, %v2288
        %v2673 = vmul.f32 %v2641, %v2289
        %v2674 = vmul.f32 %v2642, %v2290
        %v2675 = vmul.f32 %v2643, %v2291
        %v2676 = vmul.f32 %v2644, %v2292
        %v2677 = vmul.f32 %v2645, %v2293
        %v2678 = vmul.f32 %v2646, %v2294
        %v2679 = vmul.f32 %v2647, %v2295
        %v2680 = vmul.f32 %v2648, %v2296
        %v2681 = vmul.f32 %v2649, %v2297
        %v2682 = vmul.f32 %v2650, %v2298
        %v2683 = vmul.f32 %v2651, %v2299
        %v2684 = vmul.f32 %v2652, %v2300
        %v2685 = vmul.f32 %v2653, %v2301
        %v2686 = vmul.f32 %v2654, %v2302
        %v2687 = vmul.f32 %v2655, %v2303
        %v2688 = vsub.f32 1.0, %v544
        %v2689 = vsub.f32 1.0, %v545
        %v2690 = vsub.f32 1.0, %v546
        %v2691 = vsub.f32 1.0, %v547
        %v2692 = vsub.f32 1.0, %v548
        %v2693 = vsub.f32 1.0, %v549
        %v2694 = vsub.f32 1.0, %v550
        %v2695 = vsub.f32 1.0, %v551
        %v2696 = vsub.f32 1.0, %v552
        %v2697 = vsub.f32 1.0, %v553
        %v2698 = vsub.f32 1.0, %v554
        %v2699 = vsub.f32 1.0, %v555
        %v2700 = vsub.f32 1.0, %v556
        %v2701 = vsub.f32 1.0, %v557
        %v2702 = vsub.f32 1.0, %v558
        %v2703 = vsub.f32 1.0, %v559
        %v2704 = vsub.f32 1.0, %v560
        %v2705 = vsub.f32 1.0, %v561
        %v2706 = vsub.f32 1.0, %v562
        %v2707 = vsub.f32 1.0, %v563
        %v2708 = vsub.f32 1.0, %v564
        %v2709 = vsub.f32 1.0, %v565
        %v2710 = vsub.f32 1.0, %v566
        %v2711 = vsub.f32 1.0, %v567
        %v2712 = vsub.f32 1.0, %v568
        %v2713 = vsub.f32 1.0, %v569
        %v2714 = vsub.f32 1.0, %v570
        %v2715 = vsub.f32 1.0, %v571
        %v2716 = vsub.f32 1.0, %v572
        %v2717 = vsub.f32 1.0, %v573
        %v2718 = vsub.f32 1.0, %v574
        %v2719 = vsub.f32 1.0, %v575
        %v2720 = vmul.f32 %v2688, 0.75
        %v2721 = vmul.f32 %v2689, 0.75
        %v2722 = vmul.f32 %v2690, 0.75
        %v2723 = vmul.f32 %v2691, 0.75
        %v2724 = vmul.f32 %v2692, 0.75
        %v2725 = vmul.f32 %v2693, 0.75
        %v2726 = vmul.f32 %v2694, 0.75
        %v2727 = vmul.f32 %v2695, 0.75
        %v2728 = vmul.f32 %v2696, 0.75
        %v2729 = vmul.f32 %v2697, 0.75
        %v2730 = vmul.f32 %v2698, 0.75
        %v2731 = vmul.f32 %v2699, 0.75
        %v2732 = vmul.f32 %v2700, 0.75
        %v2733 = vmul.f32 %v2701, 0.75
        %v2734 = vmul.f32 %v2702, 0.75
        %v2735 = vmul.f32 %v2703, 0.75
        %v2736 = vmul.f32 %v2704, 0.75
        %v2737 = vmul.f32 %v2705, 0.75
        %v2738 = vmul.f32 %v2706, 0.75
        %v2739 = vmul.f32 %v2707, 0.75
        %v2740 = vmul.f32 %v2708, 0.75
        %v2741 = vmul.f32 %v2709, 0.75
        %v2742 = vmul.f32 %v2710, 0.75
        %v2743 = vmul.f32 %v2711, 0.75
        %v2744 = vmul.f32 %v2712, 0.75
        %v2745 = vmul.f32 %v2713, 0.75
        %v2746 = vmul.f32 %v2714, 0.75
        %v2747 = vmul.f32 %v2715, 0.75
        %v2748 = vmul.f32 %v2716, 0.75
        %v2749 = vmul.f32 %v2717, 0.75
        %v2750 = vmul.f32 %v2718, 0.75
        %v2751 = vmul.f32 %v2719, 0.75
        %v2752 = vmul.f32 %v2720, %v2368
        %v2753 = vmul.f32 %v2721, %v2369
        %v2754 = vmul.f32 %v2722, %v2370
        %v2755 = vmul.f32 %v2723, %v2371
        %v2756 = vmul.f32 %v2724, %v2372
        %v2757 = vmul.f32 %v2725, %v2373
        %v2758 = vmul.f32 %v2726, %v2374
        %v2759 = vmul.f32 %v2727, %v2375
        %v2760 = vmul.f32 %v2728, %v2376
        %v2761 = vmul.f32 %v2729, %v2377
        %v2762 = vmul.f32 %v2730, %v2378
        %v2763 = vmul.f32 %v2731, %v2379
        %v2764 = vmul.f32 %v2732, %v2380
        %v2765 = vmul.f32 %v2733, %v2381
        %v2766 = vmul.f32 %v2734, %v2382
        %v2767 = vmul.f32 %v2735, %v2383
        %v2768 = vmul.f32 %v2736, %v2384
        %v2769 = vmul.f32 %v2737, %v2385
        %v2770 = vmul.f32 %v2738, %v2386
        %v2771 = vmul.f32 %v2739, %v2387
        %v2772 = vmul.f32 %v2740, %v2388
        %v2773 = vmul.f32 %v2741, %v2389
        %v2774 = vmul.f32 %v2742, %v2390
        %v2775 = vmul.f32 %v2743, %v2391
        %v2776 = vmul.f32 %v2744, %v2392
        %v2777 = vmul.f32 %v2745, %v2393
        %v2778 = vmul.f32 %v2746, %v2394
        %v2779 = vmul.f32 %v2747, %v2395
        %v2780 = vmul.f32 %v2748, %v2396
        %v2781 = vmul.f32 %v2749, %v2397
        %v2782 = vmul.f32 %v2750, %v2398
        %v2783 = vmul.f32 %v2751, %v2399
        %v2784 = vadd.f32 %v2656, %v2752
        %v2785 = vadd.f32 %v2657, %v2753
        %v2786 = vadd.f32 %v2658, %v2754
        %v2787 = vadd.f32 %v2659, %v2755
        %v2788 = vadd.f32 %v2660, %v2756
        %v2789 = vadd.f32 %v2661, %v2757
        %v2790 = vadd.f32 %v2662, %v2758
        %v2791 = vadd.f32 %v2663, %v2759
        %v2792 = vadd.f32 %v2664, %v2760
        %v2793 = vadd.f32 %v2665, %v2761
        %v2794 = vadd.f32 %v2666, %v2762
        %v2795 = vadd.f32 %v2667, %v2763
        %v2796 = vadd.f32 %v2668, %v2764
        %v2797 = vadd.f32 %v2669, %v2765
        %v2798 = vadd.f32 %v2670, %v2766
        %v2799 = vadd.f32 %v2671, %v2767
        %v2800 = vadd.f32 %v2672, %v2768
        %v2801 = vadd.f32 %v2673, %v2769
        %v2802 = vadd.f32 %v2674, %v2770
        %v2803 = vadd.f32 %v2675, %v2771
        %v2804 = vadd.f32 %v2676, %v2772
        %v2805 = vadd.f32 %v2677, %v2773
        %v2806 = vadd.f32 %v2678, %v2774
        %v2807 = vadd.f32 %v2679, %v2775
        %v2808 = vadd.f32 %v2680, %v2776
        %v2809 = vadd.f32 %v2681, %v2777
        %v2810 = vadd.f32 %v2682, %v2778
        %v2811 = vadd.f32 %v2683, %v2779
        %v2812 = vadd.f32 %v2684, %v2780
        %v2813 = vadd.f32 %v2685, %v2781
        %v2814 = vadd.f32 %v2686, %v2782
        %v2815 = vadd.f32 %v2687, %v2783
        %v2816 = vmul.f32 %v2784, %v1216
        %v2817 = vmul.f32 %v2785, %v1217
        %v2818 = vmul.f32 %v2786, %v1218
        %v2819 = vmul.f32 %v2787, %v1219
        %v2820 = vmul.f32 %v2788, %v1220
        %v2821 = vmul.f32 %v2789, %v1221
        %v2822 = vmul.f32 %v2790, %v1222
        %v2823 = vmul.f32 %v2791, %v1223
        %v2824 = vmul.f32 %v2792, %v1224
        %v2825 = vmul.f32 %v2793, %v1225
        %v2826 = vmul.f32 %v2794, %v1226
        %v2827 = vmul.f32 %v2795, %v1227
        %v2828 = vmul.f32 %v2796, %v1228
        %v2829 = vmul.f32 %v2797, %v1229
        %v2830 = vmul.f32 %v2798, %v1230
        %v2831 = vmul.f32 %v2799, %v1231
        %v2832 = vmul.f32 %v2800, %v1232
        %v2833 = vmul.f32 %v2801, %v1233
        %v2834 = vmul.f32 %v2802, %v1234
        %v2835 = vmul.f32 %v2803, %v1235
        %v2836 = vmul.f32 %v2804, %v1236
        %v2837 = vmul.f32 %v2805, %v1237
        %v2838 = vmul.f32 %v2806, %v1238
        %v2839 = vmul.f32 %v2807, %v1239
        %v2840 = vmul.f32 %v2808, %v1240
        %v2841 = vmul.f32 %v2809, %v1241
        %v2842 = vmul.f32 %v2810, %v1242
        %v2843 = vmul.f32 %v2811, %v1243
        %v2844 = vmul.f32 %v2812, %v1244
        %v2845 = vmul.f32 %v2813, %v1245
        %v2846 = vmul.f32 %v2814, %v1246
        %v2847 = vmul.f32 %v2815, %v1247
        %v2848 = vadd.f32 %v2592, %v2816
        %v2849 = vadd.f32 %v2593, %v2817
        %v2850 = vadd.f32 %v2594, %v2818
        %v2851 = vadd.f32 %v2595, %v2819
        %v2852 = vadd.f32 %v2596, %v2820
        %v2853 = vadd.f32 %v2597, %v2821
        %v2854 = vadd.f32 %v2598, %v2822
        %v2855 = vadd.f32 %v2599, %v2823
        %v2856 = vadd.f32 %v2600, %v2824
        %v2857 = vadd.f32 %v2601, %v2825
        %v2858 = vadd.f32 %v2602, %v2826
        %v2859 = vadd.f32 %v2603, %v2827
        %v2860 = vadd.f32 %v2604, %v2828
        %v2861 = vadd.f32 %v2605, %v2829
        %v2862 = vadd.f32 %v2606, %v2830
        %v2863 = vadd.f32 %v2607, %v2831
        %v2864 = vadd.f32 %v2608, %v2832
        %v2865 = vadd.f32 %v2609, %v2833
        %v2866 = vadd.f32 %v2610, %v2834
        %v2867 = vadd.f32 %v2611, %v2835
        %v2868 = vadd.f32 %v2612, %v2836
        %v2869 = vadd.f32 %v2613, %v2837
        %v2870 = vadd.f32 %v2614, %v2838
        %v2871 = vadd.f32 %v2615, %v2839
        %v2872 = vadd.f32 %v2616, %v2840
        %v2873 = vadd.f32 %v2617, %v2841
        %v2874 = vadd.f32 %v2618, %v2842
        %v2875 = vadd.f32 %v2619, %v2843
        %v2876 = vadd.f32 %v2620, %v2844
        %v2877 = vadd.f32 %v2621, %v2845
        %v2878 = vadd.f32 %v2622, %v2846
        %v2879 = vadd.f32 %v2623, %v2847
        %s2880 = sadd.s32 %s27, %s28
        %s2881 = smul.u32 %s2880, 32768
        %s2882 = sadd.s32 %s2881, 32768
        %p2883 = scmp.le.s32.totalorder %s2882, 200
        // Predicated region
        $region49: #{tpu_custom_call.1} parent=31 // pred_check
          %p2884 = pneg %p2883
        $region50: #{tpu_custom_call.1} parent=31 // pred_check_branch
          %2886 = sbr.rel (%p2884) target = $region52
        $region51: #{tpu_custom_call.1} parent=31 // pred_region
          %v2887 = vld [vmem:[#allocation2] sm:$0xff]
          %v2888 = vld [vmem:[#allocation2 + $0x8] sm:$0xff]
          %v2889 = vld [vmem:[#allocation2 + $0x10] sm:$0xff]
          %v2890 = vld [vmem:[#allocation2 + $0x18] sm:$0xff]
          %v2891 = vld [vmem:[#allocation2 + $0x20] sm:$0xff]
          %v2892 = vld [vmem:[#allocation2 + $0x28] sm:$0xff]
          %v2893 = vld [vmem:[#allocation2 + $0x30] sm:$0xff]
          %v2894 = vld [vmem:[#allocation2 + $0x38] sm:$0xff]
          %v2895 = vld [vmem:[#allocation2 + $0x40] sm:$0xff]
          %v2896 = vld [vmem:[#allocation2 + $0x48] sm:$0xff]
          %v2897 = vld [vmem:[#allocation2 + $0x50] sm:$0xff]
          %v2898 = vld [vmem:[#allocation2 + $0x58] sm:$0xff]
          %v2899 = vld [vmem:[#allocation2 + $0x60] sm:$0xff]
          %v2900 = vld [vmem:[#allocation2 + $0x68] sm:$0xff]
          %v2901 = vld [vmem:[#allocation2 + $0x70] sm:$0xff]
          %v2902 = vld [vmem:[#allocation2 + $0x78] sm:$0xff]
          %v2903 = vld [vmem:[#allocation2 + $0x80] sm:$0xff]
          %v2904 = vld [vmem:[#allocation2 + $0x88] sm:$0xff]
          %v2905 = vld [vmem:[#allocation2 + $0x90] sm:$0xff]
          %v2906 = vld [vmem:[#allocation2 + $0x98] sm:$0xff]
          %v2907 = vld [vmem:[#allocation2 + $0xa0] sm:$0xff]
          %v2908 = vld [vmem:[#allocation2 + $0xa8] sm:$0xff]
          %v2909 = vld [vmem:[#allocation2 + $0xb0] sm:$0xff]
          %v2910 = vld [vmem:[#allocation2 + $0xb8] sm:$0xff]
          %v2911 = vld [vmem:[#allocation2 + $0xc0] sm:$0xff]
          %v2912 = vld [vmem:[#allocation2 + $0xc8] sm:$0xff]
          %v2913 = vld [vmem:[#allocation2 + $0xd0] sm:$0xff]
          %v2914 = vld [vmem:[#allocation2 + $0xd8] sm:$0xff]
          %v2915 = vld [vmem:[#allocation2 + $0xe0] sm:$0xff]
          %v2916 = vld [vmem:[#allocation2 + $0xe8] sm:$0xff]
          %v2917 = vld [vmem:[#allocation2 + $0xf0] sm:$0xff]
          %v2918 = vld [vmem:[#allocation2 + $0xf8] sm:$0xff]
          %v2919 = vadd.f32 %v2887, %v2848
          %v2920 = vadd.f32 %v2888, %v2849
          %v2921 = vadd.f32 %v2889, %v2850
          %v2922 = vadd.f32 %v2890, %v2851
          %v2923 = vadd.f32 %v2891, %v2852
          %v2924 = vadd.f32 %v2892, %v2853
          %v2925 = vadd.f32 %v2893, %v2854
          %v2926 = vadd.f32 %v2894, %v2855
          %v2927 = vadd.f32 %v2895, %v2856
          %v2928 = vadd.f32 %v2896, %v2857
          %v2929 = vadd.f32 %v2897, %v2858
          %v2930 = vadd.f32 %v2898, %v2859
          %v2931 = vadd.f32 %v2899, %v2860
          %v2932 = vadd.f32 %v2900, %v2861
          %v2933 = vadd.f32 %v2901, %v2862
          %v2934 = vadd.f32 %v2902, %v2863
          %v2935 = vadd.f32 %v2903, %v2864
          %v2936 = vadd.f32 %v2904, %v2865
          %v2937 = vadd.f32 %v2905, %v2866
          %v2938 = vadd.f32 %v2906, %v2867
          %v2939 = vadd.f32 %v2907, %v2868
          %v2940 = vadd.f32 %v2908, %v2869
          %v2941 = vadd.f32 %v2909, %v2870
          %v2942 = vadd.f32 %v2910, %v2871
          %v2943 = vadd.f32 %v2911, %v2872
          %v2944 = vadd.f32 %v2912, %v2873
          %v2945 = vadd.f32 %v2913, %v2874
          %v2946 = vadd.f32 %v2914, %v2875
          %v2947 = vadd.f32 %v2915, %v2876
          %v2948 = vadd.f32 %v2916, %v2877
          %v2949 = vadd.f32 %v2917, %v2878
          %v2950 = vadd.f32 %v2918, %v2879
          %2951 = vst [vmem:[#allocation2] sm:$0xff] %v2919
          %2952 = vst [vmem:[#allocation2 + $0x8] sm:$0xff] %v2920
          %2953 = vst [vmem:[#allocation2 + $0x10] sm:$0xff] %v2921
          %2954 = vst [vmem:[#allocation2 + $0x18] sm:$0xff] %v2922
          %2955 = vst [vmem:[#allocation2 + $0x20] sm:$0xff] %v2923
          %2956 = vst [vmem:[#allocation2 + $0x28] sm:$0xff] %v2924
          %2957 = vst [vmem:[#allocation2 + $0x30] sm:$0xff] %v2925
          %2958 = vst [vmem:[#allocation2 + $0x38] sm:$0xff] %v2926
          %2959 = vst [vmem:[#allocation2 + $0x40] sm:$0xff] %v2927
          %2960 = vst [vmem:[#allocation2 + $0x48] sm:$0xff] %v2928
          %2961 = vst [vmem:[#allocation2 + $0x50] sm:$0xff] %v2929
          %2962 = vst [vmem:[#allocation2 + $0x58] sm:$0xff] %v2930
          %2963 = vst [vmem:[#allocation2 + $0x60] sm:$0xff] %v2931
          %2964 = vst [vmem:[#allocation2 + $0x68] sm:$0xff] %v2932
          %2965 = vst [vmem:[#allocation2 + $0x70] sm:$0xff] %v2933
          %2966 = vst [vmem:[#allocation2 + $0x78] sm:$0xff] %v2934
          %2967 = vst [vmem:[#allocation2 + $0x80] sm:$0xff] %v2935
          %2968 = vst [vmem:[#allocation2 + $0x88] sm:$0xff] %v2936
          %2969 = vst [vmem:[#allocation2 + $0x90] sm:$0xff] %v2937
          %2970 = vst [vmem:[#allocation2 + $0x98] sm:$0xff] %v2938
          %2971 = vst [vmem:[#allocation2 + $0xa0] sm:$0xff] %v2939
          %2972 = vst [vmem:[#allocation2 + $0xa8] sm:$0xff] %v2940
          %2973 = vst [vmem:[#allocation2 + $0xb0] sm:$0xff] %v2941
          %2974 = vst [vmem:[#allocation2 + $0xb8] sm:$0xff] %v2942
          %2975 = vst [vmem:[#allocation2 + $0xc0] sm:$0xff] %v2943
          %2976 = vst [vmem:[#allocation2 + $0xc8] sm:$0xff] %v2944
          %2977 = vst [vmem:[#allocation2 + $0xd0] sm:$0xff] %v2945
          %2978 = vst [vmem:[#allocation2 + $0xd8] sm:$0xff] %v2946
          %2979 = vst [vmem:[#allocation2 + $0xe0] sm:$0xff] %v2947
          %2980 = vst [vmem:[#allocation2 + $0xe8] sm:$0xff] %v2948
          %2981 = vst [vmem:[#allocation2 + $0xf0] sm:$0xff] %v2949
          %2982 = vst [vmem:[#allocation2 + $0xf8] sm:$0xff] %v2950
        $region52: #{tpu_custom_call.1} parent=31 // pred_fallthru
          _
        %p2983 = scmp.gt.s32.totalorder %s2882, 200
        // Predicated region
        $region53: #{tpu_custom_call.1} parent=31 // pred_check
          %p2984 = pneg %p2983
        $region54: #{tpu_custom_call.1} parent=31 // pred_check_branch
          %2986 = sbr.rel (%p2984) target = $region56
        $region55: #{tpu_custom_call.1} parent=31 // pred_region
          %v2987 = vlaneseq
          %v2988 = vshrl.u32 %v2987, 7
          %v2989 = vlaneseq
          %v2990 = vand.u32 %v2989, 127
          %v2991 = vadd.s32 %v2990, 128
          %v2992 = vadd.s32 %v2990, 256
          %v2993 = vadd.s32 %v2990, 384
          %v2994 = vadd.s32 %v2990, 512
          %v2995 = vadd.s32 %v2990, 640
          %v2996 = vadd.s32 %v2990, 768
          %v2997 = vadd.s32 %v2990, 896
          %v2998 = vadd.s32 %v2990, 1024
          %v2999 = vadd.s32 %v2990, 1152
          %v3000 = vadd.s32 %v2990, 1280
          %v3001 = vadd.s32 %v2990, 1408
          %v3002 = vadd.s32 %v2990, 1536
          %v3003 = vadd.s32 %v2990, 1664
          %v3004 = vadd.s32 %v2990, 1792
          %v3005 = vadd.s32 %v2990, 1920
          %v3006 = vadd.s32 %v2990, 2048
          %v3007 = vadd.s32 %v2990, 2176
          %v3008 = vadd.s32 %v2990, 2304
          %v3009 = vadd.s32 %v2990, 2432
          %v3010 = vadd.s32 %v2990, 2560
          %v3011 = vadd.s32 %v2990, 2688
          %v3012 = vadd.s32 %v2990, 2816
          %v3013 = vadd.s32 %v2990, 2944
          %v3014 = vadd.s32 %v2990, 3072
          %v3015 = vadd.s32 %v2990, 3200
          %v3016 = vadd.s32 %v2990, 3328
          %v3017 = vadd.s32 %v2990, 3456
          %v3018 = vadd.s32 %v2990, 3584
          %v3019 = vadd.s32 %v2990, 3712
          %v3020 = vadd.s32 %v2990, 3840
          %v3021 = vadd.s32 %v2990, 3968
          %v3022 = vmul.u32 %v2988, 4096
          %v3023 = vstv %s2881
          %v3024 = vadd.s32 %v3023, %v3022
          %v3025 = vadd.s32 %v3024, %v2990
          %v3026 = vadd.s32 %v3024, %v2991
          %v3027 = vadd.s32 %v3024, %v2992
          %v3028 = vadd.s32 %v3024, %v2993
          %v3029 = vadd.s32 %v3024, %v2994
          %v3030 = vadd.s32 %v3024, %v2995
          %v3031 = vadd.s32 %v3024, %v2996
          %v3032 = vadd.s32 %v3024, %v2997
          %v3033 = vadd.s32 %v3024, %v2998
          %v3034 = vadd.s32 %v3024, %v2999
          %v3035 = vadd.s32 %v3024, %v3000
          %v3036 = vadd.s32 %v3024, %v3001
          %v3037 = vadd.s32 %v3024, %v3002
          %v3038 = vadd.s32 %v3024, %v3003
          %v3039 = vadd.s32 %v3024, %v3004
          %v3040 = vadd.s32 %v3024, %v3005
          %v3041 = vadd.s32 %v3024, %v3006
          %v3042 = vadd.s32 %v3024, %v3007
          %v3043 = vadd.s32 %v3024, %v3008
          %v3044 = vadd.s32 %v3024, %v3009
          %v3045 = vadd.s32 %v3024, %v3010
          %v3046 = vadd.s32 %v3024, %v3011
          %v3047 = vadd.s32 %v3024, %v3012
          %v3048 = vadd.s32 %v3024, %v3013
          %v3049 = vadd.s32 %v3024, %v3014
          %v3050 = vadd.s32 %v3024, %v3015
          %v3051 = vadd.s32 %v3024, %v3016
          %v3052 = vadd.s32 %v3024, %v3017
          %v3053 = vadd.s32 %v3024, %v3018
          %v3054 = vadd.s32 %v3024, %v3019
          %v3055 = vadd.s32 %v3024, %v3020
          %v3056 = vadd.s32 %v3024, %v3021
          %v3057 = vld [vmem:[#allocation2] sm:$0xff]
          %v3058 = vld [vmem:[#allocation2 + $0x8] sm:$0xff]
          %v3059 = vld [vmem:[#allocation2 + $0x10] sm:$0xff]
          %v3060 = vld [vmem:[#allocation2 + $0x18] sm:$0xff]
          %v3061 = vld [vmem:[#allocation2 + $0x20] sm:$0xff]
          %v3062 = vld [vmem:[#allocation2 + $0x28] sm:$0xff]
          %v3063 = vld [vmem:[#allocation2 + $0x30] sm:$0xff]
          %v3064 = vld [vmem:[#allocation2 + $0x38] sm:$0xff]
          %v3065 = vld [vmem:[#allocation2 + $0x40] sm:$0xff]
          %v3066 = vld [vmem:[#allocation2 + $0x48] sm:$0xff]
          %v3067 = vld [vmem:[#allocation2 + $0x50] sm:$0xff]
          %v3068 = vld [vmem:[#allocation2 + $0x58] sm:$0xff]
          %v3069 = vld [vmem:[#allocation2 + $0x60] sm:$0xff]
          %v3070 = vld [vmem:[#allocation2 + $0x68] sm:$0xff]
          %v3071 = vld [vmem:[#allocation2 + $0x70] sm:$0xff]
          %v3072 = vld [vmem:[#allocation2 + $0x78] sm:$0xff]
          %v3073 = vld [vmem:[#allocation2 + $0x80] sm:$0xff]
          %v3074 = vld [vmem:[#allocation2 + $0x88] sm:$0xff]
          %v3075 = vld [vmem:[#allocation2 + $0x90] sm:$0xff]
          %v3076 = vld [vmem:[#allocation2 + $0x98] sm:$0xff]
          %v3077 = vld [vmem:[#allocation2 + $0xa0] sm:$0xff]
          %v3078 = vld [vmem:[#allocation2 + $0xa8] sm:$0xff]
          %v3079 = vld [vmem:[#allocation2 + $0xb0] sm:$0xff]
          %v3080 = vld [vmem:[#allocation2 + $0xb8] sm:$0xff]
          %v3081 = vld [vmem:[#allocation2 + $0xc0] sm:$0xff]
          %v3082 = vld [vmem:[#allocation2 + $0xc8] sm:$0xff]
          %v3083 = vld [vmem:[#allocation2 + $0xd0] sm:$0xff]
          %v3084 = vld [vmem:[#allocation2 + $0xd8] sm:$0xff]
          %v3085 = vld [vmem:[#allocation2 + $0xe0] sm:$0xff]
          %v3086 = vld [vmem:[#allocation2 + $0xe8] sm:$0xff]
          %v3087 = vld [vmem:[#allocation2 + $0xf0] sm:$0xff]
          %v3088 = vld [vmem:[#allocation2 + $0xf8] sm:$0xff]
          %vm3089 = vcmp.lt.s32.totalorder %v3025, 200
          %vm3090 = vcmp.lt.s32.totalorder %v3026, 200
          %vm3091 = vcmp.lt.s32.totalorder %v3027, 200
          %vm3092 = vcmp.lt.s32.totalorder %v3028, 200
          %vm3093 = vcmp.lt.s32.totalorder %v3029, 200
          %vm3094 = vcmp.lt.s32.totalorder %v3030, 200
          %vm3095 = vcmp.lt.s32.totalorder %v3031, 200
          %vm3096 = vcmp.lt.s32.totalorder %v3032, 200
          %vm3097 = vcmp.lt.s32.totalorder %v3033, 200
          %vm3098 = vcmp.lt.s32.totalorder %v3034, 200
          %vm3099 = vcmp.lt.s32.totalorder %v3035, 200
          %vm3100 = vcmp.lt.s32.totalorder %v3036, 200
          %vm3101 = vcmp.lt.s32.totalorder %v3037, 200
          %vm3102 = vcmp.lt.s32.totalorder %v3038, 200
          %vm3103 = vcmp.lt.s32.totalorder %v3039, 200
          %vm3104 = vcmp.lt.s32.totalorder %v3040, 200
          %vm3105 = vcmp.lt.s32.totalorder %v3041, 200
          %vm3106 = vcmp.lt.s32.totalorder %v3042, 200
          %vm3107 = vcmp.lt.s32.totalorder %v3043, 200
          %vm3108 = vcmp.lt.s32.totalorder %v3044, 200
          %vm3109 = vcmp.lt.s32.totalorder %v3045, 200
          %vm3110 = vcmp.lt.s32.totalorder %v3046, 200
          %vm3111 = vcmp.lt.s32.totalorder %v3047, 200
          %vm3112 = vcmp.lt.s32.totalorder %v3048, 200
          %vm3113 = vcmp.lt.s32.totalorder %v3049, 200
          %vm3114 = vcmp.lt.s32.totalorder %v3050, 200
          %vm3115 = vcmp.lt.s32.totalorder %v3051, 200
          %vm3116 = vcmp.lt.s32.totalorder %v3052, 200
          %vm3117 = vcmp.lt.s32.totalorder %v3053, 200
          %vm3118 = vcmp.lt.s32.totalorder %v3054, 200
          %vm3119 = vcmp.lt.s32.totalorder %v3055, 200
          %vm3120 = vcmp.lt.s32.totalorder %v3056, 200
          %v3121 = vsel %vm3089, %v2848, 0.0
          %v3122 = vsel %vm3090, %v2849, 0.0
          %v3123 = vsel %vm3091, %v2850, 0.0
          %v3124 = vsel %vm3092, %v2851, 0.0
          %v3125 = vsel %vm3093, %v2852, 0.0
          %v3126 = vsel %vm3094, %v2853, 0.0
          %v3127 = vsel %vm3095, %v2854, 0.0
          %v3128 = vsel %vm3096, %v2855, 0.0
          %v3129 = vsel %vm3097, %v2856, 0.0
          %v3130 = vsel %vm3098, %v2857, 0.0
          %v3131 = vsel %vm3099, %v2858, 0.0
          %v3132 = vsel %vm3100, %v2859, 0.0
          %v3133 = vsel %vm3101, %v2860, 0.0
          %v3134 = vsel %vm3102, %v2861, 0.0
          %v3135 = vsel %vm3103, %v2862, 0.0
          %v3136 = vsel %vm3104, %v2863, 0.0
          %v3137 = vsel %vm3105, %v2864, 0.0
          %v3138 = vsel %vm3106, %v2865, 0.0
          %v3139 = vsel %vm3107, %v2866, 0.0
          %v3140 = vsel %vm3108, %v2867, 0.0
          %v3141 = vsel %vm3109, %v2868, 0.0
          %v3142 = vsel %vm3110, %v2869, 0.0
          %v3143 = vsel %vm3111, %v2870, 0.0
          %v3144 = vsel %vm3112, %v2871, 0.0
          %v3145 = vsel %vm3113, %v2872, 0.0
          %v3146 = vsel %vm3114, %v2873, 0.0
          %v3147 = vsel %vm3115, %v2874, 0.0
          %v3148 = vsel %vm3116, %v2875, 0.0
          %v3149 = vsel %vm3117, %v2876, 0.0
          %v3150 = vsel %vm3118, %v2877, 0.0
          %v3151 = vsel %vm3119, %v2878, 0.0
          %v3152 = vsel %vm3120, %v2879, 0.0
          %v3153 = vadd.f32 %v3057, %v3121
          %v3154 = vadd.f32 %v3058, %v3122
          %v3155 = vadd.f32 %v3059, %v3123
          %v3156 = vadd.f32 %v3060, %v3124
          %v3157 = vadd.f32 %v3061, %v3125
          %v3158 = vadd.f32 %v3062, %v3126
          %v3159 = vadd.f32 %v3063, %v3127
          %v3160 = vadd.f32 %v3064, %v3128
          %v3161 = vadd.f32 %v3065, %v3129
          %v3162 = vadd.f32 %v3066, %v3130
          %v3163 = vadd.f32 %v3067, %v3131
          %v3164 = vadd.f32 %v3068, %v3132
          %v3165 = vadd.f32 %v3069, %v3133
          %v3166 = vadd.f32 %v3070, %v3134
          %v3167 = vadd.f32 %v3071, %v3135
          %v3168 = vadd.f32 %v3072, %v3136
          %v3169 = vadd.f32 %v3073, %v3137
          %v3170 = vadd.f32 %v3074, %v3138
          %v3171 = vadd.f32 %v3075, %v3139
          %v3172 = vadd.f32 %v3076, %v3140
          %v3173 = vadd.f32 %v3077, %v3141
          %v3174 = vadd.f32 %v3078, %v3142
          %v3175 = vadd.f32 %v3079, %v3143
          %v3176 = vadd.f32 %v3080, %v3144
          %v3177 = vadd.f32 %v3081, %v3145
          %v3178 = vadd.f32 %v3082, %v3146
          %v3179 = vadd.f32 %v3083, %v3147
          %v3180 = vadd.f32 %v3084, %v3148
          %v3181 = vadd.f32 %v3085, %v3149
          %v3182 = vadd.f32 %v3086, %v3150
          %v3183 = vadd.f32 %v3087, %v3151
          %v3184 = vadd.f32 %v3088, %v3152
          %3185 = vst [vmem:[#allocation2] sm:$0xff] %v3153
          %3186 = vst [vmem:[#allocation2 + $0x8] sm:$0xff] %v3154
          %3187 = vst [vmem:[#allocation2 + $0x10] sm:$0xff] %v3155
          %3188 = vst [vmem:[#allocation2 + $0x18] sm:$0xff] %v3156
          %3189 = vst [vmem:[#allocation2 + $0x20] sm:$0xff] %v3157
          %3190 = vst [vmem:[#allocation2 + $0x28] sm:$0xff] %v3158
          %3191 = vst [vmem:[#allocation2 + $0x30] sm:$0xff] %v3159
          %3192 = vst [vmem:[#allocation2 + $0x38] sm:$0xff] %v3160
          %3193 = vst [vmem:[#allocation2 + $0x40] sm:$0xff] %v3161
          %3194 = vst [vmem:[#allocation2 + $0x48] sm:$0xff] %v3162
          %3195 = vst [vmem:[#allocation2 + $0x50] sm:$0xff] %v3163
          %3196 = vst [vmem:[#allocation2 + $0x58] sm:$0xff] %v3164
          %3197 = vst [vmem:[#allocation2 + $0x60] sm:$0xff] %v3165
          %3198 = vst [vmem:[#allocation2 + $0x68] sm:$0xff] %v3166
          %3199 = vst [vmem:[#allocation2 + $0x70] sm:$0xff] %v3167
          %3200 = vst [vmem:[#allocation2 + $0x78] sm:$0xff] %v3168
          %3201 = vst [vmem:[#allocation2 + $0x80] sm:$0xff] %v3169
          %3202 = vst [vmem:[#allocation2 + $0x88] sm:$0xff] %v3170
          %3203 = vst [vmem:[#allocation2 + $0x90] sm:$0xff] %v3171
          %3204 = vst [vmem:[#allocation2 + $0x98] sm:$0xff] %v3172
          %3205 = vst [vmem:[#allocation2 + $0xa0] sm:$0xff] %v3173
          %3206 = vst [vmem:[#allocation2 + $0xa8] sm:$0xff] %v3174
          %3207 = vst [vmem:[#allocation2 + $0xb0] sm:$0xff] %v3175
          %3208 = vst [vmem:[#allocation2 + $0xb8] sm:$0xff] %v3176
          %3209 = vst [vmem:[#allocation2 + $0xc0] sm:$0xff] %v3177
          %3210 = vst [vmem:[#allocation2 + $0xc8] sm:$0xff] %v3178
          %3211 = vst [vmem:[#allocation2 + $0xd0] sm:$0xff] %v3179
          %3212 = vst [vmem:[#allocation2 + $0xd8] sm:$0xff] %v3180
          %3213 = vst [vmem:[#allocation2 + $0xe0] sm:$0xff] %v3181
          %3214 = vst [vmem:[#allocation2 + $0xe8] sm:$0xff] %v3182
          %3215 = vst [vmem:[#allocation2 + $0xf0] sm:$0xff] %v3183
          %3216 = vst [vmem:[#allocation2 + $0xf8] sm:$0xff] %v3184
        $region56: #{tpu_custom_call.1} parent=31 // pred_fallthru
          _
        // Predicated region
        $region57: #{tpu_custom_call.1} parent=31 // pred_check
          %p3217 = pneg %p284
        $region58: #{tpu_custom_call.1} parent=31 // pred_check_branch
          %3219 = sbr.rel (%p3217) target = $region60
        $region59: #{tpu_custom_call.1} parent=31 // pred_region
          %v3220 = vld [vmem:[#allocation2] sm:$0xff]
          %v3221 = vld [vmem:[#allocation2 + $0x8] sm:$0xff]
          %v3222 = vld [vmem:[#allocation2 + $0x10] sm:$0xff]
          %v3223 = vld [vmem:[#allocation2 + $0x18] sm:$0xff]
          %v3224 = vld [vmem:[#allocation2 + $0x20] sm:$0xff]
          %v3225 = vld [vmem:[#allocation2 + $0x28] sm:$0xff]
          %v3226 = vld [vmem:[#allocation2 + $0x30] sm:$0xff]
          %v3227 = vld [vmem:[#allocation2 + $0x38] sm:$0xff]
          %v3228 = vld [vmem:[#allocation2 + $0x40] sm:$0xff]
          %v3229 = vld [vmem:[#allocation2 + $0x48] sm:$0xff]
          %v3230 = vld [vmem:[#allocation2 + $0x50] sm:$0xff]
          %v3231 = vld [vmem:[#allocation2 + $0x58] sm:$0xff]
          %v3232 = vld [vmem:[#allocation2 + $0x60] sm:$0xff]
          %v3233 = vld [vmem:[#allocation2 + $0x68] sm:$0xff]
          %v3234 = vld [vmem:[#allocation2 + $0x70] sm:$0xff]
          %v3235 = vld [vmem:[#allocation2 + $0x78] sm:$0xff]
          %v3236 = vld [vmem:[#allocation2 + $0x80] sm:$0xff]
          %v3237 = vld [vmem:[#allocation2 + $0x88] sm:$0xff]
          %v3238 = vld [vmem:[#allocation2 + $0x90] sm:$0xff]
          %v3239 = vld [vmem:[#allocation2 + $0x98] sm:$0xff]
          %v3240 = vld [vmem:[#allocation2 + $0xa0] sm:$0xff]
          %v3241 = vld [vmem:[#allocation2 + $0xa8] sm:$0xff]
          %v3242 = vld [vmem:[#allocation2 + $0xb0] sm:$0xff]
          %v3243 = vld [vmem:[#allocation2 + $0xb8] sm:$0xff]
          %v3244 = vld [vmem:[#allocation2 + $0xc0] sm:$0xff]
          %v3245 = vld [vmem:[#allocation2 + $0xc8] sm:$0xff]
          %v3246 = vld [vmem:[#allocation2 + $0xd0] sm:$0xff]
          %v3247 = vld [vmem:[#allocation2 + $0xd8] sm:$0xff]
          %v3248 = vld [vmem:[#allocation2 + $0xe0] sm:$0xff]
          %v3249 = vld [vmem:[#allocation2 + $0xe8] sm:$0xff]
          %v3250 = vld [vmem:[#allocation2 + $0xf0] sm:$0xff]
          %v3251 = vld [vmem:[#allocation2 + $0xf8] sm:$0xff]
          %3252 = vst [vmem:[%s280] sm:$0xff] %v3220
          %3253 = vst [vmem:[%s280 + $0x8] sm:$0xff] %v3221
          %3254 = vst [vmem:[%s280 + $0x10] sm:$0xff] %v3222
          %3255 = vst [vmem:[%s280 + $0x18] sm:$0xff] %v3223
          %3256 = vst [vmem:[%s280 + $0x20] sm:$0xff] %v3224
          %3257 = vst [vmem:[%s280 + $0x28] sm:$0xff] %v3225
          %3258 = vst [vmem:[%s280 + $0x30] sm:$0xff] %v3226
          %3259 = vst [vmem:[%s280 + $0x38] sm:$0xff] %v3227
          %3260 = vst [vmem:[%s280 + $0x40] sm:$0xff] %v3228
          %3261 = vst [vmem:[%s280 + $0x48] sm:$0xff] %v3229
          %3262 = vst [vmem:[%s280 + $0x50] sm:$0xff] %v3230
          %3263 = vst [vmem:[%s280 + $0x58] sm:$0xff] %v3231
          %3264 = vst [vmem:[%s280 + $0x60] sm:$0xff] %v3232
          %3265 = vst [vmem:[%s280 + $0x68] sm:$0xff] %v3233
          %3266 = vst [vmem:[%s280 + $0x70] sm:$0xff] %v3234
          %3267 = vst [vmem:[%s280 + $0x78] sm:$0xff] %v3235
          %3268 = vst [vmem:[%s280 + $0x80] sm:$0xff] %v3236
          %3269 = vst [vmem:[%s280 + $0x88] sm:$0xff] %v3237
          %3270 = vst [vmem:[%s280 + $0x90] sm:$0xff] %v3238
          %3271 = vst [vmem:[%s280 + $0x98] sm:$0xff] %v3239
          %3272 = vst [vmem:[%s280 + $0xa0] sm:$0xff] %v3240
          %3273 = vst [vmem:[%s280 + $0xa8] sm:$0xff] %v3241
          %3274 = vst [vmem:[%s280 + $0xb0] sm:$0xff] %v3242
          %3275 = vst [vmem:[%s280 + $0xb8] sm:$0xff] %v3243
          %3276 = vst [vmem:[%s280 + $0xc0] sm:$0xff] %v3244
          %3277 = vst [vmem:[%s280 + $0xc8] sm:$0xff] %v3245
          %3278 = vst [vmem:[%s280 + $0xd0] sm:$0xff] %v3246
          %3279 = vst [vmem:[%s280 + $0xd8] sm:$0xff] %v3247
          %3280 = vst [vmem:[%s280 + $0xe0] sm:$0xff] %v3248
          %3281 = vst [vmem:[%s280 + $0xe8] sm:$0xff] %v3249
          %3282 = vst [vmem:[%s280 + $0xf0] sm:$0xff] %v3250
          %3283 = vst [vmem:[%s280 + $0xf8] sm:$0xff] %v3251
        $region60: #{tpu_custom_call.1} parent=31 // pred_fallthru
          _
        %s3284 = sand.u32 %s127, 1
        %s3285 = scalar_lea.sflag [#allocation5], %s3284
        %s3286 = sand.u32 %s127, 1
        %s3287 = smul.addr %s3286, 256
        %s3288 = scalar_lea.vmem [#allocation9], %s3287
        // Predicated region
        $region61: #{tpu_custom_call.1} parent=31 // pred_check
          %p3289 = pneg %p137
        $region62: #{tpu_custom_call.1} parent=31 // pred_check_branch
          %3291 = sbr.rel (%p3289) target = $region64
        $region63: #{tpu_custom_call.1} parent=31 // pred_region
          %s3293 = ssub.s32 4096, 4096
          %3294 = vsyncadd %s3285, %s3293
          %s3295 = smul.addr %s27, 32
          %s3296 = smul.addr %s3295, 128
          %s3297 = scalar_lea.hbm %s3, %s3296
          %s3299 = sshll.u32 %s3288, 4
          %s3300 = int_to_ptr.vmem [resolvable:$true] %s3299
          %3302 = dma.vmem_to_hbm [thread:$0]  %s3300, 4096, %s3297, %s3285
        $region64: #{tpu_custom_call.1} parent=31 // pred_fallthru
          _
      $region32: #{tpu_custom_call.1} parent=5 // pred_fallthru
        _
      %p3303 = scmp.le.s32.totalorder 2, %s18
      // Predicated region
      $region65: #{tpu_custom_call.1} parent=5 // pred_check
        %p3304 = pneg %p3303
      $region66: #{tpu_custom_call.1} parent=5 // pred_check_branch
        %3306 = sbr.rel (%p3304) target = $region68
      $region67: #{tpu_custom_call.1} parent=5 // pred_region
        %s3307 = ssub.s32 %s18, 2
        // Predicated region
        $region69: #{tpu_custom_call.1} parent=67 // pred_check
          %p3308 = pneg %p143
        $region70: #{tpu_custom_call.1} parent=67 // pred_check_branch
          %3310 = sbr.rel (%p3308) target = $region72
        $region71: #{tpu_custom_call.1} parent=67 // pred_region
          %s3311 = sand.u32 %s128, 1
          %s3312 = scalar_lea.sflag [#allocation5], %s3311
          %s3313 = sand.u32 %s128, 1
          %s3314 = smul.addr %s3313, 256
          %s3315 = scalar_lea.vmem [#allocation9], %s3314
          %3316 = dma.done %s3312, 4096
        $region72: #{tpu_custom_call.1} parent=67 // pred_fallthru
          _
      $region68: #{tpu_custom_call.1} parent=5 // pred_fallthru
        _
    $region6: #{tpu_custom_call.1} parent=1 // loop_footer
      %s22 = sadd.s32 1, %s18
    $region7: #{tpu_custom_call.1} parent=1 // loop_footer_branch
      %17 = sbr.rel target = $region3
    $region8: #{tpu_custom_call.1} parent=1 // loop_exit
      _
    %3317 = vsyncpa [#allocation4], 1
    %s3318 = scalar_lea.sflag [#allocation4], 1
    %3319 = vsyncpa %s3318, 1
    %3320 = vsyncpa [#allocation7], 1
    %s3321 = scalar_lea.sflag [#allocation7], 1
    %3322 = vsyncpa %s3321, 1
    %3323 = vsyncpa [#allocation5], 1
    %s3324 = scalar_lea.sflag [#allocation5], 1
    %3325 = vsyncpa %s3324, 1

</llo_original>
